<compile_context>
chip_gen: v5e
topology: v5e:2x2
jax: 0.10.0
libtpu: 0.0.40
codegen_flags: <defaults>
</compile_context>

<pallas_src>
import math
import functools

import jax
import jax.numpy as jnp
from jax.experimental import pallas as pl
from jax.experimental.pallas import tpu as pltpu

NEG_INF = -1e9   # large finite negative (avoids -inf -> NaN on fully-masked rows)


# ----------------------------------------------------------------------------
# Pallas kernel: full decoder stack, one (batch_tile, layer) step per grid point
# ----------------------------------------------------------------------------
def decoder_stack_kernel(
    # activations / masks
    x_ref, mem_ref, smask_ref, mmask_ref,
    # self-attention (per-layer, leading layer axis selected by BlockSpec)
    wqkv_ref, bqkv_ref, wo_ref, bo_ref, ln1g_ref, ln1b_ref,
    # cross-attention
    wqc_ref, bqc_ref, wkvc_ref, bkvc_ref, woc_ref, boc_ref, ln2g_ref, ln2b_ref,
    # feed-forward
    w1_ref, b1_ref, w2_ref, b2_ref, ln3g_ref, ln3b_ref,
    # final layer norm (grid-invariant)
    fing_ref, finb_ref,
    # output (doubles as the layer-resident carry)
    o_ref,
    *, n_heads, head_dim, batch_tile, tgt_len, mem_len, approx_gelu,
):
    D = n_heads * head_dim
    H = n_heads
    Bt, L, Lm = batch_tile, tgt_len, mem_len
    eps = 1e-5
    bf16 = jnp.bfloat16
    layer_idx = pl.program_id(1)

    # Layer 0: seed the (VMEM-resident, revisited) output block with the input.
    @pl.when(layer_idx == 0)
    def _():
        o_ref[...] = x_ref[...]

    x_bf = o_ref[...]                          # (Bt*L, D) bf16 carry -> straight to MXU
    x32 = x_bf.astype(jnp.float32)             # f32 copy for the residual add

    def layer_norm(h, g, b):                   # h: f32 (rows, D); stats in f32
        mu = jnp.mean(h, axis=-1, keepdims=True)
        var = jnp.mean((h - mu) ** 2, axis=-1, keepdims=True)
        return (h - mu) * jax.lax.rsqrt(var + eps) * g + b

    def split_heads(t, rows):                  # (rows, D) bf16 -> (H, rows, hd)
        return t.reshape(rows, H, head_dim).transpose(1, 0, 2)

    def attention_block(q, k, v, add_mask):
        """One batch element. q:(Lq,D) k,v:(Lk,D) f32; add_mask broadcasts to (H,Lq,Lk).
        1/sqrt(head_dim) is already folded into the Q projection weights."""
        lq, lk = q.shape[0], k.shape[0]
        qh = split_heads(q.astype(bf16), lq)
        kh = split_heads(k.astype(bf16), lk)
        vh = split_heads(v.astype(bf16), lk)
        s = jnp.einsum("hqd,hkd->hqk", qh, kh,
                       preferred_element_type=jnp.float32)            # (H,Lq,Lk) f32
        s = s + add_mask
        s = s - jnp.max(s, axis=-1, keepdims=True)
        p = jnp.exp(s)
        p = p * pl.reciprocal(jnp.sum(p, axis=-1, keepdims=True), approx=True)
        ctx = jnp.einsum("hqk,hkd->hqd", p.astype(bf16), vh,
                         preferred_element_type=jnp.float32)          # (H,Lq,hd)
        return ctx.transpose(1, 0, 2).reshape(lq, D)

    # ---- self attention (causal + tgt key-padding mask, precomputed) --------
    qkv = jnp.dot(x_bf, wqkv_ref[0],
                  preferred_element_type=jnp.float32) + bqkv_ref[0]   # (Bt*L, 3D)
    parts = []
    for b in range(Bt):                                               # static unroll
        r = b * L
        parts.append(attention_block(qkv[r:r + L, :D],
                                     qkv[r:r + L, D:2 * D],
                                     qkv[r:r + L, 2 * D:],
                                     smask_ref[b]))
    ctx = parts[0] if Bt == 1 else jnp.concatenate(parts, axis=0)     # (Bt*L, D)
    attn = jnp.dot(ctx.astype(bf16), wo_ref[0],
                   preferred_element_type=jnp.float32) + bo_ref[0]
    h1 = layer_norm(x32 + attn, ln1g_ref[0], ln1b_ref[0])
    h1_bf = h1.astype(bf16)

    # ---- cross attention (memory key-padding mask) ---------------------------
    qc = jnp.dot(h1_bf, wqc_ref[0],
                 preferred_element_type=jnp.float32) + bqc_ref[0]     # (Bt*L, D)
    kvc = jnp.dot(mem_ref[...], wkvc_ref[0],
                  preferred_element_type=jnp.float32) + bkvc_ref[0]   # (Bt*Lm, 2D)
    parts = []
    for b in range(Bt):
        rq, rk = b * L, b * Lm
        parts.append(attention_block(qc[rq:rq + L, :],
                                     kvc[rk:rk + Lm, :D],
                                     kvc[rk:rk + Lm, D:],
                                     mmask_ref[b]))
    ctx2 = parts[0] if Bt == 1 else jnp.concatenate(parts, axis=0)
    cattn = jnp.dot(ctx2.astype(bf16), woc_ref[0],
                    preferred_element_type=jnp.float32) + boc_ref[0]
    h2 = layer_norm(h1 + cattn, ln2g_ref[0], ln2b_ref[0])
    h2_bf = h2.astype(bf16)

    # ---- feed-forward ---------------------------------------------------------
    # TODO(synk): for large ffn_dim on v7x (64 MiB VMEM), tile the FFN over
    # ffn_dim with an extra "arbitrary" grid axis so w1/w2 are not fully
    # resident double-buffered.
    f = jnp.dot(h2_bf, w1_ref[0],
                preferred_element_type=jnp.float32) + b1_ref[0]       # (Bt*L, F)
    if approx_gelu:
        f = jax.nn.gelu(f, approximate=True)       # tanh path -> EUP slot
    else:
        # exact erf GELU: matches the reference module's semantics
        f = f * 0.5 * (1.0 + jax.lax.erf(f * (1.0 / math.sqrt(2.0))))
    f = jnp.dot(f.astype(bf16), w2_ref[0],
                preferred_element_type=jnp.float32) + b2_ref[0]       # (Bt*L, D)
    h3 = layer_norm(h2 + f, ln3g_ref[0], ln3b_ref[0])

    # ---- write the carry / output (final LN folded into the last layer) -------
    is_last = layer_idx == pl.num_programs(1) - 1

    @pl.when(is_last)
    def _():
        o_ref[...] = layer_norm(h3, fing_ref[...], finb_ref[...]).astype(o_ref.dtype)

    @pl.when(jnp.logical_not(is_last))
    def _():
        o_ref[...] = h3.astype(o_ref.dtype)


# ----------------------------------------------------------------------------
# Wrapper helpers
# ----------------------------------------------------------------------------
def _vmem_limit_bytes():
    """~48 MiB on v7x (64 MiB physical), ~96 MiB on v5e/v6e (128 MiB physical)."""
    cap = 128 * 1024 * 1024
    try:
        cap = int(getattr(pltpu.get_tpu_info(), "vmem_capacity_bytes", cap))
    except Exception:
        pass
    return min(100 * 1024 * 1024, (cap * 3) // 4)


def pick_batch_tile(B, L, target_rows=256, max_tile=8):
    """Largest divisor of B (<= max_tile) keeping Bt*L near the MXU row count.
    (On v7x prefer an even number of resulting batch tiles for the 2 TCs.)"""
    bt = 1
    for cand in range(1, min(B, max_tile) + 1):
        if B % cand == 0 and cand * L <= max(target_rows, L):
            bt = cand
    return bt


def run_decoder_stack(x, mem, self_mask, cross_mask, params, n_heads,
                      batch_tile, approx_gelu=False):
    """x: (B*L, D) bf16; mem: (B*Lm, D) bf16; self_mask: (B, L, L) f32 additive;
    cross_mask: (B, 1, Lm) f32 additive.  Returns (B*L, D) bf16."""
    BL, D = x.shape
    B, L, _ = self_mask.shape
    Lm = cross_mask.shape[2]
    NL = params["wqkv"].shape[0]
    head_dim = D // n_heads
    Bt = batch_tile
    assert B % Bt == 0 and BL == B * L

    act_map = lambda b, l: (b, 0)          # batch-tile-indexed, layer-invariant
    mask_map = lambda b, l: (b, 0, 0)
    lay_map = lambda b, l: (l, 0, 0)       # layer-indexed
    const2d = lambda b, l: (0, 0)          # grid-invariant

    weight_names = [
        "wqkv", "bqkv", "wo", "bo", "ln1g", "ln1b",
        "wqc", "bqc", "wkvc", "bkvc", "woc", "boc", "ln2g", "ln2b",
        "w1", "b1", "w2", "b2", "ln3g", "ln3b",
    ]
    weight_args = [params[n] for n in weight_names]

    in_specs = [
        pl.BlockSpec((Bt * L, D), act_map),       # flattened activations (bf16)
        pl.BlockSpec((Bt * Lm, D), act_map),      # flattened memory (bf16, pre-cast)
        pl.BlockSpec((Bt, L, L), mask_map),       # additive self-attn mask
        pl.BlockSpec((Bt, 1, Lm), mask_map),      # additive cross-attn mask
    ] + [pl.BlockSpec((1,) + a.shape[1:], lay_map) for a in weight_args] + [
        pl.BlockSpec((1, D), const2d),            # final LN gamma
        pl.BlockSpec((1, D), const2d),            # final LN beta
    ]

    kernel = functools.partial(
        decoder_stack_kernel,
        n_heads=n_heads, head_dim=head_dim, batch_tile=Bt,
        tgt_len=L, mem_len=Lm, approx_gelu=approx_gelu)

    return pl.pallas_call(
        kernel,
        out_shape=jax.ShapeDtypeStruct((BL, D), jnp.bfloat16),
        grid_spec=pltpu.PrefetchScalarGridSpec(
            num_scalar_prefetch=0,
            grid=(B // Bt, NL),                   # batch tiles outer, layers inner
            in_specs=in_specs,
            out_specs=pl.BlockSpec((Bt * L, D), act_map),   # output == layer carry
        ),
        compiler_params=pltpu.CompilerParams(
            dimension_semantics=("parallel", "arbitrary"),
            vmem_limit_bytes=_vmem_limit_bytes(),
        ),
    )(x, mem, self_mask, cross_mask, *weight_args,
      params["final_ln_g"], params["final_ln_b"])


def bart_decoder_forward(tgt_tokens, memory, params, n_heads,
                         tgt_key_padding_mask=None, memory_key_padding_mask=None,
                         batch_tile=None, approx_gelu=False):
    """tgt_tokens: (B, L) int32; memory: (L_mem, B, D) f32 (sequence-first, as in PyTorch).
    Returns (B, L, D) f32, matching BartDecoder.forward (dropout = identity / eval)."""
    B, L = tgt_tokens.shape
    Lm = memory.shape[0]
    D = params["embed_tokens"].shape[1]

    # Embedding gathers are glue (plain JAX); dropout = identity (eval).
    token_embed = jnp.take(params["embed_tokens"], tgt_tokens, axis=0)          # (B, L, D)
    positions = jnp.arange(L, dtype=jnp.int32)
    pos_embed = jnp.take(params["embed_positions"], positions, axis=0)[None]    # (1, L, D)
    x = (token_embed + pos_embed).astype(jnp.bfloat16).reshape(B * L, D)

    # Hoisted out of the per-layer loop: bf16 memory cast and additive masks built once.
    mem = jnp.transpose(memory, (1, 0, 2)).astype(jnp.bfloat16).reshape(B * Lm, D)

    if tgt_key_padding_mask is None:
        tgt_key_padding_mask = jnp.zeros((B, L), jnp.bool_)
    if memory_key_padding_mask is None:
        memory_key_padding_mask = jnp.zeros((B, Lm), jnp.bool_)

    causal = jnp.where(jnp.arange(L)[None, :] > jnp.arange(L)[:, None],
                       NEG_INF, 0.0).astype(jnp.float32)                        # (L, L)
    tmask = jnp.where(tgt_key_padding_mask, NEG_INF, 0.0).astype(jnp.float32)   # (B, L)
    self_mask = causal[None, :, :] + tmask[:, None, :]                          # (B, L, L)
    cross_mask = jnp.where(memory_key_padding_mask, NEG_INF, 0.0
                           ).astype(jnp.float32)[:, None, :]                    # (B, 1, Lm)

    if batch_tile is None:
        batch_tile = pick_batch_tile(B, L)

    out = run_decoder_stack(x, mem, self_mask, cross_mask, params, n_heads,
                            batch_tile, approx_gelu=approx_gelu)                # (B*L, D) bf16
    return out.reshape(B, L, D).astype(jnp.float32)


# ----------------------------------------------------------------------------
# Deterministic parameter construction (weights stacked over layers)
# ----------------------------------------------------------------------------
def init_params(key, vocab_size, max_positions, d_model, ffn_dim, num_layers,
                pad_id, n_heads):
    head_dim = d_model // n_heads
    qscale = 1.0 / math.sqrt(head_dim)   # folded into the Q projections (see kernel)
    keys = jax.random.split(key, 2 + 20 * num_layers)
    kit = iter(keys)

    def nrm(shape, scale=0.05):
        return jax.random.normal(next(kit), shape, jnp.float32) * scale

    tok = nrm((vocab_size, d_model)).at[pad_id].set(0.0)      # padding_idx zero row
    pos = nrm((max_positions, d_model)).at[pad_id].set(0.0)   # padding_idx zero row

    names = ["wqkv", "bqkv", "wo", "bo", "ln1g", "ln1b",
             "wqc", "bqc", "wkvc", "bkvc", "woc", "boc", "ln2g", "ln2b",
             "w1", "b1", "w2", "b2", "ln3g", "ln3b"]
    per_layer = {n: [] for n in names}
    bf16 = jnp.bfloat16
    for _ in range(num_layers):
        # fused Q|K|V projection (weights stored (in, out)); 1/sqrt(hd) folded into Q
        wq, wk, wv = nrm((d_model, d_model)), nrm((d_model, d_model)), nrm((d_model, d_model))
        bq, bk, bv = nrm((1, d_model)), nrm((1, d_model)), nrm((1, d_model))
        per_layer["wqkv"].append(jnp.concatenate([wq * qscale, wk, wv], axis=1).astype(bf16))
        per_layer["bqkv"].append(jnp.concatenate([bq * qscale, bk, bv], axis=1))
        per_layer["wo"].append(nrm((d_model, d_model)).astype(bf16))
        per_layer["bo"].append(nrm((1, d_model)))
        per_layer["ln1g"].append(jnp.ones((1, d_model), jnp.float32))
        per_layer["ln1b"].append(jnp.zeros((1, d_model), jnp.float32))
        # cross-attention: separate (scaled) Q, fused K|V
        per_layer["wqc"].append((nrm((d_model, d_model)) * qscale).astype(bf16))
        per_layer["bqc"].append(nrm((1, d_model)) * qscale)
        wkc, wvc = nrm((d_model, d_model)), nrm((d_model, d_model))
        bkc, bvc = nrm((1, d_model)), nrm((1, d_model))
        per_layer["wkvc"].append(jnp.concatenate([wkc, wvc], axis=1).astype(bf16))
        per_layer["bkvc"].append(jnp.concatenate([bkc, bvc], axis=1))
        per_layer["woc"].append(nrm((d_model, d_model)).astype(bf16))
        per_layer["boc"].append(nrm((1, d_model)))
        per_layer["ln2g"].append(jnp.ones((1, d_model), jnp.float32))
        per_layer["ln2b"].append(jnp.zeros((1, d_model), jnp.float32))
        # feed-forward
        per_layer["w1"].append(nrm((d_model, ffn_dim)).astype(bf16))
        per_layer["b1"].append(nrm((1, ffn_dim)))
        per_layer["w2"].append(nrm((ffn_dim, d_model)).astype(bf16))
        per_layer["b2"].append(nrm((1, d_model)))
        per_layer["ln3g"].append(jnp.ones((1, d_model), jnp.float32))
        per_layer["ln3b"].append(jnp.zeros((1, d_model), jnp.float32))

    params = {n: jnp.stack(v, axis=0) for n, v in per_layer.items()}
    params["embed_tokens"] = tok
    params["embed_positions"] = pos
    params["final_ln_g"] = jnp.ones((1, d_model), jnp.float32)
    params["final_ln_b"] = jnp.zeros((1, d_model), jnp.float32)
    return params


# ----------------------------------------------------------------------------
# Main
# ----------------------------------------------------------------------------
if __name__ == "__main__":
    # Small shapes, but lane-dense (D multiple of 128) and L multiple of 8.
    vocab_size = 4            # ['<pad>', '<s>', '</s>', '<mask>']
    pad_id = 0
    max_positions = 32
    d_model = 128
    n_heads = 4
    ffn_dim = 256
    num_layers = 2
    B, L_tgt, L_mem = 2, 8, 16

    key = jax.random.PRNGKey(0)
    pkey, mkey = jax.random.split(key)
    params = init_params(pkey, vocab_size, max_positions, d_model,
                         ffn_dim, num_layers, pad_id, n_heads)

    tgt_tokens = jnp.array(
        [[1, 2, 3, 1, 2, 0, 0, 0],
         [2, 3, 1, 2, 0, 0, 0, 0]], dtype=jnp.int32)
    tgt_key_padding_mask = tgt_tokens == pad_id                    # True = pad

    memory = jax.random.normal(mkey, (L_mem, B, d_model), jnp.float32) * 0.1
    mem_valid_len = jnp.array([12, 10], dtype=jnp.int32)
    memory_key_padding_mask = jnp.arange(L_mem)[None, :] >= mem_valid_len[:, None]  # (B, Lm)

    out = bart_decoder_forward(tgt_tokens, memory, params, n_heads,
                               tgt_key_padding_mask, memory_key_padding_mask)
    out = jax.block_until_ready(out)

    assert out.shape == (B, L_tgt, d_model)
    assert bool(jnp.all(jnp.isfinite(out)))
    print("KERNEL_OK")
</pallas_src>

<mosaic_0001>
module attributes {stable_mosaic.version = 11 : i64} {
  func.func @decoder_stack_kernel(%arg0: i32, %arg1: i32, %arg2: memref<16x128xbf16, #tpu.memory_space<vmem>>, %arg3: memref<32x128xbf16, #tpu.memory_space<vmem>>, %arg4: memref<2x8x8xf32, #tpu.memory_space<vmem>>, %arg5: memref<2x1x16xf32, #tpu.memory_space<vmem>>, %arg6: memref<1x128x384xbf16, #tpu.memory_space<vmem>>, %arg7: memref<1x1x384xf32, #tpu.memory_space<vmem>>, %arg8: memref<1x128x128xbf16, #tpu.memory_space<vmem>>, %arg9: memref<1x1x128xf32, #tpu.memory_space<vmem>>, %arg10: memref<1x1x128xf32, #tpu.memory_space<vmem>>, %arg11: memref<1x1x128xf32, #tpu.memory_space<vmem>>, %arg12: memref<1x128x128xbf16, #tpu.memory_space<vmem>>, %arg13: memref<1x1x128xf32, #tpu.memory_space<vmem>>, %arg14: memref<1x128x256xbf16, #tpu.memory_space<vmem>>, %arg15: memref<1x1x256xf32, #tpu.memory_space<vmem>>, %arg16: memref<1x128x128xbf16, #tpu.memory_space<vmem>>, %arg17: memref<1x1x128xf32, #tpu.memory_space<vmem>>, %arg18: memref<1x1x128xf32, #tpu.memory_space<vmem>>, %arg19: memref<1x1x128xf32, #tpu.memory_space<vmem>>, %arg20: memref<1x128x256xbf16, #tpu.memory_space<vmem>>, %arg21: memref<1x1x256xf32, #tpu.memory_space<vmem>>, %arg22: memref<1x256x128xbf16, #tpu.memory_space<vmem>>, %arg23: memref<1x1x128xf32, #tpu.memory_space<vmem>>, %arg24: memref<1x1x128xf32, #tpu.memory_space<vmem>>, %arg25: memref<1x1x128xf32, #tpu.memory_space<vmem>>, %arg26: memref<1x128xf32, #tpu.memory_space<vmem>>, %arg27: memref<1x128xf32, #tpu.memory_space<vmem>>, %arg28: memref<16x128xbf16, #tpu.memory_space<vmem>>) attributes {dimension_semantics = [#tpu.dimension_semantics<parallel>, #tpu.dimension_semantics<arbitrary>], iteration_bounds = array<i64: 1, 2>, scalar_prefetch = 0 : i64, scratch_operands = 0 : i64, tpu.core_type = #tpu.core_type<tc>, window_params = [{transform_indices = @transform_0, window_bounds = array<i64: 16, 128>}, {transform_indices = @transform_1, window_bounds = array<i64: 32, 128>}, {transform_indices = @transform_2, window_bounds = array<i64: 2, 8, 8>}, {transform_indices = @transform_3, window_bounds = array<i64: 2, 1, 16>}, {transform_indices = @transform_4, window_bounds = array<i64: 1, 128, 384>}, {transform_indices = @transform_5, window_bounds = array<i64: 1, 1, 384>}, {transform_indices = @transform_6, window_bounds = array<i64: 1, 128, 128>}, {transform_indices = @transform_7, window_bounds = array<i64: 1, 1, 128>}, {transform_indices = @transform_8, window_bounds = array<i64: 1, 1, 128>}, {transform_indices = @transform_9, window_bounds = array<i64: 1, 1, 128>}, {transform_indices = @transform_10, window_bounds = array<i64: 1, 128, 128>}, {transform_indices = @transform_11, window_bounds = array<i64: 1, 1, 128>}, {transform_indices = @transform_12, window_bounds = array<i64: 1, 128, 256>}, {transform_indices = @transform_13, window_bounds = array<i64: 1, 1, 256>}, {transform_indices = @transform_14, window_bounds = array<i64: 1, 128, 128>}, {transform_indices = @transform_15, window_bounds = array<i64: 1, 1, 128>}, {transform_indices = @transform_16, window_bounds = array<i64: 1, 1, 128>}, {transform_indices = @transform_17, window_bounds = array<i64: 1, 1, 128>}, {transform_indices = @transform_18, window_bounds = array<i64: 1, 128, 256>}, {transform_indices = @transform_19, window_bounds = array<i64: 1, 1, 256>}, {transform_indices = @transform_20, window_bounds = array<i64: 1, 256, 128>}, {transform_indices = @transform_21, window_bounds = array<i64: 1, 1, 128>}, {transform_indices = @transform_22, window_bounds = array<i64: 1, 1, 128>}, {transform_indices = @transform_23, window_bounds = array<i64: 1, 1, 128>}, {pipeline_mode = #tpu.pipeline_mode<synchronous>, transform_indices = @transform_24, window_bounds = array<i64: 1, 128>}, {pipeline_mode = #tpu.pipeline_mode<synchronous>, transform_indices = @transform_25, window_bounds = array<i64: 1, 128>}, {transform_indices = @transform_26, window_bounds = array<i64: 16, 128>}]} {
    %c0_i32 = arith.constant 0 : i32
    %0 = arith.cmpi eq, %arg1, %c0_i32 : i32
    %1 = arith.extui %0 : i1 to i32
    %c0_i32_0 = arith.constant 0 : i32
    %2 = arith.cmpi ne, %1, %c0_i32_0 : i32
    scf.if %2 {
      %c0_117 = arith.constant 0 : index
      %c0_118 = arith.constant 0 : index
      %285 = vector.load %arg2[%c0_117, %c0_118] : memref<16x128xbf16, #tpu.memory_space<vmem>>, vector<16x128xbf16>
      %c0_119 = arith.constant 0 : index
      %c0_120 = arith.constant 0 : index
      %286 = vector.load %arg28[%c0_119, %c0_120] : memref<16x128xbf16, #tpu.memory_space<vmem>>, vector<16x128xbf16>
      tpu.vector_store %arg28[%c0_119, %c0_120], %285 {strides = array<i32>} : memref<16x128xbf16, #tpu.memory_space<vmem>>, vector<16x128xbf16>,
    } else {
    }
    %c0 = arith.constant 0 : index
    %c0_1 = arith.constant 0 : index
    %3 = vector.load %arg28[%c0, %c0_1] : memref<16x128xbf16, #tpu.memory_space<vmem>>, vector<16x128xbf16>
    %4 = arith.extf %3 : vector<16x128xbf16> to vector<16x128xf32>
    %c0_2 = arith.constant 0 : index
    %c0_3 = arith.constant 0 : index
    %c0_4 = arith.constant 0 : index
    %5 = vector.load %arg6[%c0_2, %c0_3, %c0_4] : memref<1x128x384xbf16, #tpu.memory_space<vmem>>, vector<1x128x384xbf16>
    %6 = vector.shape_cast %5 : vector<1x128x384xbf16> to vector<128x384xbf16>
    %cst = arith.constant dense<0.000000e+00> : vector<16x384xf32>
    %7 = tpu.matmul %3, %6, %cst {dimension_numbers = #tpu.dot_dimension_numbers<[1], [0], [0], [1], [0, 0, 1, 1], [], []>} : vector<16x128xbf16>, vector<128x384xbf16>, vector<16x384xf32> -> vector<16x384xf32>
    %c0_5 = arith.constant 0 : index
    %c0_6 = arith.constant 0 : index
    %c0_7 = arith.constant 0 : index
    %8 = vector.load %arg7[%c0_5, %c0_6, %c0_7] : memref<1x1x384xf32, #tpu.memory_space<vmem>>, vector<1x1x384xf32>
    %9 = vector.shape_cast %8 : vector<1x1x384xf32> to vector<1x384xf32>
    %10 = vector.broadcast %9 : vector<1x384xf32> to vector<16x384xf32>
    %11 = arith.addf %7, %10 : vector<16x384xf32>
    %12 = vector.extract_strided_slice %11 {offsets = [0, 0], sizes = [8, 128], strides = [1, 1]} : vector<16x384xf32> to vector<8x128xf32>
    %13 = vector.extract_strided_slice %11 {offsets = [0, 128], sizes = [8, 128], strides = [1, 1]} : vector<16x384xf32> to vector<8x128xf32>
    %14 = vector.extract_strided_slice %11 {offsets = [0, 256], sizes = [8, 128], strides = [1, 1]} : vector<16x384xf32> to vector<8x128xf32>
    %c0_8 = arith.constant 0 : index
    %c0_9 = arith.constant 0 : index
    %c0_10 = arith.constant 0 : index
    %15 = vector.load %arg4[%c0_8, %c0_9, %c0_10] : memref<2x8x8xf32, #tpu.memory_space<vmem>>, vector<1x8x8xf32>
    %16 = vector.shape_cast %15 : vector<1x8x8xf32> to vector<8x8xf32>
    %17 = arith.truncf %12 : vector<8x128xf32> to vector<8x128xbf16>
    %18 = vector.shape_cast %17 : vector<8x128xbf16> to vector<8x4x32xbf16>
    %19 = tpu.transpose %18, [1, 0, 2] : vector<8x4x32xbf16> -> vector<4x8x32xbf16>
    %20 = arith.truncf %13 : vector<8x128xf32> to vector<8x128xbf16>
    %21 = vector.shape_cast %20 : vector<8x128xbf16> to vector<8x4x32xbf16>
    %22 = tpu.transpose %21, [1, 0, 2] : vector<8x4x32xbf16> -> vector<4x8x32xbf16>
    %23 = arith.truncf %14 : vector<8x128xf32> to vector<8x128xbf16>
    %24 = vector.shape_cast %23 : vector<8x128xbf16> to vector<8x4x32xbf16>
    %25 = tpu.transpose %24, [1, 0, 2] : vector<8x4x32xbf16> -> vector<4x8x32xbf16>
    "tpu.trace_start"() <{level = 10 : i32, message = "hqd,hkd->hqk"}> : () -> ()
    %cst_11 = arith.constant dense<0.000000e+00> : vector<4x8x8xf32>
    %26 = tpu.matmul %19, %22, %cst_11 {dimension_numbers = #tpu.dot_dimension_numbers<[2], [2], [1], [1], [0, 0, 0, 1, 1, 1], [0], [0]>} : vector<4x8x32xbf16>, vector<4x8x32xbf16>, vector<4x8x8xf32> -> vector<4x8x8xf32>
    "tpu.trace_stop"() : () -> ()
    %27 = vector.shape_cast %16 : vector<8x8xf32> to vector<1x8x8xf32>
    %28 = vector.broadcast %27 : vector<1x8x8xf32> to vector<4x8x8xf32>
    %29 = arith.addf %26, %28 : vector<4x8x8xf32>
    %cst_12 = arith.constant dense<0xFF800000> : vector<4x8xf32>
    %30 = vector.multi_reduction <maximumf>, %29, %cst_12 [2] : vector<4x8x8xf32> to vector<4x8xf32>
    %31 = vector.shape_cast %30 : vector<4x8xf32> to vector<4x8x1xf32>
    %32 = vector.broadcast %31 : vector<4x8x1xf32> to vector<4x8x8xf32>
    %33 = arith.subf %29, %32 : vector<4x8x8xf32>
    %34 = math.exp %33 : vector<4x8x8xf32>
    %cst_13 = arith.constant dense<0.000000e+00> : vector<4x8xf32>
    %35 = vector.multi_reduction <add>, %34, %cst_13 [2] : vector<4x8x8xf32> to vector<4x8xf32>
    %36 = vector.shape_cast %35 : vector<4x8xf32> to vector<4x8x1xf32>
    %37 = tpu.reciprocal %36 {approx = true} : vector<4x8x1xf32> -> vector<4x8x1xf32>
    %38 = vector.broadcast %37 : vector<4x8x1xf32> to vector<4x8x8xf32>
    %39 = arith.mulf %34, %38 : vector<4x8x8xf32>
    %40 = arith.truncf %39 : vector<4x8x8xf32> to vector<4x8x8xbf16>
    "tpu.trace_start"() <{level = 10 : i32, message = "hqk,hkd->hqd"}> : () -> ()
    %cst_14 = arith.constant dense<0.000000e+00> : vector<4x8x32xf32>
    %41 = tpu.matmul %40, %25, %cst_14 {dimension_numbers = #tpu.dot_dimension_numbers<[2], [1], [1], [2], [0, 0, 0, 1, 1, 2], [0], [0]>} : vector<4x8x8xbf16>, vector<4x8x32xbf16>, vector<4x8x32xf32> -> vector<4x8x32xf32>
    "tpu.trace_stop"() : () -> ()
    %42 = tpu.transpose %41, [1, 0, 2] : vector<4x8x32xf32> -> vector<8x4x32xf32>
    %43 = vector.shape_cast %42 : vector<8x4x32xf32> to vector<8x128xf32>
    %44 = vector.extract_strided_slice %11 {offsets = [8, 0], sizes = [8, 128], strides = [1, 1]} : vector<16x384xf32> to vector<8x128xf32>
    %45 = vector.extract_strided_slice %11 {offsets = [8, 128], sizes = [8, 128], strides = [1, 1]} : vector<16x384xf32> to vector<8x128xf32>
    %46 = vector.extract_strided_slice %11 {offsets = [8, 256], sizes = [8, 128], strides = [1, 1]} : vector<16x384xf32> to vector<8x128xf32>
    %c1 = arith.constant 1 : index
    %c0_15 = arith.constant 0 : index
    %c0_16 = arith.constant 0 : index
    %47 = vector.load %arg4[%c1, %c0_15, %c0_16] : memref<2x8x8xf32, #tpu.memory_space<vmem>>, vector<1x8x8xf32>
    %48 = vector.shape_cast %47 : vector<1x8x8xf32> to vector<8x8xf32>
    %49 = arith.truncf %44 : vector<8x128xf32> to vector<8x128xbf16>
    %50 = vector.shape_cast %49 : vector<8x128xbf16> to vector<8x4x32xbf16>
    %51 = tpu.transpose %50, [1, 0, 2] : vector<8x4x32xbf16> -> vector<4x8x32xbf16>
    %52 = arith.truncf %45 : vector<8x128xf32> to vector<8x128xbf16>
    %53 = vector.shape_cast %52 : vector<8x128xbf16> to vector<8x4x32xbf16>
    %54 = tpu.transpose %53, [1, 0, 2] : vector<8x4x32xbf16> -> vector<4x8x32xbf16>
    %55 = arith.truncf %46 : vector<8x128xf32> to vector<8x128xbf16>
    %56 = vector.shape_cast %55 : vector<8x128xbf16> to vector<8x4x32xbf16>
    %57 = tpu.transpose %56, [1, 0, 2] : vector<8x4x32xbf16> -> vector<4x8x32xbf16>
    "tpu.trace_start"() <{level = 10 : i32, message = "hqd,hkd->hqk"}> : () -> ()
    %cst_17 = arith.constant dense<0.000000e+00> : vector<4x8x8xf32>
    %58 = tpu.matmul %51, %54, %cst_17 {dimension_numbers = #tpu.dot_dimension_numbers<[2], [2], [1], [1], [0, 0, 0, 1, 1, 1], [0], [0]>} : vector<4x8x32xbf16>, vector<4x8x32xbf16>, vector<4x8x8xf32> -> vector<4x8x8xf32>
    "tpu.trace_stop"() : () -> ()
    %59 = vector.shape_cast %48 : vector<8x8xf32> to vector<1x8x8xf32>
    %60 = vector.broadcast %59 : vector<1x8x8xf32> to vector<4x8x8xf32>
    %61 = arith.addf %58, %60 : vector<4x8x8xf32>
    %cst_18 = arith.constant dense<0xFF800000> : vector<4x8xf32>
    %62 = vector.multi_reduction <maximumf>, %61, %cst_18 [2] : vector<4x8x8xf32> to vector<4x8xf32>
    %63 = vector.shape_cast %62 : vector<4x8xf32> to vector<4x8x1xf32>
    %64 = vector.broadcast %63 : vector<4x8x1xf32> to vector<4x8x8xf32>
    %65 = arith.subf %61, %64 : vector<4x8x8xf32>
    %66 = math.exp %65 : vector<4x8x8xf32>
    %cst_19 = arith.constant dense<0.000000e+00> : vector<4x8xf32>
    %67 = vector.multi_reduction <add>, %66, %cst_19 [2] : vector<4x8x8xf32> to vector<4x8xf32>
    %68 = vector.shape_cast %67 : vector<4x8xf32> to vector<4x8x1xf32>
    %69 = tpu.reciprocal %68 {approx = true} : vector<4x8x1xf32> -> vector<4x8x1xf32>
    %70 = vector.broadcast %69 : vector<4x8x1xf32> to vector<4x8x8xf32>
    %71 = arith.mulf %66, %70 : vector<4x8x8xf32>
    %72 = arith.truncf %71 : vector<4x8x8xf32> to vector<4x8x8xbf16>
    "tpu.trace_start"() <{level = 10 : i32, message = "hqk,hkd->hqd"}> : () -> ()
    %cst_20 = arith.constant dense<0.000000e+00> : vector<4x8x32xf32>
    %73 = tpu.matmul %72, %57, %cst_20 {dimension_numbers = #tpu.dot_dimension_numbers<[2], [1], [1], [2], [0, 0, 0, 1, 1, 2], [0], [0]>} : vector<4x8x8xbf16>, vector<4x8x32xbf16>, vector<4x8x32xf32> -> vector<4x8x32xf32>
    "tpu.trace_stop"() : () -> ()
    %74 = tpu.transpose %73, [1, 0, 2] : vector<4x8x32xf32> -> vector<8x4x32xf32>
    %75 = vector.shape_cast %74 : vector<8x4x32xf32> to vector<8x128xf32>
    %76 = tpu.concatenate %43, %75 in 0 : vector<8x128xf32>, vector<8x128xf32> -> vector<16x128xf32>
    %77 = arith.truncf %76 : vector<16x128xf32> to vector<16x128xbf16>
    %c0_21 = arith.constant 0 : index
    %c0_22 = arith.constant 0 : index
    %c0_23 = arith.constant 0 : index
    %78 = vector.load %arg8[%c0_21, %c0_22, %c0_23] : memref<1x128x128xbf16, #tpu.memory_space<vmem>>, vector<1x128x128xbf16>
    %79 = vector.shape_cast %78 : vector<1x128x128xbf16> to vector<128x128xbf16>
    %cst_24 = arith.constant dense<0.000000e+00> : vector<16x128xf32>
    %80 = tpu.matmul %77, %79, %cst_24 {dimension_numbers = #tpu.dot_dimension_numbers<[1], [0], [0], [1], [0, 0, 1, 1], [], []>} : vector<16x128xbf16>, vector<128x128xbf16>, vector<16x128xf32> -> vector<16x128xf32>
    %c0_25 = arith.constant 0 : index
    %c0_26 = arith.constant 0 : index
    %c0_27 = arith.constant 0 : index
    %81 = vector.load %arg9[%c0_25, %c0_26, %c0_27] : memref<1x1x128xf32, #tpu.memory_space<vmem>>, vector<1x1x128xf32>
    %82 = vector.shape_cast %81 : vector<1x1x128xf32> to vector<1x128xf32>
    %83 = vector.broadcast %82 : vector<1x128xf32> to vector<16x128xf32>
    %84 = arith.addf %80, %83 : vector<16x128xf32>
    %85 = arith.addf %4, %84 : vector<16x128xf32>
    %c0_28 = arith.constant 0 : index
    %c0_29 = arith.constant 0 : index
    %c0_30 = arith.constant 0 : index
    %86 = vector.load %arg10[%c0_28, %c0_29, %c0_30] : memref<1x1x128xf32, #tpu.memory_space<vmem>>, vector<1x1x128xf32>
    %87 = vector.shape_cast %86 : vector<1x1x128xf32> to vector<1x128xf32>
    %c0_31 = arith.constant 0 : index
    %c0_32 = arith.constant 0 : index
    %c0_33 = arith.constant 0 : index
    %88 = vector.load %arg11[%c0_31, %c0_32, %c0_33] : memref<1x1x128xf32, #tpu.memory_space<vmem>>, vector<1x1x128xf32>
    %89 = vector.shape_cast %88 : vector<1x1x128xf32> to vector<1x128xf32>
    %cst_34 = arith.constant dense<0.000000e+00> : vector<16xf32>
    %90 = vector.multi_reduction <add>, %85, %cst_34 [1] : vector<16x128xf32> to vector<16xf32>
    %91 = vector.shape_cast %90 : vector<16xf32> to vector<16x1xf32>
    %cst_35 = arith.constant 1.280000e+02 : f32
    %92 = vector.broadcast %cst_35 : f32 to vector<16x1xf32>
    %93 = arith.divf %91, %92 : vector<16x1xf32>
    %94 = vector.broadcast %93 : vector<16x1xf32> to vector<16x128xf32>
    %95 = arith.subf %85, %94 : vector<16x128xf32>
    %96 = arith.mulf %95, %95 : vector<16x128xf32>
    %cst_36 = arith.constant dense<0.000000e+00> : vector<16xf32>
    %97 = vector.multi_reduction <add>, %96, %cst_36 [1] : vector<16x128xf32> to vector<16xf32>
    %98 = vector.shape_cast %97 : vector<16xf32> to vector<16x1xf32>
    %cst_37 = arith.constant 1.280000e+02 : f32
    %99 = vector.broadcast %cst_37 : f32 to vector<16x1xf32>
    %100 = arith.divf %98, %99 : vector<16x1xf32>
    %101 = vector.broadcast %93 : vector<16x1xf32> to vector<16x128xf32>
    %102 = arith.subf %85, %101 : vector<16x128xf32>
    %cst_38 = arith.constant 9.99999974E-6 : f32
    %103 = vector.broadcast %cst_38 : f32 to vector<16x1xf32>
    %104 = arith.addf %100, %103 : vector<16x1xf32>
    %105 = math.rsqrt %104 : vector<16x1xf32>
    %106 = vector.broadcast %105 : vector<16x1xf32> to vector<16x128xf32>
    %107 = arith.mulf %102, %106 : vector<16x128xf32>
    %108 = vector.broadcast %87 : vector<1x128xf32> to vector<16x128xf32>
    %109 = arith.mulf %107, %108 : vector<16x128xf32>
    %110 = vector.broadcast %89 : vector<1x128xf32> to vector<16x128xf32>
    %111 = arith.addf %109, %110 : vector<16x128xf32>
    %112 = arith.truncf %111 : vector<16x128xf32> to vector<16x128xbf16>
    %c0_39 = arith.constant 0 : index
    %c0_40 = arith.constant 0 : index
    %c0_41 = arith.constant 0 : index
    %113 = vector.load %arg12[%c0_39, %c0_40, %c0_41] : memref<1x128x128xbf16, #tpu.memory_space<vmem>>, vector<1x128x128xbf16>
    %114 = vector.shape_cast %113 : vector<1x128x128xbf16> to vector<128x128xbf16>
    %cst_42 = arith.constant dense<0.000000e+00> : vector<16x128xf32>
    %115 = tpu.matmul %112, %114, %cst_42 {dimension_numbers = #tpu.dot_dimension_numbers<[1], [0], [0], [1], [0, 0, 1, 1], [], []>} : vector<16x128xbf16>, vector<128x128xbf16>, vector<16x128xf32> -> vector<16x128xf32>
    %c0_43 = arith.constant 0 : index
    %c0_44 = arith.constant 0 : index
    %c0_45 = arith.constant 0 : index
    %116 = vector.load %arg13[%c0_43, %c0_44, %c0_45] : memref<1x1x128xf32, #tpu.memory_space<vmem>>, vector<1x1x128xf32>
    %117 = vector.shape_cast %116 : vector<1x1x128xf32> to vector<1x128xf32>
    %118 = vector.broadcast %117 : vector<1x128xf32> to vector<16x128xf32>
    %119 = arith.addf %115, %118 : vector<16x128xf32>
    %c0_46 = arith.constant 0 : index
    %c0_47 = arith.constant 0 : index
    %120 = vector.load %arg3[%c0_46, %c0_47] : memref<32x128xbf16, #tpu.memory_space<vmem>>, vector<32x128xbf16>
    %c0_48 = arith.constant 0 : index
    %c0_49 = arith.constant 0 : index
    %c0_50 = arith.constant 0 : index
    %121 = vector.load %arg14[%c0_48, %c0_49, %c0_50] : memref<1x128x256xbf16, #tpu.memory_space<vmem>>, vector<1x128x256xbf16>
    %122 = vector.shape_cast %121 : vector<1x128x256xbf16> to vector<128x256xbf16>
    %cst_51 = arith.constant dense<0.000000e+00> : vector<32x256xf32>
    %123 = tpu.matmul %120, %122, %cst_51 {dimension_numbers = #tpu.dot_dimension_numbers<[1], [0], [0], [1], [0, 0, 1, 1], [], []>} : vector<32x128xbf16>, vector<128x256xbf16>, vector<32x256xf32> -> vector<32x256xf32>
    %c0_52 = arith.constant 0 : index
    %c0_53 = arith.constant 0 : index
    %c0_54 = arith.constant 0 : index
    %124 = vector.load %arg15[%c0_52, %c0_53, %c0_54] : memref<1x1x256xf32, #tpu.memory_space<vmem>>, vector<1x1x256xf32>
    %125 = vector.shape_cast %124 : vector<1x1x256xf32> to vector<1x256xf32>
    %126 = vector.broadcast %125 : vector<1x256xf32> to vector<32x256xf32>
    %127 = arith.addf %123, %126 : vector<32x256xf32>
    %128 = vector.extract_strided_slice %119 {offsets = [0, 0], sizes = [8, 128], strides = [1, 1]} : vector<16x128xf32> to vector<8x128xf32>
    %129 = vector.extract_strided_slice %127 {offsets = [0, 0], sizes = [16, 128], strides = [1, 1]} : vector<32x256xf32> to vector<16x128xf32>
    %130 = vector.extract_strided_slice %127 {offsets = [0, 128], sizes = [16, 128], strides = [1, 1]} : vector<32x256xf32> to vector<16x128xf32>
    %c0_55 = arith.constant 0 : index
    %c0_56 = arith.constant 0 : index
    %c0_57 = arith.constant 0 : index
    %131 = vector.load %arg5[%c0_55, %c0_56, %c0_57] : memref<2x1x16xf32, #tpu.memory_space<vmem>>, vector<1x1x16xf32>
    %132 = vector.shape_cast %131 : vector<1x1x16xf32> to vector<1x16xf32>
    %133 = arith.truncf %128 : vector<8x128xf32> to vector<8x128xbf16>
    %134 = vector.shape_cast %133 : vector<8x128xbf16> to vector<8x4x32xbf16>
    %135 = tpu.transpose %134, [1, 0, 2] : vector<8x4x32xbf16> -> vector<4x8x32xbf16>
    %136 = arith.truncf %129 : vector<16x128xf32> to vector<16x128xbf16>
    %137 = vector.shape_cast %136 : vector<16x128xbf16> to vector<16x4x32xbf16>
    %138 = tpu.transpose %137, [1, 0, 2] : vector<16x4x32xbf16> -> vector<4x16x32xbf16>
    %139 = arith.truncf %130 : vector<16x128xf32> to vector<16x128xbf16>
    %140 = vector.shape_cast %139 : vector<16x128xbf16> to vector<16x4x32xbf16>
    %141 = tpu.transpose %140, [1, 0, 2] : vector<16x4x32xbf16> -> vector<4x16x32xbf16>
    "tpu.trace_start"() <{level = 10 : i32, message = "hqd,hkd->hqk"}> : () -> ()
    %cst_58 = arith.constant dense<0.000000e+00> : vector<4x8x16xf32>
    %142 = tpu.matmul %135, %138, %cst_58 {dimension_numbers = #tpu.dot_dimension_numbers<[2], [2], [1], [1], [0, 0, 0, 1, 1, 1], [0], [0]>} : vector<4x8x32xbf16>, vector<4x16x32xbf16>, vector<4x8x16xf32> -> vector<4x8x16xf32>
    "tpu.trace_stop"() : () -> ()
    %143 = vector.shape_cast %132 : vector<1x16xf32> to vector<1x1x16xf32>
    %144 = vector.broadcast %143 : vector<1x1x16xf32> to vector<4x8x16xf32>
    %145 = arith.addf %142, %144 : vector<4x8x16xf32>
    %cst_59 = arith.constant dense<0xFF800000> : vector<4x8xf32>
    %146 = vector.multi_reduction <maximumf>, %145, %cst_59 [2] : vector<4x8x16xf32> to vector<4x8xf32>
    %147 = vector.shape_cast %146 : vector<4x8xf32> to vector<4x8x1xf32>
    %148 = vector.broadcast %147 : vector<4x8x1xf32> to vector<4x8x16xf32>
    %149 = arith.subf %145, %148 : vector<4x8x16xf32>
    %150 = math.exp %149 : vector<4x8x16xf32>
    %cst_60 = arith.constant dense<0.000000e+00> : vector<4x8xf32>
    %151 = vector.multi_reduction <add>, %150, %cst_60 [2] : vector<4x8x16xf32> to vector<4x8xf32>
    %152 = vector.shape_cast %151 : vector<4x8xf32> to vector<4x8x1xf32>
    %153 = tpu.reciprocal %152 {approx = true} : vector<4x8x1xf32> -> vector<4x8x1xf32>
    %154 = vector.broadcast %153 : vector<4x8x1xf32> to vector<4x8x16xf32>
    %155 = arith.mulf %150, %154 : vector<4x8x16xf32>
    %156 = arith.truncf %155 : vector<4x8x16xf32> to vector<4x8x16xbf16>
    "tpu.trace_start"() <{level = 10 : i32, message = "hqk,hkd->hqd"}> : () -> ()
    %cst_61 = arith.constant dense<0.000000e+00> : vector<4x8x32xf32>
    %157 = tpu.matmul %156, %141, %cst_61 {dimension_numbers = #tpu.dot_dimension_numbers<[2], [1], [1], [2], [0, 0, 0, 1, 1, 2], [0], [0]>} : vector<4x8x16xbf16>, vector<4x16x32xbf16>, vector<4x8x32xf32> -> vector<4x8x32xf32>
    "tpu.trace_stop"() : () -> ()
    %158 = tpu.transpose %157, [1, 0, 2] : vector<4x8x32xf32> -> vector<8x4x32xf32>
    %159 = vector.shape_cast %158 : vector<8x4x32xf32> to vector<8x128xf32>
    %160 = vector.extract_strided_slice %119 {offsets = [8, 0], sizes = [8, 128], strides = [1, 1]} : vector<16x128xf32> to vector<8x128xf32>
    %161 = vector.extract_strided_slice %127 {offsets = [16, 0], sizes = [16, 128], strides = [1, 1]} : vector<32x256xf32> to vector<16x128xf32>
    %162 = vector.extract_strided_slice %127 {offsets = [16, 128], sizes = [16, 128], strides = [1, 1]} : vector<32x256xf32> to vector<16x128xf32>
    %c1_62 = arith.constant 1 : index
    %c0_63 = arith.constant 0 : index
    %c0_64 = arith.constant 0 : index
    %163 = vector.load %arg5[%c1_62, %c0_63, %c0_64] : memref<2x1x16xf32, #tpu.memory_space<vmem>>, vector<1x1x16xf32>
    %164 = vector.shape_cast %163 : vector<1x1x16xf32> to vector<1x16xf32>
    %165 = arith.truncf %160 : vector<8x128xf32> to vector<8x128xbf16>
    %166 = vector.shape_cast %165 : vector<8x128xbf16> to vector<8x4x32xbf16>
    %167 = tpu.transpose %166, [1, 0, 2] : vector<8x4x32xbf16> -> vector<4x8x32xbf16>
    %168 = arith.truncf %161 : vector<16x128xf32> to vector<16x128xbf16>
    %169 = vector.shape_cast %168 : vector<16x128xbf16> to vector<16x4x32xbf16>
    %170 = tpu.transpose %169, [1, 0, 2] : vector<16x4x32xbf16> -> vector<4x16x32xbf16>
    %171 = arith.truncf %162 : vector<16x128xf32> to vector<16x128xbf16>
    %172 = vector.shape_cast %171 : vector<16x128xbf16> to vector<16x4x32xbf16>
    %173 = tpu.transpose %172, [1, 0, 2] : vector<16x4x32xbf16> -> vector<4x16x32xbf16>
    "tpu.trace_start"() <{level = 10 : i32, message = "hqd,hkd->hqk"}> : () -> ()
    %cst_65 = arith.constant dense<0.000000e+00> : vector<4x8x16xf32>
    %174 = tpu.matmul %167, %170, %cst_65 {dimension_numbers = #tpu.dot_dimension_numbers<[2], [2], [1], [1], [0, 0, 0, 1, 1, 1], [0], [0]>} : vector<4x8x32xbf16>, vector<4x16x32xbf16>, vector<4x8x16xf32> -> vector<4x8x16xf32>
    "tpu.trace_stop"() : () -> ()
    %175 = vector.shape_cast %164 : vector<1x16xf32> to vector<1x1x16xf32>
    %176 = vector.broadcast %175 : vector<1x1x16xf32> to vector<4x8x16xf32>
    %177 = arith.addf %174, %176 : vector<4x8x16xf32>
    %cst_66 = arith.constant dense<0xFF800000> : vector<4x8xf32>
    %178 = vector.multi_reduction <maximumf>, %177, %cst_66 [2] : vector<4x8x16xf32> to vector<4x8xf32>
    %179 = vector.shape_cast %178 : vector<4x8xf32> to vector<4x8x1xf32>
    %180 = vector.broadcast %179 : vector<4x8x1xf32> to vector<4x8x16xf32>
    %181 = arith.subf %177, %180 : vector<4x8x16xf32>
    %182 = math.exp %181 : vector<4x8x16xf32>
    %cst_67 = arith.constant dense<0.000000e+00> : vector<4x8xf32>
    %183 = vector.multi_reduction <add>, %182, %cst_67 [2] : vector<4x8x16xf32> to vector<4x8xf32>
    %184 = vector.shape_cast %183 : vector<4x8xf32> to vector<4x8x1xf32>
    %185 = tpu.reciprocal %184 {approx = true} : vector<4x8x1xf32> -> vector<4x8x1xf32>
    %186 = vector.broadcast %185 : vector<4x8x1xf32> to vector<4x8x16xf32>
    %187 = arith.mulf %182, %186 : vector<4x8x16xf32>
    %188 = arith.truncf %187 : vector<4x8x16xf32> to vector<4x8x16xbf16>
    "tpu.trace_start"() <{level = 10 : i32, message = "hqk,hkd->hqd"}> : () -> ()
    %cst_68 = arith.constant dense<0.000000e+00> : vector<4x8x32xf32>
    %189 = tpu.matmul %188, %173, %cst_68 {dimension_numbers = #tpu.dot_dimension_numbers<[2], [1], [1], [2], [0, 0, 0, 1, 1, 2], [0], [0]>} : vector<4x8x16xbf16>, vector<4x16x32xbf16>, vector<4x8x32xf32> -> vector<4x8x32xf32>
    "tpu.trace_stop"() : () -> ()
    %190 = tpu.transpose %189, [1, 0, 2] : vector<4x8x32xf32> -> vector<8x4x32xf32>
    %191 = vector.shape_cast %190 : vector<8x4x32xf32> to vector<8x128xf32>
    %192 = tpu.concatenate %159, %191 in 0 : vector<8x128xf32>, vector<8x128xf32> -> vector<16x128xf32>
    %193 = arith.truncf %192 : vector<16x128xf32> to vector<16x128xbf16>
    %c0_69 = arith.constant 0 : index
    %c0_70 = arith.constant 0 : index
    %c0_71 = arith.constant 0 : index
    %194 = vector.load %arg16[%c0_69, %c0_70, %c0_71] : memref<1x128x128xbf16, #tpu.memory_space<vmem>>, vector<1x128x128xbf16>
    %195 = vector.shape_cast %194 : vector<1x128x128xbf16> to vector<128x128xbf16>
    %cst_72 = arith.constant dense<0.000000e+00> : vector<16x128xf32>
    %196 = tpu.matmul %193, %195, %cst_72 {dimension_numbers = #tpu.dot_dimension_numbers<[1], [0], [0], [1], [0, 0, 1, 1], [], []>} : vector<16x128xbf16>, vector<128x128xbf16>, vector<16x128xf32> -> vector<16x128xf32>
    %c0_73 = arith.constant 0 : index
    %c0_74 = arith.constant 0 : index
    %c0_75 = arith.constant 0 : index
    %197 = vector.load %arg17[%c0_73, %c0_74, %c0_75] : memref<1x1x128xf32, #tpu.memory_space<vmem>>, vector<1x1x128xf32>
    %198 = vector.shape_cast %197 : vector<1x1x128xf32> to vector<1x128xf32>
    %199 = vector.broadcast %198 : vector<1x128xf32> to vector<16x128xf32>
    %200 = arith.addf %196, %199 : vector<16x128xf32>
    %201 = arith.addf %111, %200 : vector<16x128xf32>
    %c0_76 = arith.constant 0 : index
    %c0_77 = arith.constant 0 : index
    %c0_78 = arith.constant 0 : index
    %202 = vector.load %arg18[%c0_76, %c0_77, %c0_78] : memref<1x1x128xf32, #tpu.memory_space<vmem>>, vector<1x1x128xf32>
    %203 = vector.shape_cast %202 : vector<1x1x128xf32> to vector<1x128xf32>
    %c0_79 = arith.constant 0 : index
    %c0_80 = arith.constant 0 : index
    %c0_81 = arith.constant 0 : index
    %204 = vector.load %arg19[%c0_79, %c0_80, %c0_81] : memref<1x1x128xf32, #tpu.memory_space<vmem>>, vector<1x1x128xf32>
    %205 = vector.shape_cast %204 : vector<1x1x128xf32> to vector<1x128xf32>
    %cst_82 = arith.constant dense<0.000000e+00> : vector<16xf32>
    %206 = vector.multi_reduction <add>, %201, %cst_82 [1] : vector<16x128xf32> to vector<16xf32>
    %207 = vector.shape_cast %206 : vector<16xf32> to vector<16x1xf32>
    %cst_83 = arith.constant 1.280000e+02 : f32
    %208 = vector.broadcast %cst_83 : f32 to vector<16x1xf32>
    %209 = arith.divf %207, %208 : vector<16x1xf32>
    %210 = vector.broadcast %209 : vector<16x1xf32> to vector<16x128xf32>
    %211 = arith.subf %201, %210 : vector<16x128xf32>
    %212 = arith.mulf %211, %211 : vector<16x128xf32>
    %cst_84 = arith.constant dense<0.000000e+00> : vector<16xf32>
    %213 = vector.multi_reduction <add>, %212, %cst_84 [1] : vector<16x128xf32> to vector<16xf32>
    %214 = vector.shape_cast %213 : vector<16xf32> to vector<16x1xf32>
    %cst_85 = arith.constant 1.280000e+02 : f32
    %215 = vector.broadcast %cst_85 : f32 to vector<16x1xf32>
    %216 = arith.divf %214, %215 : vector<16x1xf32>
    %217 = vector.broadcast %209 : vector<16x1xf32> to vector<16x128xf32>
    %218 = arith.subf %201, %217 : vector<16x128xf32>
    %cst_86 = arith.constant 9.99999974E-6 : f32
    %219 = vector.broadcast %cst_86 : f32 to vector<16x1xf32>
    %220 = arith.addf %216, %219 : vector<16x1xf32>
    %221 = math.rsqrt %220 : vector<16x1xf32>
    %222 = vector.broadcast %221 : vector<16x1xf32> to vector<16x128xf32>
    %223 = arith.mulf %218, %222 : vector<16x128xf32>
    %224 = vector.broadcast %203 : vector<1x128xf32> to vector<16x128xf32>
    %225 = arith.mulf %223, %224 : vector<16x128xf32>
    %226 = vector.broadcast %205 : vector<1x128xf32> to vector<16x128xf32>
    %227 = arith.addf %225, %226 : vector<16x128xf32>
    %228 = arith.truncf %227 : vector<16x128xf32> to vector<16x128xbf16>
    %c0_87 = arith.constant 0 : index
    %c0_88 = arith.constant 0 : index
    %c0_89 = arith.constant 0 : index
    %229 = vector.load %arg20[%c0_87, %c0_88, %c0_89] : memref<1x128x256xbf16, #tpu.memory_space<vmem>>, vector<1x128x256xbf16>
    %230 = vector.shape_cast %229 : vector<1x128x256xbf16> to vector<128x256xbf16>
    %cst_90 = arith.constant dense<0.000000e+00> : vector<16x256xf32>
    %231 = tpu.matmul %228, %230, %cst_90 {dimension_numbers = #tpu.dot_dimension_numbers<[1], [0], [0], [1], [0, 0, 1, 1], [], []>} : vector<16x128xbf16>, vector<128x256xbf16>, vector<16x256xf32> -> vector<16x256xf32>
    %c0_91 = arith.constant 0 : index
    %c0_92 = arith.constant 0 : index
    %c0_93 = arith.constant 0 : index
    %232 = vector.load %arg21[%c0_91, %c0_92, %c0_93] : memref<1x1x256xf32, #tpu.memory_space<vmem>>, vector<1x1x256xf32>
    %233 = vector.shape_cast %232 : vector<1x1x256xf32> to vector<1x256xf32>
    %234 = vector.broadcast %233 : vector<1x256xf32> to vector<16x256xf32>
    %235 = arith.addf %231, %234 : vector<16x256xf32>
    %cst_94 = arith.constant 5.000000e-01 : f32
    %236 = vector.broadcast %cst_94 : f32 to vector<16x256xf32>
    %237 = arith.mulf %235, %236 : vector<16x256xf32>
    %cst_95 = arith.constant 0.707106769 : f32
    %238 = vector.broadcast %cst_95 : f32 to vector<16x256xf32>
    %239 = arith.mulf %235, %238 : vector<16x256xf32>
    %240 = math.erf %239 : vector<16x256xf32>
    %cst_96 = arith.constant 1.000000e+00 : f32
    %241 = vector.broadcast %cst_96 : f32 to vector<16x256xf32>
    %242 = arith.addf %241, %240 : vector<16x256xf32>
    %243 = arith.mulf %237, %242 : vector<16x256xf32>
    %244 = arith.truncf %243 : vector<16x256xf32> to vector<16x256xbf16>
    %c0_97 = arith.constant 0 : index
    %c0_98 = arith.constant 0 : index
    %c0_99 = arith.constant 0 : index
    %245 = vector.load %arg22[%c0_97, %c0_98, %c0_99] : memref<1x256x128xbf16, #tpu.memory_space<vmem>>, vector<1x256x128xbf16>
    %246 = vector.shape_cast %245 : vector<1x256x128xbf16> to vector<256x128xbf16>
    %cst_100 = arith.constant dense<0.000000e+00> : vector<16x128xf32>
    %247 = tpu.matmul %244, %246, %cst_100 {dimension_numbers = #tpu.dot_dimension_numbers<[1], [0], [0], [1], [0, 0, 1, 1], [], []>} : vector<16x256xbf16>, vector<256x128xbf16>, vector<16x128xf32> -> vector<16x128xf32>
    %c0_101 = arith.constant 0 : index
    %c0_102 = arith.constant 0 : index
    %c0_103 = arith.constant 0 : index
    %248 = vector.load %arg23[%c0_101, %c0_102, %c0_103] : memref<1x1x128xf32, #tpu.memory_space<vmem>>, vector<1x1x128xf32>
    %249 = vector.shape_cast %248 : vector<1x1x128xf32> to vector<1x128xf32>
    %250 = vector.broadcast %249 : vector<1x128xf32> to vector<16x128xf32>
    %251 = arith.addf %247, %250 : vector<16x128xf32>
    %252 = arith.addf %227, %251 : vector<16x128xf32>
    %c0_104 = arith.constant 0 : index
    %c0_105 = arith.constant 0 : index
    %c0_106 = arith.constant 0 : index
    %253 = vector.load %arg24[%c0_104, %c0_105, %c0_106] : memref<1x1x128xf32, #tpu.memory_space<vmem>>, vector<1x1x128xf32>
    %254 = vector.shape_cast %253 : vector<1x1x128xf32> to vector<1x128xf32>
    %c0_107 = arith.constant 0 : index
    %c0_108 = arith.constant 0 : index
    %c0_109 = arith.constant 0 : index
    %255 = vector.load %arg25[%c0_107, %c0_108, %c0_109] : memref<1x1x128xf32, #tpu.memory_space<vmem>>, vector<1x1x128xf32>
    %256 = vector.shape_cast %255 : vector<1x1x128xf32> to vector<1x128xf32>
    %cst_110 = arith.constant dense<0.000000e+00> : vector<16xf32>
    %257 = vector.multi_reduction <add>, %252, %cst_110 [1] : vector<16x128xf32> to vector<16xf32>
    %258 = vector.shape_cast %257 : vector<16xf32> to vector<16x1xf32>
    %cst_111 = arith.constant 1.280000e+02 : f32
    %259 = vector.broadcast %cst_111 : f32 to vector<16x1xf32>
    %260 = arith.divf %258, %259 : vector<16x1xf32>
    %261 = vector.broadcast %260 : vector<16x1xf32> to vector<16x128xf32>
    %262 = arith.subf %252, %261 : vector<16x128xf32>
    %263 = arith.mulf %262, %262 : vector<16x128xf32>
    %cst_112 = arith.constant dense<0.000000e+00> : vector<16xf32>
    %264 = vector.multi_reduction <add>, %263, %cst_112 [1] : vector<16x128xf32> to vector<16xf32>
    %265 = vector.shape_cast %264 : vector<16xf32> to vector<16x1xf32>
    %cst_113 = arith.constant 1.280000e+02 : f32
    %266 = vector.broadcast %cst_113 : f32 to vector<16x1xf32>
    %267 = arith.divf %265, %266 : vector<16x1xf32>
    %268 = vector.broadcast %260 : vector<16x1xf32> to vector<16x128xf32>
    %269 = arith.subf %252, %268 : vector<16x128xf32>
    %cst_114 = arith.constant 9.99999974E-6 : f32
    %270 = vector.broadcast %cst_114 : f32 to vector<16x1xf32>
    %271 = arith.addf %267, %270 : vector<16x1xf32>
    %272 = math.rsqrt %271 : vector<16x1xf32>
    %273 = vector.broadcast %272 : vector<16x1xf32> to vector<16x128xf32>
    %274 = arith.mulf %269, %273 : vector<16x128xf32>
    %275 = vector.broadcast %254 : vector<1x128xf32> to vector<16x128xf32>
    %276 = arith.mulf %274, %275 : vector<16x128xf32>
    %277 = vector.broadcast %256 : vector<1x128xf32> to vector<16x128xf32>
    %278 = arith.addf %276, %277 : vector<16x128xf32>
    %c1_i32 = arith.constant 1 : i32
    %279 = arith.cmpi eq, %arg1, %c1_i32 : i32
    %280 = arith.extui %279 : i1 to i32
    %c0_i32_115 = arith.constant 0 : i32
    %281 = arith.cmpi ne, %280, %c0_i32_115 : i32
    scf.if %281 {
      %c0_117 = arith.constant 0 : index
      %c0_118 = arith.constant 0 : index
      %285 = vector.load %arg26[%c0_117, %c0_118] : memref<1x128xf32, #tpu.memory_space<vmem>>, vector<1x128xf32>
      %c0_119 = arith.constant 0 : index
      %c0_120 = arith.constant 0 : index
      %286 = vector.load %arg27[%c0_119, %c0_120] : memref<1x128xf32, #tpu.memory_space<vmem>>, vector<1x128xf32>
      %cst_121 = arith.constant dense<0.000000e+00> : vector<16xf32>
      %287 = vector.multi_reduction <add>, %278, %cst_121 [1] : vector<16x128xf32> to vector<16xf32>
      %288 = vector.shape_cast %287 : vector<16xf32> to vector<16x1xf32>
      %cst_122 = arith.constant 1.280000e+02 : f32
      %289 = vector.broadcast %cst_122 : f32 to vector<16x1xf32>
      %290 = arith.divf %288, %289 : vector<16x1xf32>
      %291 = vector.broadcast %290 : vector<16x1xf32> to vector<16x128xf32>
      %292 = arith.subf %278, %291 : vector<16x128xf32>
      %293 = arith.mulf %292, %292 : vector<16x128xf32>
      %cst_123 = arith.constant dense<0.000000e+00> : vector<16xf32>
      %294 = vector.multi_reduction <add>, %293, %cst_123 [1] : vector<16x128xf32> to vector<16xf32>
      %295 = vector.shape_cast %294 : vector<16xf32> to vector<16x1xf32>
      %cst_124 = arith.constant 1.280000e+02 : f32
      %296 = vector.broadcast %cst_124 : f32 to vector<16x1xf32>
      %297 = arith.divf %295, %296 : vector<16x1xf32>
      %298 = vector.broadcast %290 : vector<16x1xf32> to vector<16x128xf32>
      %299 = arith.subf %278, %298 : vector<16x128xf32>
      %cst_125 = arith.constant 9.99999974E-6 : f32
      %300 = vector.broadcast %cst_125 : f32 to vector<16x1xf32>
      %301 = arith.addf %297, %300 : vector<16x1xf32>
      %302 = math.rsqrt %301 : vector<16x1xf32>
      %303 = vector.broadcast %302 : vector<16x1xf32> to vector<16x128xf32>
      %304 = arith.mulf %299, %303 : vector<16x128xf32>
      %305 = vector.broadcast %285 : vector<1x128xf32> to vector<16x128xf32>
      %306 = arith.mulf %304, %305 : vector<16x128xf32>
      %307 = vector.broadcast %286 : vector<1x128xf32> to vector<16x128xf32>
      %308 = arith.addf %306, %307 : vector<16x128xf32>
      %309 = arith.truncf %308 : vector<16x128xf32> to vector<16x128xbf16>
      %c0_126 = arith.constant 0 : index
      %c0_127 = arith.constant 0 : index
      %310 = vector.load %arg28[%c0_126, %c0_127] : memref<16x128xbf16, #tpu.memory_space<vmem>>, vector<16x128xbf16>
      tpu.vector_store %arg28[%c0_126, %c0_127], %309 {strides = array<i32>} : memref<16x128xbf16, #tpu.memory_space<vmem>>, vector<16x128xbf16>,
    } else {
    }
    %true = arith.constant true
    %282 = arith.xori %279, %true : i1
    %283 = arith.extui %282 : i1 to i32
    %c0_i32_116 = arith.constant 0 : i32
    %284 = arith.cmpi ne, %283, %c0_i32_116 : i32
    scf.if %284 {
      %285 = arith.truncf %278 : vector<16x128xf32> to vector<16x128xbf16>
      %c0_117 = arith.constant 0 : index
      %c0_118 = arith.constant 0 : index
      %286 = vector.load %arg28[%c0_117, %c0_118] : memref<16x128xbf16, #tpu.memory_space<vmem>>, vector<16x128xbf16>
      tpu.vector_store %arg28[%c0_117, %c0_118], %285 {strides = array<i32>} : memref<16x128xbf16, #tpu.memory_space<vmem>>, vector<16x128xbf16>,
    } else {
    }
    return
  }
  func.func @transform_0(%arg0: i32, %arg1: i32) -> (i32, i32) {
    %c0_i32 = arith.constant 0 : i32
    %c0_i32_0 = arith.constant 0 : i32
    return %arg0, %c0_i32 : i32, i32
  }
  func.func @transform_1(%arg0: i32, %arg1: i32) -> (i32, i32) {
    %c0_i32 = arith.constant 0 : i32
    %c0_i32_0 = arith.constant 0 : i32
    return %arg0, %c0_i32 : i32, i32
  }
  func.func @transform_2(%arg0: i32, %arg1: i32) -> (i32, i32, i32) {
    %c0_i32 = arith.constant 0 : i32
    %c0_i32_0 = arith.constant 0 : i32
    %c0_i32_1 = arith.constant 0 : i32
    return %arg0, %c0_i32, %c0_i32_0 : i32, i32, i32
  }
  func.func @transform_3(%arg0: i32, %arg1: i32) -> (i32, i32, i32) {
    %c0_i32 = arith.constant 0 : i32
    %c0_i32_0 = arith.constant 0 : i32
    %c0_i32_1 = arith.constant 0 : i32
    return %arg0, %c0_i32, %c0_i32_0 : i32, i32, i32
  }
  func.func @transform_4(%arg0: i32, %arg1: i32) -> (i32, i32, i32) {
    %c0_i32 = arith.constant 0 : i32
    %c0_i32_0 = arith.constant 0 : i32
    %c0_i32_1 = arith.constant 0 : i32
    return %arg1, %c0_i32, %c0_i32_0 : i32, i32, i32
  }
  func.func @transform_5(%arg0: i32, %arg1: i32) -> (i32, i32, i32) {
    %c0_i32 = arith.constant 0 : i32
    %c0_i32_0 = arith.constant 0 : i32
    %c0_i32_1 = arith.constant 0 : i32
    return %arg1, %c0_i32, %c0_i32_0 : i32, i32, i32
  }
  func.func @transform_6(%arg0: i32, %arg1: i32) -> (i32, i32, i32) {
    %c0_i32 = arith.constant 0 : i32
    %c0_i32_0 = arith.constant 0 : i32
    %c0_i32_1 = arith.constant 0 : i32
    return %arg1, %c0_i32, %c0_i32_0 : i32, i32, i32
  }
  func.func @transform_7(%arg0: i32, %arg1: i32) -> (i32, i32, i32) {
    %c0_i32 = arith.constant 0 : i32
    %c0_i32_0 = arith.constant 0 : i32
    %c0_i32_1 = arith.constant 0 : i32
    return %arg1, %c0_i32, %c0_i32_0 : i32, i32, i32
  }
  func.func @transform_8(%arg0: i32, %arg1: i32) -> (i32, i32, i32) {
    %c0_i32 = arith.constant 0 : i32
    %c0_i32_0 = arith.constant 0 : i32
    %c0_i32_1 = arith.constant 0 : i32
    return %arg1, %c0_i32, %c0_i32_0 : i32, i32, i32
  }
  func.func @transform_9(%arg0: i32, %arg1: i32) -> (i32, i32, i32) {
    %c0_i32 = arith.constant 0 : i32
    %c0_i32_0 = arith.constant 0 : i32
    %c0_i32_1 = arith.constant 0 : i32
    return %arg1, %c0_i32, %c0_i32_0 : i32, i32, i32
  }
  func.func @transform_10(%arg0: i32, %arg1: i32) -> (i32, i32, i32) {
    %c0_i32 = arith.constant 0 : i32
    %c0_i32_0 = arith.constant 0 : i32
    %c0_i32_1 = arith.constant 0 : i32
    return %arg1, %c0_i32, %c0_i32_0 : i32, i32, i32
  }
  func.func @transform_11(%arg0: i32, %arg1: i32) -> (i32, i32, i32) {
    %c0_i32 = arith.constant 0 : i32
    %c0_i32_0 = arith.constant 0 : i32
    %c0_i32_1 = arith.constant 0 : i32
    return %arg1, %c0_i32, %c0_i32_0 : i32, i32, i32
  }
  func.func @transform_12(%arg0: i32, %arg1: i32) -> (i32, i32, i32) {
    %c0_i32 = arith.constant 0 : i32
    %c0_i32_0 = arith.constant 0 : i32
    %c0_i32_1 = arith.constant 0 : i32
    return %arg1, %c0_i32, %c0_i32_0 : i32, i32, i32
  }
  func.func @transform_13(%arg0: i32, %arg1: i32) -> (i32, i32, i32) {
    %c0_i32 = arith.constant 0 : i32
    %c0_i32_0 = arith.constant 0 : i32
    %c0_i32_1 = arith.constant 0 : i32
    return %arg1, %c0_i32, %c0_i32_0 : i32, i32, i32
  }
  func.func @transform_14(%arg0: i32, %arg1: i32) -> (i32, i32, i32) {
    %c0_i32 = arith.constant 0 : i32
    %c0_i32_0 = arith.constant 0 : i32
    %c0_i32_1 = arith.constant 0 : i32
    return %arg1, %c0_i32, %c0_i32_0 : i32, i32, i32
  }
  func.func @transform_15(%arg0: i32, %arg1: i32) -> (i32, i32, i32) {
    %c0_i32 = arith.constant 0 : i32
    %c0_i32_0 = arith.constant 0 : i32
    %c0_i32_1 = arith.constant 0 : i32
    return %arg1, %c0_i32, %c0_i32_0 : i32, i32, i32
  }
  func.func @transform_16(%arg0: i32, %arg1: i32) -> (i32, i32, i32) {
    %c0_i32 = arith.constant 0 : i32
    %c0_i32_0 = arith.constant 0 : i32
    %c0_i32_1 = arith.constant 0 : i32
    return %arg1, %c0_i32, %c0_i32_0 : i32, i32, i32
  }
  func.func @transform_17(%arg0: i32, %arg1: i32) -> (i32, i32, i32) {
    %c0_i32 = arith.constant 0 : i32
    %c0_i32_0 = arith.constant 0 : i32
    %c0_i32_1 = arith.constant 0 : i32
    return %arg1, %c0_i32, %c0_i32_0 : i32, i32, i32
  }
  func.func @transform_18(%arg0: i32, %arg1: i32) -> (i32, i32, i32) {
    %c0_i32 = arith.constant 0 : i32
    %c0_i32_0 = arith.constant 0 : i32
    %c0_i32_1 = arith.constant 0 : i32
    return %arg1, %c0_i32, %c0_i32_0 : i32, i32, i32
  }
  func.func @transform_19(%arg0: i32, %arg1: i32) -> (i32, i32, i32) {
    %c0_i32 = arith.constant 0 : i32
    %c0_i32_0 = arith.constant 0 : i32
    %c0_i32_1 = arith.constant 0 : i32
    return %arg1, %c0_i32, %c0_i32_0 : i32, i32, i32
  }
  func.func @transform_20(%arg0: i32, %arg1: i32) -> (i32, i32, i32) {
    %c0_i32 = arith.constant 0 : i32
    %c0_i32_0 = arith.constant 0 : i32
    %c0_i32_1 = arith.constant 0 : i32
    return %arg1, %c0_i32, %c0_i32_0 : i32, i32, i32
  }
  func.func @transform_21(%arg0: i32, %arg1: i32) -> (i32, i32, i32) {
    %c0_i32 = arith.constant 0 : i32
    %c0_i32_0 = arith.constant 0 : i32
    %c0_i32_1 = arith.constant 0 : i32
    return %arg1, %c0_i32, %c0_i32_0 : i32, i32, i32
  }
  func.func @transform_22(%arg0: i32, %arg1: i32) -> (i32, i32, i32) {
    %c0_i32 = arith.constant 0 : i32
    %c0_i32_0 = arith.constant 0 : i32
    %c0_i32_1 = arith.constant 0 : i32
    return %arg1, %c0_i32, %c0_i32_0 : i32, i32, i32
  }
  func.func @transform_23(%arg0: i32, %arg1: i32) -> (i32, i32, i32) {
    %c0_i32 = arith.constant 0 : i32
    %c0_i32_0 = arith.constant 0 : i32
    %c0_i32_1 = arith.constant 0 : i32
    return %arg1, %c0_i32, %c0_i32_0 : i32, i32, i32
  }
  func.func @transform_24(%arg0: i32, %arg1: i32) -> (i32, i32) {
    %c0_i32 = arith.constant 0 : i32
    %c0_i32_0 = arith.constant 0 : i32
    %c0_i32_1 = arith.constant 0 : i32
    return %c0_i32, %c0_i32_0 : i32, i32
  }
  func.func @transform_25(%arg0: i32, %arg1: i32) -> (i32, i32) {
    %c0_i32 = arith.constant 0 : i32
    %c0_i32_0 = arith.constant 0 : i32
    %c0_i32_1 = arith.constant 0 : i32
    return %c0_i32, %c0_i32_0 : i32, i32
  }
  func.func @transform_26(%arg0: i32, %arg1: i32) -> (i32, i32) {
    %c0_i32 = arith.constant 0 : i32
    %c0_i32_0 = arith.constant 0 : i32
    return %arg0, %c0_i32 : i32, i32
  }
}

</mosaic_0001>

<llo_original>
// kernel: tpu_custom_call.1
$region0: #{tpu_custom_call.1}
  #allocation0 [shape = 'u32[]', space=smem, size = 0x4, offset = 0x4, fixed_abs, tag = 'smem constant byte address 0x4 - core index']
  #allocation1 [shape = 'u32[72,128]{1,0:T(1,128)}', space=vmem, size = 0x9000, scoped, tag = 'internal scratch']
  %s0 = inlined_call_operand.hbm [shape: bf16[16,128], index: 0, kind: input, shape index: {}]
  %s1 = inlined_call_operand.hbm [shape: bf16[32,128], index: 1, kind: input, shape index: {}]
  %s2 = inlined_call_operand.hbm [shape: f32[2,8,8], index: 2, kind: input, shape index: {}]
  %s3 = inlined_call_operand.hbm [shape: f32[2,1,16], index: 3, kind: input, shape index: {}]
  %s4 = inlined_call_operand.hbm [shape: bf16[2,128,384], index: 4, kind: input, shape index: {}]
  %s5 = inlined_call_operand.hbm [shape: f32[2,1,384], index: 5, kind: input, shape index: {}]
  %s6 = inlined_call_operand.hbm [shape: bf16[2,128,128], index: 6, kind: input, shape index: {}]
  %s7 = inlined_call_operand.hbm [shape: f32[2,1,128], index: 7, kind: input, shape index: {}]
  %s8 = inlined_call_operand.hbm [shape: f32[2,1,128], index: 8, kind: input, shape index: {}]
  %s9 = inlined_call_operand.hbm [shape: f32[2,1,128], index: 9, kind: input, shape index: {}]
  %s10 = inlined_call_operand.hbm [shape: bf16[2,128,128], index: 10, kind: input, shape index: {}]
  %s11 = inlined_call_operand.vmem [shape: f32[2,1,128], index: 11, kind: input, shape index: {}]
  %s12 = inlined_call_operand.hbm [shape: bf16[2,128,256], index: 12, kind: input, shape index: {}]
  %s13 = inlined_call_operand.vmem [shape: f32[2,1,256], index: 13, kind: input, shape index: {}]
  %s14 = inlined_call_operand.hbm [shape: bf16[2,128,128], index: 14, kind: input, shape index: {}]
  %s15 = inlined_call_operand.vmem [shape: f32[2,1,128], index: 15, kind: input, shape index: {}]
  %s16 = inlined_call_operand.vmem [shape: f32[2,1,128], index: 16, kind: input, shape index: {}]
  %s17 = inlined_call_operand.vmem [shape: f32[2,1,128], index: 17, kind: input, shape index: {}]
  %s18 = inlined_call_operand.hbm [shape: bf16[2,128,256], index: 18, kind: input, shape index: {}]
  %s19 = inlined_call_operand.vmem [shape: f32[2,1,256], index: 19, kind: input, shape index: {}]
  %s20 = inlined_call_operand.hbm [shape: bf16[2,256,128], index: 20, kind: input, shape index: {}]
  %s21 = inlined_call_operand.vmem [shape: f32[2,1,128], index: 21, kind: input, shape index: {}]
  %s22 = inlined_call_operand.vmem [shape: f32[2,1,128], index: 22, kind: input, shape index: {}]
  %s23 = inlined_call_operand.vmem [shape: f32[2,1,128], index: 23, kind: input, shape index: {}]
  %s24 = inlined_call_operand.vmem [shape: f32[1,128], index: 24, kind: input, shape index: {}]
  %s25 = inlined_call_operand.vmem [shape: f32[1,128], index: 25, kind: input, shape index: {}]
  %s26 = inlined_call_operand.hbm [shape: bf16[16,128], index: 26, kind: output, shape index: {}]
  %s27 = sld [smem:[#allocation0]]
  $region209: #{tpu_custom_call.1} parent=0
    _
  %s29 = ssub.s32 1, %s27
  %s30 = scalar_select 0, %s29, %s27
  $region1: #{tpu_custom_call.1} parent=0
    #allocation2 [shape = 'u8[4096]{0}', space=vmem, size = 0x1000, scoped, tag = 'input window, operand 0, single buffered']
    #allocation3 [shape = 's32[2]{0}', space=sflag, size = 0x8, scoped, tag = 'scoped memory for tpu_custom_call.1']
    #allocation4 [shape = 's32[2]{0}', space=sflag, size = 0x8, scoped, tag = 'scoped memory for tpu_custom_call.1']
    #allocation5 [shape = 'u8[8192]{0}', space=vmem, size = 0x2000, scoped, tag = 'input window, operand 1, single buffered']
    #allocation6 [shape = 's32[1]{0}', space=sflag, size = 0x4, scoped, tag = 'scoped memory for tpu_custom_call.1']
    #allocation7 [shape = 'u8[8192]{0}', space=vmem, size = 0x2000, scoped, tag = 'input window, operand 2, single buffered']
    #allocation8 [shape = 'u8[1024]{0}', space=vmem, size = 0x400, scoped, tag = 'input window, operand 3, single buffered']
    #allocation9 [shape = 's32[1]{0}', space=sflag, size = 0x4, scoped, tag = 'scoped memory for tpu_custom_call.1']
    #allocation10 [shape = 'u8[196608]{0}', space=vmem, size = 0x30000, scoped, tag = 'input window, operand 4']
    #allocation11 [shape = 'u8[3072]{0}', space=vmem, size = 0xc00, scoped, tag = 'input window, operand 5']
    #allocation12 [shape = 'u8[65536]{0}', space=vmem, size = 0x10000, scoped, tag = 'input window, operand 6']
    #allocation13 [shape = 'u8[1024]{0}', space=vmem, size = 0x400, scoped, tag = 'input window, operand 7']
    #allocation14 [shape = 'u8[1024]{0}', space=vmem, size = 0x400, scoped, tag = 'input window, operand 8']
    #allocation15 [shape = 'u8[1024]{0}', space=vmem, size = 0x400, scoped, tag = 'input window, operand 9']
    #allocation16 [shape = 'u8[65536]{0}', space=vmem, size = 0x10000, scoped, tag = 'input window, operand 10']
    #allocation17 [shape = 'u8[131072]{0}', space=vmem, size = 0x20000, scoped, tag = 'input window, operand 12']
    #allocation18 [shape = 'u8[65536]{0}', space=vmem, size = 0x10000, scoped, tag = 'input window, operand 14']
    #allocation19 [shape = 'u8[131072]{0}', space=vmem, size = 0x20000, scoped, tag = 'input window, operand 18']
    #allocation20 [shape = 'u8[131072]{0}', space=vmem, size = 0x20000, scoped, tag = 'input window, operand 20']
    #allocation21 [shape = 'u8[4096]{0}', space=vmem, size = 0x1000, scoped, tag = 'output window, operand 0, single buffered']
    %31 = vsyncpa [#allocation3], 0
    %32 = vsyncpa [#allocation6], 0
    %33 = vsyncpa [#allocation9], 0
    %34 = vsyncpa [#allocation4], 0
    loop: start=0, step=1, limit=4
    $region2: #{tpu_custom_call.1} parent=1 // loop_pre_header
      _
    $region3: #{tpu_custom_call.1} parent=1 // loop_header
      %s36 = sphi 0, %s40
      %p37 = scmp.ge.s32.totalorder %s36, 4
      %s43 = sphi 0, %s55
      %s44 = sphi 0, %s51
      %s45 = sphi 0, %s43
      %s46 = sphi 0, %s44
      %s47 = sphi 0, %s45
      %s48 = sphi 0, %s46
      %s58 = sphi 0, %s60
      %s61 = sphi 0, %s58
      %s62 = sphi 0, %s61
      %s78 = sphi 0, %s62
      %s84 = sphi 0, %s86
      %s87 = sphi 0, %s84
      %s88 = sphi 0, %s87
      %s104 = sphi 0, %s88
      %s110 = sphi 0, %s112
      %s113 = sphi 0, %s110
      %s114 = sphi 0, %s113
      %s130 = sphi 0, %s114
      %s136 = sphi 0, %s138
      %s139 = sphi 0, %s136
      %s140 = sphi 0, %s139
      %s156 = sphi 0, %s140
      %s162 = sphi 0, %s164
      %s165 = sphi 0, %s162
      %s166 = sphi 0, %s165
      %s182 = sphi 0, %s166
      %s188 = sphi 0, %s190
      %s191 = sphi 0, %s188
      %s192 = sphi 0, %s191
      %s208 = sphi 0, %s192
      %s214 = sphi 0, %s216
      %s217 = sphi 0, %s214
      %s218 = sphi 0, %s217
      %s234 = sphi 0, %s218
      %s240 = sphi 0, %s242
      %s243 = sphi 0, %s240
      %s244 = sphi 0, %s243
      %s260 = sphi 0, %s244
      %s266 = sphi 0, %s268
      %s269 = sphi 0, %s266
      %s270 = sphi 0, %s269
      %s286 = sphi 0, %s270
      %s292 = sphi 0, %s294
      %s295 = sphi 0, %s292
      %s296 = sphi 0, %s295
      %s312 = sphi 0, %s296
      %s318 = sphi 0, %s320
      %s321 = sphi 0, %s318
      %s322 = sphi 0, %s321
      %s338 = sphi 0, %s322
      %s344 = sphi 0, %s346
      %s347 = sphi 0, %s344
      %s348 = sphi 0, %s347
      %s364 = sphi 0, %s348
      %s370 = sphi 0, %s372
      %s373 = sphi 0, %s370
      %s374 = sphi 0, %s373
      %s390 = sphi 0, %s374
      %s396 = sphi 0, %s398
      %s399 = sphi 0, %s396
      %s400 = sphi 0, %s399
      %s416 = sphi 0, %s400
      %s422 = sphi 0, %s424
      %s425 = sphi 0, %s422
      %s426 = sphi 0, %s425
      %s442 = sphi 0, %s426
      %s448 = sphi 0, %s450
      %s451 = sphi 0, %s448
      %s452 = sphi 0, %s451
      %s468 = sphi 0, %s452
      %s474 = sphi 0, %s476
      %s477 = sphi 0, %s474
      %s478 = sphi 0, %s477
      %s494 = sphi 0, %s478
      %s500 = sphi 0, %s502
      %s503 = sphi 0, %s500
      %s504 = sphi 0, %s503
      %s520 = sphi 0, %s504
      %s526 = sphi 0, %s528
      %s529 = sphi 0, %s526
      %s530 = sphi 0, %s529
      %s546 = sphi 0, %s530
      %s552 = sphi 0, %s554
      %s555 = sphi 0, %s552
      %s556 = sphi 0, %s555
      %s572 = sphi 0, %s556
      %s578 = sphi 0, %s580
      %s581 = sphi 0, %s578
      %s582 = sphi 0, %s581
      %s598 = sphi 0, %s582
      %s604 = sphi 0, %s606
      %s607 = sphi 0, %s604
      %s608 = sphi 0, %s607
      %s624 = sphi 0, %s608
      %s630 = sphi 0, %s632
      %s633 = sphi 0, %s630
      %s634 = sphi 0, %s633
      %s650 = sphi 0, %s634
      %s656 = sphi 0, %s658
      %s659 = sphi 0, %s656
      %s660 = sphi 0, %s659
      %s676 = sphi 0, %s660
      %s680 = sphi 0, %s680
      %s682 = sphi 0, %s680
      %s683 = sphi 0, %s682
      %s697 = sphi 0, %s683
      %s701 = sphi 0, %s701
      %s703 = sphi 0, %s701
      %s704 = sphi 0, %s703
      %s718 = sphi 0, %s704
      %s724 = sphi 0, %s726
      %s727 = sphi 0, %s724
      %s728 = sphi 0, %s727
      %s744 = sphi 0, %s728
    $region4: #{tpu_custom_call.1} parent=1 // loop_header_branch
      %39 = sbr.rel (%p37) target = $region8
    $region5: #{tpu_custom_call.1} parent=1 // loop_body
      %s41 = ssub.s32 %s36, 1
      %s42 = ssub.s32 %s36, 2
      %s49 = sadd.s32 1, %s44
      %p50 = scmp.ge.s32.totalorder %s49, 2
      %s51 = scalar_select %p50, 0, %s49
      %s52 = sadd.s32 1, %s43
      %s53 = scalar_select %p50, %s52, %s43
      %p54 = scmp.ge.s32.totalorder %s53, 1
      %s55 = scalar_select %p54, 0, %s53
      %s56 = ssub.s32 %s43, %s55
      %p57 = scmp.eq.s32.totalorder %s56, 0
      %s59 = sadd.s32 %s58, 1
      %s60 = scalar_select %p57, %s58, %s59
      %p63 = pneg %p57
      %p64 = scmp.eq.s32.totalorder %s36, 1
      %p65 = por %p63, %p64
      %p66 = scmp.ne.s32.totalorder %s58, %s61
      %p67 = scmp.eq.s32.totalorder %s36, 0
      %p68 = por %p66, %p67
      %p69 = scmp.ne.s32.totalorder %s58, %s61
      %p70 = scmp.eq.s32.totalorder %s41, 1
      %p71 = por %p69, %p70
      %p72 = scmp.ne.s32.totalorder %s61, %s62
      %p73 = scmp.eq.s32.totalorder %s41, 0
      %p74 = por %p72, %p73
      %p75 = scmp.ne.s32.totalorder %s61, %s62
      %p76 = scmp.eq.s32.totalorder %s42, 1
      %p77 = por %p75, %p76
      %p79 = scmp.ne.s32.totalorder %s62, %s78
      %p80 = scmp.eq.s32.totalorder %s42, 0
      %p81 = por %p79, %p80
      %s82 = ssub.s32 %s43, %s55
      %p83 = scmp.eq.s32.totalorder %s82, 0
      %s85 = sadd.s32 %s84, 1
      %s86 = scalar_select %p83, %s84, %s85
      %p89 = pneg %p83
      %p90 = scmp.eq.s32.totalorder %s36, 1
      %p91 = por %p89, %p90
      %p92 = scmp.ne.s32.totalorder %s84, %s87
      %p93 = scmp.eq.s32.totalorder %s36, 0
      %p94 = por %p92, %p93
      %p95 = scmp.ne.s32.totalorder %s84, %s87
      %p96 = scmp.eq.s32.totalorder %s41, 1
      %p97 = por %p95, %p96
      %p98 = scmp.ne.s32.totalorder %s87, %s88
      %p99 = scmp.eq.s32.totalorder %s41, 0
      %p100 = por %p98, %p99
      %p101 = scmp.ne.s32.totalorder %s87, %s88
      %p102 = scmp.eq.s32.totalorder %s42, 1
      %p103 = por %p101, %p102
      %p105 = scmp.ne.s32.totalorder %s88, %s104
      %p106 = scmp.eq.s32.totalorder %s42, 0
      %p107 = por %p105, %p106
      %s108 = ssub.s32 %s43, %s55
      %p109 = scmp.eq.s32.totalorder %s108, 0
      %s111 = sadd.s32 %s110, 1
      %s112 = scalar_select %p109, %s110, %s111
      %p115 = pneg %p109
      %p116 = scmp.eq.s32.totalorder %s36, 1
      %p117 = por %p115, %p116
      %p118 = scmp.ne.s32.totalorder %s110, %s113
      %p119 = scmp.eq.s32.totalorder %s36, 0
      %p120 = por %p118, %p119
      %p121 = scmp.ne.s32.totalorder %s110, %s113
      %p122 = scmp.eq.s32.totalorder %s41, 1
      %p123 = por %p121, %p122
      %p124 = scmp.ne.s32.totalorder %s113, %s114
      %p125 = scmp.eq.s32.totalorder %s41, 0
      %p126 = por %p124, %p125
      %p127 = scmp.ne.s32.totalorder %s113, %s114
      %p128 = scmp.eq.s32.totalorder %s42, 1
      %p129 = por %p127, %p128
      %p131 = scmp.ne.s32.totalorder %s114, %s130
      %p132 = scmp.eq.s32.totalorder %s42, 0
      %p133 = por %p131, %p132
      %s134 = ssub.s32 %s43, %s55
      %p135 = scmp.eq.s32.totalorder %s134, 0
      %s137 = sadd.s32 %s136, 1
      %s138 = scalar_select %p135, %s136, %s137
      %p141 = pneg %p135
      %p142 = scmp.eq.s32.totalorder %s36, 1
      %p143 = por %p141, %p142
      %p144 = scmp.ne.s32.totalorder %s136, %s139
      %p145 = scmp.eq.s32.totalorder %s36, 0
      %p146 = por %p144, %p145
      %p147 = scmp.ne.s32.totalorder %s136, %s139
      %p148 = scmp.eq.s32.totalorder %s41, 1
      %p149 = por %p147, %p148
      %p150 = scmp.ne.s32.totalorder %s139, %s140
      %p151 = scmp.eq.s32.totalorder %s41, 0
      %p152 = por %p150, %p151
      %p153 = scmp.ne.s32.totalorder %s139, %s140
      %p154 = scmp.eq.s32.totalorder %s42, 1
      %p155 = por %p153, %p154
      %p157 = scmp.ne.s32.totalorder %s140, %s156
      %p158 = scmp.eq.s32.totalorder %s42, 0
      %p159 = por %p157, %p158
      %s160 = ssub.s32 %s44, %s51
      %p161 = scmp.eq.s32.totalorder %s160, 0
      %s163 = sadd.s32 %s162, 1
      %s164 = scalar_select %p161, %s162, %s163
      %p167 = pneg %p161
      %p168 = scmp.eq.s32.totalorder %s36, 1
      %p169 = por %p167, %p168
      %p170 = scmp.ne.s32.totalorder %s162, %s165
      %p171 = scmp.eq.s32.totalorder %s36, 0
      %p172 = por %p170, %p171
      %p173 = scmp.ne.s32.totalorder %s162, %s165
      %p174 = scmp.eq.s32.totalorder %s41, 1
      %p175 = por %p173, %p174
      %p176 = scmp.ne.s32.totalorder %s165, %s166
      %p177 = scmp.eq.s32.totalorder %s41, 0
      %p178 = por %p176, %p177
      %p179 = scmp.ne.s32.totalorder %s165, %s166
      %p180 = scmp.eq.s32.totalorder %s42, 1
      %p181 = por %p179, %p180
      %p183 = scmp.ne.s32.totalorder %s166, %s182
      %p184 = scmp.eq.s32.totalorder %s42, 0
      %p185 = por %p183, %p184
      %s186 = ssub.s32 %s44, %s51
      %p187 = scmp.eq.s32.totalorder %s186, 0
      %s189 = sadd.s32 %s188, 1
      %s190 = scalar_select %p187, %s188, %s189
      %p193 = pneg %p187
      %p194 = scmp.eq.s32.totalorder %s36, 1
      %p195 = por %p193, %p194
      %p196 = scmp.ne.s32.totalorder %s188, %s191
      %p197 = scmp.eq.s32.totalorder %s36, 0
      %p198 = por %p196, %p197
      %p199 = scmp.ne.s32.totalorder %s188, %s191
      %p200 = scmp.eq.s32.totalorder %s41, 1
      %p201 = por %p199, %p200
      %p202 = scmp.ne.s32.totalorder %s191, %s192
      %p203 = scmp.eq.s32.totalorder %s41, 0
      %p204 = por %p202, %p203
      %p205 = scmp.ne.s32.totalorder %s191, %s192
      %p206 = scmp.eq.s32.totalorder %s42, 1
      %p207 = por %p205, %p206
      %p209 = scmp.ne.s32.totalorder %s192, %s208
      %p210 = scmp.eq.s32.totalorder %s42, 0
      %p211 = por %p209, %p210
      %s212 = ssub.s32 %s44, %s51
      %p213 = scmp.eq.s32.totalorder %s212, 0
      %s215 = sadd.s32 %s214, 1
      %s216 = scalar_select %p213, %s214, %s215
      %p219 = pneg %p213
      %p220 = scmp.eq.s32.totalorder %s36, 1
      %p221 = por %p219, %p220
      %p222 = scmp.ne.s32.totalorder %s214, %s217
      %p223 = scmp.eq.s32.totalorder %s36, 0
      %p224 = por %p222, %p223
      %p225 = scmp.ne.s32.totalorder %s214, %s217
      %p226 = scmp.eq.s32.totalorder %s41, 1
      %p227 = por %p225, %p226
      %p228 = scmp.ne.s32.totalorder %s217, %s218
      %p229 = scmp.eq.s32.totalorder %s41, 0
      %p230 = por %p228, %p229
      %p231 = scmp.ne.s32.totalorder %s217, %s218
      %p232 = scmp.eq.s32.totalorder %s42, 1
      %p233 = por %p231, %p232
      %p235 = scmp.ne.s32.totalorder %s218, %s234
      %p236 = scmp.eq.s32.totalorder %s42, 0
      %p237 = por %p235, %p236
      %s238 = ssub.s32 %s44, %s51
      %p239 = scmp.eq.s32.totalorder %s238, 0
      %s241 = sadd.s32 %s240, 1
      %s242 = scalar_select %p239, %s240, %s241
      %p245 = pneg %p239
      %p246 = scmp.eq.s32.totalorder %s36, 1
      %p247 = por %p245, %p246
      %p248 = scmp.ne.s32.totalorder %s240, %s243
      %p249 = scmp.eq.s32.totalorder %s36, 0
      %p250 = por %p248, %p249
      %p251 = scmp.ne.s32.totalorder %s240, %s243
      %p252 = scmp.eq.s32.totalorder %s41, 1
      %p253 = por %p251, %p252
      %p254 = scmp.ne.s32.totalorder %s243, %s244
      %p255 = scmp.eq.s32.totalorder %s41, 0
      %p256 = por %p254, %p255
      %p257 = scmp.ne.s32.totalorder %s243, %s244
      %p258 = scmp.eq.s32.totalorder %s42, 1
      %p259 = por %p257, %p258
      %p261 = scmp.ne.s32.totalorder %s244, %s260
      %p262 = scmp.eq.s32.totalorder %s42, 0
      %p263 = por %p261, %p262
      %s264 = ssub.s32 %s44, %s51
      %p265 = scmp.eq.s32.totalorder %s264, 0
      %s267 = sadd.s32 %s266, 1
      %s268 = scalar_select %p265, %s266, %s267
      %p271 = pneg %p265
      %p272 = scmp.eq.s32.totalorder %s36, 1
      %p273 = por %p271, %p272
      %p274 = scmp.ne.s32.totalorder %s266, %s269
      %p275 = scmp.eq.s32.totalorder %s36, 0
      %p276 = por %p274, %p275
      %p277 = scmp.ne.s32.totalorder %s266, %s269
      %p278 = scmp.eq.s32.totalorder %s41, 1
      %p279 = por %p277, %p278
      %p280 = scmp.ne.s32.totalorder %s269, %s270
      %p281 = scmp.eq.s32.totalorder %s41, 0
      %p282 = por %p280, %p281
      %p283 = scmp.ne.s32.totalorder %s269, %s270
      %p284 = scmp.eq.s32.totalorder %s42, 1
      %p285 = por %p283, %p284
      %p287 = scmp.ne.s32.totalorder %s270, %s286
      %p288 = scmp.eq.s32.totalorder %s42, 0
      %p289 = por %p287, %p288
      %s290 = ssub.s32 %s44, %s51
      %p291 = scmp.eq.s32.totalorder %s290, 0
      %s293 = sadd.s32 %s292, 1
      %s294 = scalar_select %p291, %s292, %s293
      %p297 = pneg %p291
      %p298 = scmp.eq.s32.totalorder %s36, 1
      %p299 = por %p297, %p298
      %p300 = scmp.ne.s32.totalorder %s292, %s295
      %p301 = scmp.eq.s32.totalorder %s36, 0
      %p302 = por %p300, %p301
      %p303 = scmp.ne.s32.totalorder %s292, %s295
      %p304 = scmp.eq.s32.totalorder %s41, 1
      %p305 = por %p303, %p304
      %p306 = scmp.ne.s32.totalorder %s295, %s296
      %p307 = scmp.eq.s32.totalorder %s41, 0
      %p308 = por %p306, %p307
      %p309 = scmp.ne.s32.totalorder %s295, %s296
      %p310 = scmp.eq.s32.totalorder %s42, 1
      %p311 = por %p309, %p310
      %p313 = scmp.ne.s32.totalorder %s296, %s312
      %p314 = scmp.eq.s32.totalorder %s42, 0
      %p315 = por %p313, %p314
      %s316 = ssub.s32 %s44, %s51
      %p317 = scmp.eq.s32.totalorder %s316, 0
      %s319 = sadd.s32 %s318, 1
      %s320 = scalar_select %p317, %s318, %s319
      %p323 = pneg %p317
      %p324 = scmp.eq.s32.totalorder %s36, 1
      %p325 = por %p323, %p324
      %p326 = scmp.ne.s32.totalorder %s318, %s321
      %p327 = scmp.eq.s32.totalorder %s36, 0
      %p328 = por %p326, %p327
      %p329 = scmp.ne.s32.totalorder %s318, %s321
      %p330 = scmp.eq.s32.totalorder %s41, 1
      %p331 = por %p329, %p330
      %p332 = scmp.ne.s32.totalorder %s321, %s322
      %p333 = scmp.eq.s32.totalorder %s41, 0
      %p334 = por %p332, %p333
      %p335 = scmp.ne.s32.totalorder %s321, %s322
      %p336 = scmp.eq.s32.totalorder %s42, 1
      %p337 = por %p335, %p336
      %p339 = scmp.ne.s32.totalorder %s322, %s338
      %p340 = scmp.eq.s32.totalorder %s42, 0
      %p341 = por %p339, %p340
      %s342 = ssub.s32 %s44, %s51
      %p343 = scmp.eq.s32.totalorder %s342, 0
      %s345 = sadd.s32 %s344, 1
      %s346 = scalar_select %p343, %s344, %s345
      %p349 = pneg %p343
      %p350 = scmp.eq.s32.totalorder %s36, 1
      %p351 = por %p349, %p350
      %p352 = scmp.ne.s32.totalorder %s344, %s347
      %p353 = scmp.eq.s32.totalorder %s36, 0
      %p354 = por %p352, %p353
      %p355 = scmp.ne.s32.totalorder %s344, %s347
      %p356 = scmp.eq.s32.totalorder %s41, 1
      %p357 = por %p355, %p356
      %p358 = scmp.ne.s32.totalorder %s347, %s348
      %p359 = scmp.eq.s32.totalorder %s41, 0
      %p360 = por %p358, %p359
      %p361 = scmp.ne.s32.totalorder %s347, %s348
      %p362 = scmp.eq.s32.totalorder %s42, 1
      %p363 = por %p361, %p362
      %p365 = scmp.ne.s32.totalorder %s348, %s364
      %p366 = scmp.eq.s32.totalorder %s42, 0
      %p367 = por %p365, %p366
      %s368 = ssub.s32 %s44, %s51
      %p369 = scmp.eq.s32.totalorder %s368, 0
      %s371 = sadd.s32 %s370, 1
      %s372 = scalar_select %p369, %s370, %s371
      %p375 = pneg %p369
      %p376 = scmp.eq.s32.totalorder %s36, 1
      %p377 = por %p375, %p376
      %p378 = scmp.ne.s32.totalorder %s370, %s373
      %p379 = scmp.eq.s32.totalorder %s36, 0
      %p380 = por %p378, %p379
      %p381 = scmp.ne.s32.totalorder %s370, %s373
      %p382 = scmp.eq.s32.totalorder %s41, 1
      %p383 = por %p381, %p382
      %p384 = scmp.ne.s32.totalorder %s373, %s374
      %p385 = scmp.eq.s32.totalorder %s41, 0
      %p386 = por %p384, %p385
      %p387 = scmp.ne.s32.totalorder %s373, %s374
      %p388 = scmp.eq.s32.totalorder %s42, 1
      %p389 = por %p387, %p388
      %p391 = scmp.ne.s32.totalorder %s374, %s390
      %p392 = scmp.eq.s32.totalorder %s42, 0
      %p393 = por %p391, %p392
      %s394 = ssub.s32 %s44, %s51
      %p395 = scmp.eq.s32.totalorder %s394, 0
      %s397 = sadd.s32 %s396, 1
      %s398 = scalar_select %p395, %s396, %s397
      %p401 = pneg %p395
      %p402 = scmp.eq.s32.totalorder %s36, 1
      %p403 = por %p401, %p402
      %p404 = scmp.ne.s32.totalorder %s396, %s399
      %p405 = scmp.eq.s32.totalorder %s36, 0
      %p406 = por %p404, %p405
      %p407 = scmp.ne.s32.totalorder %s396, %s399
      %p408 = scmp.eq.s32.totalorder %s41, 1
      %p409 = por %p407, %p408
      %p410 = scmp.ne.s32.totalorder %s399, %s400
      %p411 = scmp.eq.s32.totalorder %s41, 0
      %p412 = por %p410, %p411
      %p413 = scmp.ne.s32.totalorder %s399, %s400
      %p414 = scmp.eq.s32.totalorder %s42, 1
      %p415 = por %p413, %p414
      %p417 = scmp.ne.s32.totalorder %s400, %s416
      %p418 = scmp.eq.s32.totalorder %s42, 0
      %p419 = por %p417, %p418
      %s420 = ssub.s32 %s44, %s51
      %p421 = scmp.eq.s32.totalorder %s420, 0
      %s423 = sadd.s32 %s422, 1
      %s424 = scalar_select %p421, %s422, %s423
      %p427 = pneg %p421
      %p428 = scmp.eq.s32.totalorder %s36, 1
      %p429 = por %p427, %p428
      %p430 = scmp.ne.s32.totalorder %s422, %s425
      %p431 = scmp.eq.s32.totalorder %s36, 0
      %p432 = por %p430, %p431
      %p433 = scmp.ne.s32.totalorder %s422, %s425
      %p434 = scmp.eq.s32.totalorder %s41, 1
      %p435 = por %p433, %p434
      %p436 = scmp.ne.s32.totalorder %s425, %s426
      %p437 = scmp.eq.s32.totalorder %s41, 0
      %p438 = por %p436, %p437
      %p439 = scmp.ne.s32.totalorder %s425, %s426
      %p440 = scmp.eq.s32.totalorder %s42, 1
      %p441 = por %p439, %p440
      %p443 = scmp.ne.s32.totalorder %s426, %s442
      %p444 = scmp.eq.s32.totalorder %s42, 0
      %p445 = por %p443, %p444
      %s446 = ssub.s32 %s44, %s51
      %p447 = scmp.eq.s32.totalorder %s446, 0
      %s449 = sadd.s32 %s448, 1
      %s450 = scalar_select %p447, %s448, %s449
      %p453 = pneg %p447
      %p454 = scmp.eq.s32.totalorder %s36, 1
      %p455 = por %p453, %p454
      %p456 = scmp.ne.s32.totalorder %s448, %s451
      %p457 = scmp.eq.s32.totalorder %s36, 0
      %p458 = por %p456, %p457
      %p459 = scmp.ne.s32.totalorder %s448, %s451
      %p460 = scmp.eq.s32.totalorder %s41, 1
      %p461 = por %p459, %p460
      %p462 = scmp.ne.s32.totalorder %s451, %s452
      %p463 = scmp.eq.s32.totalorder %s41, 0
      %p464 = por %p462, %p463
      %p465 = scmp.ne.s32.totalorder %s451, %s452
      %p466 = scmp.eq.s32.totalorder %s42, 1
      %p467 = por %p465, %p466
      %p469 = scmp.ne.s32.totalorder %s452, %s468
      %p470 = scmp.eq.s32.totalorder %s42, 0
      %p471 = por %p469, %p470
      %s472 = ssub.s32 %s44, %s51
      %p473 = scmp.eq.s32.totalorder %s472, 0
      %s475 = sadd.s32 %s474, 1
      %s476 = scalar_select %p473, %s474, %s475
      %p479 = pneg %p473
      %p480 = scmp.eq.s32.totalorder %s36, 1
      %p481 = por %p479, %p480
      %p482 = scmp.ne.s32.totalorder %s474, %s477
      %p483 = scmp.eq.s32.totalorder %s36, 0
      %p484 = por %p482, %p483
      %p485 = scmp.ne.s32.totalorder %s474, %s477
      %p486 = scmp.eq.s32.totalorder %s41, 1
      %p487 = por %p485, %p486
      %p488 = scmp.ne.s32.totalorder %s477, %s478
      %p489 = scmp.eq.s32.totalorder %s41, 0
      %p490 = por %p488, %p489
      %p491 = scmp.ne.s32.totalorder %s477, %s478
      %p492 = scmp.eq.s32.totalorder %s42, 1
      %p493 = por %p491, %p492
      %p495 = scmp.ne.s32.totalorder %s478, %s494
      %p496 = scmp.eq.s32.totalorder %s42, 0
      %p497 = por %p495, %p496
      %s498 = ssub.s32 %s44, %s51
      %p499 = scmp.eq.s32.totalorder %s498, 0
      %s501 = sadd.s32 %s500, 1
      %s502 = scalar_select %p499, %s500, %s501
      %p505 = pneg %p499
      %p506 = scmp.eq.s32.totalorder %s36, 1
      %p507 = por %p505, %p506
      %p508 = scmp.ne.s32.totalorder %s500, %s503
      %p509 = scmp.eq.s32.totalorder %s36, 0
      %p510 = por %p508, %p509
      %p511 = scmp.ne.s32.totalorder %s500, %s503
      %p512 = scmp.eq.s32.totalorder %s41, 1
      %p513 = por %p511, %p512
      %p514 = scmp.ne.s32.totalorder %s503, %s504
      %p515 = scmp.eq.s32.totalorder %s41, 0
      %p516 = por %p514, %p515
      %p517 = scmp.ne.s32.totalorder %s503, %s504
      %p518 = scmp.eq.s32.totalorder %s42, 1
      %p519 = por %p517, %p518
      %p521 = scmp.ne.s32.totalorder %s504, %s520
      %p522 = scmp.eq.s32.totalorder %s42, 0
      %p523 = por %p521, %p522
      %s524 = ssub.s32 %s44, %s51
      %p525 = scmp.eq.s32.totalorder %s524, 0
      %s527 = sadd.s32 %s526, 1
      %s528 = scalar_select %p525, %s526, %s527
      %p531 = pneg %p525
      %p532 = scmp.eq.s32.totalorder %s36, 1
      %p533 = por %p531, %p532
      %p534 = scmp.ne.s32.totalorder %s526, %s529
      %p535 = scmp.eq.s32.totalorder %s36, 0
      %p536 = por %p534, %p535
      %p537 = scmp.ne.s32.totalorder %s526, %s529
      %p538 = scmp.eq.s32.totalorder %s41, 1
      %p539 = por %p537, %p538
      %p540 = scmp.ne.s32.totalorder %s529, %s530
      %p541 = scmp.eq.s32.totalorder %s41, 0
      %p542 = por %p540, %p541
      %p543 = scmp.ne.s32.totalorder %s529, %s530
      %p544 = scmp.eq.s32.totalorder %s42, 1
      %p545 = por %p543, %p544
      %p547 = scmp.ne.s32.totalorder %s530, %s546
      %p548 = scmp.eq.s32.totalorder %s42, 0
      %p549 = por %p547, %p548
      %s550 = ssub.s32 %s44, %s51
      %p551 = scmp.eq.s32.totalorder %s550, 0
      %s553 = sadd.s32 %s552, 1
      %s554 = scalar_select %p551, %s552, %s553
      %p557 = pneg %p551
      %p558 = scmp.eq.s32.totalorder %s36, 1
      %p559 = por %p557, %p558
      %p560 = scmp.ne.s32.totalorder %s552, %s555
      %p561 = scmp.eq.s32.totalorder %s36, 0
      %p562 = por %p560, %p561
      %p563 = scmp.ne.s32.totalorder %s552, %s555
      %p564 = scmp.eq.s32.totalorder %s41, 1
      %p565 = por %p563, %p564
      %p566 = scmp.ne.s32.totalorder %s555, %s556
      %p567 = scmp.eq.s32.totalorder %s41, 0
      %p568 = por %p566, %p567
      %p569 = scmp.ne.s32.totalorder %s555, %s556
      %p570 = scmp.eq.s32.totalorder %s42, 1
      %p571 = por %p569, %p570
      %p573 = scmp.ne.s32.totalorder %s556, %s572
      %p574 = scmp.eq.s32.totalorder %s42, 0
      %p575 = por %p573, %p574
      %s576 = ssub.s32 %s44, %s51
      %p577 = scmp.eq.s32.totalorder %s576, 0
      %s579 = sadd.s32 %s578, 1
      %s580 = scalar_select %p577, %s578, %s579
      %p583 = pneg %p577
      %p584 = scmp.eq.s32.totalorder %s36, 1
      %p585 = por %p583, %p584
      %p586 = scmp.ne.s32.totalorder %s578, %s581
      %p587 = scmp.eq.s32.totalorder %s36, 0
      %p588 = por %p586, %p587
      %p589 = scmp.ne.s32.totalorder %s578, %s581
      %p590 = scmp.eq.s32.totalorder %s41, 1
      %p591 = por %p589, %p590
      %p592 = scmp.ne.s32.totalorder %s581, %s582
      %p593 = scmp.eq.s32.totalorder %s41, 0
      %p594 = por %p592, %p593
      %p595 = scmp.ne.s32.totalorder %s581, %s582
      %p596 = scmp.eq.s32.totalorder %s42, 1
      %p597 = por %p595, %p596
      %p599 = scmp.ne.s32.totalorder %s582, %s598
      %p600 = scmp.eq.s32.totalorder %s42, 0
      %p601 = por %p599, %p600
      %s602 = ssub.s32 %s44, %s51
      %p603 = scmp.eq.s32.totalorder %s602, 0
      %s605 = sadd.s32 %s604, 1
      %s606 = scalar_select %p603, %s604, %s605
      %p609 = pneg %p603
      %p610 = scmp.eq.s32.totalorder %s36, 1
      %p611 = por %p609, %p610
      %p612 = scmp.ne.s32.totalorder %s604, %s607
      %p613 = scmp.eq.s32.totalorder %s36, 0
      %p614 = por %p612, %p613
      %p615 = scmp.ne.s32.totalorder %s604, %s607
      %p616 = scmp.eq.s32.totalorder %s41, 1
      %p617 = por %p615, %p616
      %p618 = scmp.ne.s32.totalorder %s607, %s608
      %p619 = scmp.eq.s32.totalorder %s41, 0
      %p620 = por %p618, %p619
      %p621 = scmp.ne.s32.totalorder %s607, %s608
      %p622 = scmp.eq.s32.totalorder %s42, 1
      %p623 = por %p621, %p622
      %p625 = scmp.ne.s32.totalorder %s608, %s624
      %p626 = scmp.eq.s32.totalorder %s42, 0
      %p627 = por %p625, %p626
      %s628 = ssub.s32 %s44, %s51
      %p629 = scmp.eq.s32.totalorder %s628, 0
      %s631 = sadd.s32 %s630, 1
      %s632 = scalar_select %p629, %s630, %s631
      %p635 = pneg %p629
      %p636 = scmp.eq.s32.totalorder %s36, 1
      %p637 = por %p635, %p636
      %p638 = scmp.ne.s32.totalorder %s630, %s633
      %p639 = scmp.eq.s32.totalorder %s36, 0
      %p640 = por %p638, %p639
      %p641 = scmp.ne.s32.totalorder %s630, %s633
      %p642 = scmp.eq.s32.totalorder %s41, 1
      %p643 = por %p641, %p642
      %p644 = scmp.ne.s32.totalorder %s633, %s634
      %p645 = scmp.eq.s32.totalorder %s41, 0
      %p646 = por %p644, %p645
      %p647 = scmp.ne.s32.totalorder %s633, %s634
      %p648 = scmp.eq.s32.totalorder %s42, 1
      %p649 = por %p647, %p648
      %p651 = scmp.ne.s32.totalorder %s634, %s650
      %p652 = scmp.eq.s32.totalorder %s42, 0
      %p653 = por %p651, %p652
      %s654 = ssub.s32 %s44, %s51
      %p655 = scmp.eq.s32.totalorder %s654, 0
      %s657 = sadd.s32 %s656, 1
      %s658 = scalar_select %p655, %s656, %s657
      %p661 = pneg %p655
      %p662 = scmp.eq.s32.totalorder %s36, 1
      %p663 = por %p661, %p662
      %p664 = scmp.ne.s32.totalorder %s656, %s659
      %p665 = scmp.eq.s32.totalorder %s36, 0
      %p666 = por %p664, %p665
      %p667 = scmp.ne.s32.totalorder %s656, %s659
      %p668 = scmp.eq.s32.totalorder %s41, 1
      %p669 = por %p667, %p668
      %p670 = scmp.ne.s32.totalorder %s659, %s660
      %p671 = scmp.eq.s32.totalorder %s41, 0
      %p672 = por %p670, %p671
      %p673 = scmp.ne.s32.totalorder %s659, %s660
      %p674 = scmp.eq.s32.totalorder %s42, 1
      %p675 = por %p673, %p674
      %p677 = scmp.ne.s32.totalorder %s660, %s676
      %p678 = scmp.eq.s32.totalorder %s42, 0
      %p679 = por %p677, %p678
      %s681 = sadd.s32 %s680, 1
      %p684 = scmp.eq.s32.totalorder %s36, 1
      %p685 = scmp.ne.s32.totalorder %s680, %s682
      %p686 = scmp.eq.s32.totalorder %s36, 0
      %p687 = por %p685, %p686
      %p688 = scmp.ne.s32.totalorder %s680, %s682
      %p689 = scmp.eq.s32.totalorder %s41, 1
      %p690 = por %p688, %p689
      %p691 = scmp.ne.s32.totalorder %s682, %s683
      %p692 = scmp.eq.s32.totalorder %s41, 0
      %p693 = por %p691, %p692
      %p694 = scmp.ne.s32.totalorder %s682, %s683
      %p695 = scmp.eq.s32.totalorder %s42, 1
      %p696 = por %p694, %p695
      %p698 = scmp.ne.s32.totalorder %s683, %s697
      %p699 = scmp.eq.s32.totalorder %s42, 0
      %p700 = por %p698, %p699
      %s702 = sadd.s32 %s701, 1
      %p705 = scmp.eq.s32.totalorder %s36, 1
      %p706 = scmp.ne.s32.totalorder %s701, %s703
      %p707 = scmp.eq.s32.totalorder %s36, 0
      %p708 = por %p706, %p707
      %p709 = scmp.ne.s32.totalorder %s701, %s703
      %p710 = scmp.eq.s32.totalorder %s41, 1
      %p711 = por %p709, %p710
      %p712 = scmp.ne.s32.totalorder %s703, %s704
      %p713 = scmp.eq.s32.totalorder %s41, 0
      %p714 = por %p712, %p713
      %p715 = scmp.ne.s32.totalorder %s703, %s704
      %p716 = scmp.eq.s32.totalorder %s42, 1
      %p717 = por %p715, %p716
      %p719 = scmp.ne.s32.totalorder %s704, %s718
      %p720 = scmp.eq.s32.totalorder %s42, 0
      %p721 = por %p719, %p720
      %s722 = ssub.s32 %s43, %s55
      %p723 = scmp.eq.s32.totalorder %s722, 0
      %s725 = sadd.s32 %s724, 1
      %s726 = scalar_select %p723, %s724, %s725
      %p729 = pneg %p723
      %p730 = scmp.eq.s32.totalorder %s36, 1
      %p731 = por %p729, %p730
      %p732 = scmp.ne.s32.totalorder %s724, %s727
      %p733 = scmp.eq.s32.totalorder %s36, 0
      %p734 = por %p732, %p733
      %p735 = scmp.ne.s32.totalorder %s724, %s727
      %p736 = scmp.eq.s32.totalorder %s41, 1
      %p737 = por %p735, %p736
      %p738 = scmp.ne.s32.totalorder %s727, %s728
      %p739 = scmp.eq.s32.totalorder %s41, 0
      %p740 = por %p738, %p739
      %p741 = scmp.ne.s32.totalorder %s727, %s728
      %p742 = scmp.eq.s32.totalorder %s42, 1
      %p743 = por %p741, %p742
      %p745 = scmp.ne.s32.totalorder %s728, %s744
      %p746 = scmp.eq.s32.totalorder %s42, 0
      %p747 = por %p745, %p746
      %p748 = scmp.le.s32.totalorder 1, %s36
      %p749 = scmp.lt.s32.totalorder %s36, 3
      %p750 = pnand %p748, %p749
      %p751 = pneg %p750
      // Predicated region
      $region9: #{tpu_custom_call.1} parent=5 // pred_check
        _
      $region10: #{tpu_custom_call.1} parent=5 // pred_check_branch
        %753 = sbr.rel (%p750) target = $region12
      $region11: #{tpu_custom_call.1} parent=5 // pred_region
        %s754 = ssub.s32 %s36, 1
        // Predicated region
        $region13: #{tpu_custom_call.1} parent=11 // pred_check
          %p755 = pneg %p74
        $region14: #{tpu_custom_call.1} parent=11 // pred_check_branch
          %757 = sbr.rel (%p755) target = $region16
        $region15: #{tpu_custom_call.1} parent=11 // pred_region
          %s758 = smul.u32 2, %s45
          %760 = vsyncadd [#allocation3], 0
          %s761 = smul.addr %s758, 4
          %s762 = scalar_lea.hbm %s0, %s761
          %s763 = sshll.u32 %s762, 4
          %s764 = int_to_ptr.hbm [resolvable:$true] %s763
          %s765 = sshll.u32 [#allocation2], 4
          %s766 = int_to_ptr.vmem [resolvable:$true] %s765
          %771 = dma.hbm_to_vmem [thread:$0]  %s764, 128, %s766, [#allocation3], 64, 64, 4
        $region16: #{tpu_custom_call.1} parent=11 // pred_fallthru
          _
        // Predicated region
        $region17: #{tpu_custom_call.1} parent=11 // pred_check
          %p772 = pneg %p100
        $region18: #{tpu_custom_call.1} parent=11 // pred_check_branch
          %774 = sbr.rel (%p772) target = $region20
        $region19: #{tpu_custom_call.1} parent=11 // pred_region
          %s775 = smul.u32 4, %s45
          %777 = vsyncadd [#allocation6], 0
          %s778 = smul.addr %s775, 4
          %s779 = scalar_lea.hbm %s1, %s778
          %s780 = sshll.u32 %s779, 4
          %s781 = int_to_ptr.hbm [resolvable:$true] %s780
          %s782 = sshll.u32 [#allocation5], 4
          %s783 = int_to_ptr.vmem [resolvable:$true] %s782
          %788 = dma.hbm_to_vmem [thread:$0]  %s781, 256, %s783, [#allocation6], 64, 64, 4
        $region20: #{tpu_custom_call.1} parent=11 // pred_fallthru
          _
        // Predicated region
        $region21: #{tpu_custom_call.1} parent=11 // pred_check
          %p789 = pneg %p126
        $region22: #{tpu_custom_call.1} parent=11 // pred_check_branch
          %791 = sbr.rel (%p789) target = $region24
        $region23: #{tpu_custom_call.1} parent=11 // pred_region
          %s792 = smul.u32 2, %s45
          %794 = vsyncadd [#allocation6], 0
          %s795 = smul.addr %s792, 8
          %s796 = scalar_lea.hbm %s2, %s795
          %s797 = sshll.u32 %s796, 4
          %s798 = int_to_ptr.hbm [resolvable:$true] %s797
          %s799 = sshll.u32 [#allocation7], 4
          %s800 = int_to_ptr.vmem [resolvable:$true] %s799
          %805 = dma.hbm_to_vmem [thread:$0]  %s798, 256, %s800, [#allocation6], 128, 128, 8
        $region24: #{tpu_custom_call.1} parent=11 // pred_fallthru
          _
        // Predicated region
        $region25: #{tpu_custom_call.1} parent=11 // pred_check
          %p806 = pneg %p152
        $region26: #{tpu_custom_call.1} parent=11 // pred_check_branch
          %808 = sbr.rel (%p806) target = $region28
        $region27: #{tpu_custom_call.1} parent=11 // pred_region
          %s809 = smul.u32 2, %s45
          %811 = vsyncadd [#allocation9], 0
          %s812 = scalar_lea.hbm %s3, %s809
          %s813 = sshll.u32 %s812, 4
          %s814 = int_to_ptr.hbm [resolvable:$true] %s813
          %s815 = sshll.u32 [#allocation8], 4
          %s816 = int_to_ptr.vmem [resolvable:$true] %s815
          %821 = dma.hbm_to_vmem [thread:$0]  %s814, 32, %s816, [#allocation9], 16, 16, 1
        $region28: #{tpu_custom_call.1} parent=11 // pred_fallthru
          _
        // Predicated region
        $region29: #{tpu_custom_call.1} parent=11 // pred_check
          %p822 = pneg %p693
        $region30: #{tpu_custom_call.1} parent=11 // pred_check_branch
          %824 = sbr.rel (%p822) target = $region32
        $region31: #{tpu_custom_call.1} parent=11 // pred_region
          _
        $region32: #{tpu_custom_call.1} parent=11 // pred_fallthru
          _
        // Predicated region
        $region33: #{tpu_custom_call.1} parent=11 // pred_check
          %p825 = pneg %p714
        $region34: #{tpu_custom_call.1} parent=11 // pred_check_branch
          %827 = sbr.rel (%p825) target = $region36
        $region35: #{tpu_custom_call.1} parent=11 // pred_region
          _
        $region36: #{tpu_custom_call.1} parent=11 // pred_fallthru
          _
      $region12: #{tpu_custom_call.1} parent=5 // pred_fallthru
        _
      %p828 = scmp.lt.s32.totalorder %s36, 2
      // Predicated region
      $region37: #{tpu_custom_call.1} parent=5 // pred_check
        %p829 = pneg %p828
      $region38: #{tpu_custom_call.1} parent=5 // pred_check_branch
        %831 = sbr.rel (%p829) target = $region40
      $region39: #{tpu_custom_call.1} parent=5 // pred_region
        // Predicated region
        $region41: #{tpu_custom_call.1} parent=39 // pred_check
          %p832 = pneg %p172
        $region42: #{tpu_custom_call.1} parent=39 // pred_check_branch
          %834 = sbr.rel (%p832) target = $region44
        $region43: #{tpu_custom_call.1} parent=39 // pred_region
          %s835 = sand.u32 %s36, 1
          %s836 = scalar_lea.sflag [#allocation3], %s835
          %s837 = sand.u32 %s162, 1
          %s838 = smul.addr %s837, 192
          %s839 = scalar_lea.vmem [#allocation10], %s838
          %841 = vsyncadd %s836, 0
          %s842 = smul.addr %s44, 48
          %s843 = smul.addr %s842, 4
          %s844 = scalar_lea.hbm %s4, %s843
          %s845 = sshll.u32 %s844, 4
          %s846 = int_to_ptr.hbm [resolvable:$true] %s845
          %s847 = sshll.u32 %s839, 4
          %s848 = int_to_ptr.vmem [resolvable:$true] %s847
          %853 = dma.hbm_to_vmem [thread:$0]  %s846, 3072, %s848, %s836, 192, 192, 12
        $region44: #{tpu_custom_call.1} parent=39 // pred_fallthru
          _
        // Predicated region
        $region45: #{tpu_custom_call.1} parent=39 // pred_check
          %p854 = pneg %p198
        $region46: #{tpu_custom_call.1} parent=39 // pred_check_branch
          %856 = sbr.rel (%p854) target = $region48
        $region47: #{tpu_custom_call.1} parent=39 // pred_region
          %s857 = sand.u32 %s36, 1
          %s858 = scalar_lea.sflag [#allocation3], %s857
          %s859 = sand.u32 %s188, 1
          %s860 = smul.addr %s859, 3
          %s861 = scalar_lea.vmem [#allocation11], %s860
          %863 = vsyncadd %s858, 0
          %s864 = smul.addr %s44, 3
          %s865 = scalar_lea.hbm %s5, %s864
          %s867 = sshll.u32 %s865, 4
          %s868 = int_to_ptr.hbm [resolvable:$true] %s867
          %s869 = sshll.u32 %s861, 4
          %s870 = int_to_ptr.vmem [resolvable:$true] %s869
          %872 = dma.hbm_to_vmem [thread:$0]  %s868, 48, %s870, %s858
        $region48: #{tpu_custom_call.1} parent=39 // pred_fallthru
          _
        // Predicated region
        $region49: #{tpu_custom_call.1} parent=39 // pred_check
          %p873 = pneg %p224
        $region50: #{tpu_custom_call.1} parent=39 // pred_check_branch
          %875 = sbr.rel (%p873) target = $region52
        $region51: #{tpu_custom_call.1} parent=39 // pred_region
          %s876 = sand.u32 %s36, 1
          %s877 = scalar_lea.sflag [#allocation3], %s876
          %s878 = sand.u32 %s214, 1
          %s879 = smul.addr %s878, 64
          %s880 = scalar_lea.vmem [#allocation12], %s879
          %882 = vsyncadd %s877, 0
          %s883 = smul.addr %s44, 16
          %s884 = smul.addr %s883, 4
          %s885 = scalar_lea.hbm %s6, %s884
          %s886 = sshll.u32 %s885, 4
          %s887 = int_to_ptr.hbm [resolvable:$true] %s886
          %s888 = sshll.u32 %s880, 4
          %s889 = int_to_ptr.vmem [resolvable:$true] %s888
          %894 = dma.hbm_to_vmem [thread:$0]  %s887, 1024, %s889, %s877, 64, 64, 4
        $region52: #{tpu_custom_call.1} parent=39 // pred_fallthru
          _
        // Predicated region
        $region53: #{tpu_custom_call.1} parent=39 // pred_check
          %p895 = pneg %p250
        $region54: #{tpu_custom_call.1} parent=39 // pred_check_branch
          %897 = sbr.rel (%p895) target = $region56
        $region55: #{tpu_custom_call.1} parent=39 // pred_region
          %s898 = sand.u32 %s36, 1
          %s899 = scalar_lea.sflag [#allocation3], %s898
          %s900 = sand.u32 %s240, 1
          %s901 = scalar_lea.vmem [#allocation13], %s900
          %903 = vsyncadd %s899, 0
          %s904 = scalar_lea.hbm %s7, %s44
          %s906 = sshll.u32 %s904, 4
          %s907 = int_to_ptr.hbm [resolvable:$true] %s906
          %s908 = sshll.u32 %s901, 4
          %s909 = int_to_ptr.vmem [resolvable:$true] %s908
          %911 = dma.hbm_to_vmem [thread:$0]  %s907, 16, %s909, %s899
        $region56: #{tpu_custom_call.1} parent=39 // pred_fallthru
          _
        // Predicated region
        $region57: #{tpu_custom_call.1} parent=39 // pred_check
          %p912 = pneg %p276
        $region58: #{tpu_custom_call.1} parent=39 // pred_check_branch
          %914 = sbr.rel (%p912) target = $region60
        $region59: #{tpu_custom_call.1} parent=39 // pred_region
          %s915 = sand.u32 %s36, 1
          %s916 = scalar_lea.sflag [#allocation3], %s915
          %s917 = sand.u32 %s266, 1
          %s918 = scalar_lea.vmem [#allocation14], %s917
          %920 = vsyncadd %s916, 0
          %s921 = scalar_lea.hbm %s8, %s44
          %s923 = sshll.u32 %s921, 4
          %s924 = int_to_ptr.hbm [resolvable:$true] %s923
          %s925 = sshll.u32 %s918, 4
          %s926 = int_to_ptr.vmem [resolvable:$true] %s925
          %928 = dma.hbm_to_vmem [thread:$0]  %s924, 16, %s926, %s916
        $region60: #{tpu_custom_call.1} parent=39 // pred_fallthru
          _
        // Predicated region
        $region61: #{tpu_custom_call.1} parent=39 // pred_check
          %p929 = pneg %p302
        $region62: #{tpu_custom_call.1} parent=39 // pred_check_branch
          %931 = sbr.rel (%p929) target = $region64
        $region63: #{tpu_custom_call.1} parent=39 // pred_region
          %s932 = sand.u32 %s36, 1
          %s933 = scalar_lea.sflag [#allocation3], %s932
          %s934 = sand.u32 %s292, 1
          %s935 = scalar_lea.vmem [#allocation15], %s934
          %937 = vsyncadd %s933, 0
          %s938 = scalar_lea.hbm %s9, %s44
          %s940 = sshll.u32 %s938, 4
          %s941 = int_to_ptr.hbm [resolvable:$true] %s940
          %s942 = sshll.u32 %s935, 4
          %s943 = int_to_ptr.vmem [resolvable:$true] %s942
          %945 = dma.hbm_to_vmem [thread:$0]  %s941, 16, %s943, %s933
        $region64: #{tpu_custom_call.1} parent=39 // pred_fallthru
          _
        // Predicated region
        $region65: #{tpu_custom_call.1} parent=39 // pred_check
          %p946 = pneg %p328
        $region66: #{tpu_custom_call.1} parent=39 // pred_check_branch
          %948 = sbr.rel (%p946) target = $region68
        $region67: #{tpu_custom_call.1} parent=39 // pred_region
          %s949 = sand.u32 %s36, 1
          %s950 = scalar_lea.sflag [#allocation3], %s949
          %s951 = sand.u32 %s318, 1
          %s952 = smul.addr %s951, 64
          %s953 = scalar_lea.vmem [#allocation16], %s952
          %955 = vsyncadd %s950, 0
          %s956 = smul.addr %s44, 16
          %s957 = smul.addr %s956, 4
          %s958 = scalar_lea.hbm %s10, %s957
          %s959 = sshll.u32 %s958, 4
          %s960 = int_to_ptr.hbm [resolvable:$true] %s959
          %s961 = sshll.u32 %s953, 4
          %s962 = int_to_ptr.vmem [resolvable:$true] %s961
          %967 = dma.hbm_to_vmem [thread:$0]  %s960, 1024, %s962, %s950, 64, 64, 4
        $region68: #{tpu_custom_call.1} parent=39 // pred_fallthru
          _
        // Predicated region
        $region69: #{tpu_custom_call.1} parent=39 // pred_check
          %p968 = pneg %p354
        $region70: #{tpu_custom_call.1} parent=39 // pred_check_branch
          %970 = sbr.rel (%p968) target = $region72
        $region71: #{tpu_custom_call.1} parent=39 // pred_region
          %p971 = scmp.lt.s32.totalorder %s44, 1
          %s972 = scalar_select %p971, %s44, 1
          %s973 = scalar_lea.vmem %s11, %s972
        $region72: #{tpu_custom_call.1} parent=39 // pred_fallthru
          _
        // Predicated region
        $region73: #{tpu_custom_call.1} parent=39 // pred_check
          %p974 = pneg %p380
        $region74: #{tpu_custom_call.1} parent=39 // pred_check_branch
          %976 = sbr.rel (%p974) target = $region76
        $region75: #{tpu_custom_call.1} parent=39 // pred_region
          %s977 = sand.u32 %s36, 1
          %s978 = scalar_lea.sflag [#allocation3], %s977
          %s979 = sand.u32 %s370, 1
          %s980 = smul.addr %s979, 128
          %s981 = scalar_lea.vmem [#allocation17], %s980
          %983 = vsyncadd %s978, 0
          %s984 = smul.addr %s44, 32
          %s985 = smul.addr %s984, 4
          %s986 = scalar_lea.hbm %s12, %s985
          %s987 = sshll.u32 %s986, 4
          %s988 = int_to_ptr.hbm [resolvable:$true] %s987
          %s989 = sshll.u32 %s981, 4
          %s990 = int_to_ptr.vmem [resolvable:$true] %s989
          %995 = dma.hbm_to_vmem [thread:$0]  %s988, 2048, %s990, %s978, 128, 128, 8
        $region76: #{tpu_custom_call.1} parent=39 // pred_fallthru
          _
        // Predicated region
        $region77: #{tpu_custom_call.1} parent=39 // pred_check
          %p996 = pneg %p406
        $region78: #{tpu_custom_call.1} parent=39 // pred_check_branch
          %998 = sbr.rel (%p996) target = $region80
        $region79: #{tpu_custom_call.1} parent=39 // pred_region
          %p999 = scmp.lt.s32.totalorder %s44, 1
          %s1000 = scalar_select %p999, %s44, 1
          %s1001 = smul.addr %s1000, 2
          %s1002 = scalar_lea.vmem %s13, %s1001
        $region80: #{tpu_custom_call.1} parent=39 // pred_fallthru
          _
        // Predicated region
        $region81: #{tpu_custom_call.1} parent=39 // pred_check
          %p1003 = pneg %p432
        $region82: #{tpu_custom_call.1} parent=39 // pred_check_branch
          %1005 = sbr.rel (%p1003) target = $region84
        $region83: #{tpu_custom_call.1} parent=39 // pred_region
          %s1006 = sand.u32 %s36, 1
          %s1007 = scalar_lea.sflag [#allocation3], %s1006
          %s1008 = sand.u32 %s422, 1
          %s1009 = smul.addr %s1008, 64
          %s1010 = scalar_lea.vmem [#allocation18], %s1009
          %1012 = vsyncadd %s1007, 0
          %s1013 = smul.addr %s44, 16
          %s1014 = smul.addr %s1013, 4
          %s1015 = scalar_lea.hbm %s14, %s1014
          %s1016 = sshll.u32 %s1015, 4
          %s1017 = int_to_ptr.hbm [resolvable:$true] %s1016
          %s1018 = sshll.u32 %s1010, 4
          %s1019 = int_to_ptr.vmem [resolvable:$true] %s1018
          %1024 = dma.hbm_to_vmem [thread:$0]  %s1017, 1024, %s1019, %s1007, 64, 64, 4
        $region84: #{tpu_custom_call.1} parent=39 // pred_fallthru
          _
        // Predicated region
        $region85: #{tpu_custom_call.1} parent=39 // pred_check
          %p1025 = pneg %p458
        $region86: #{tpu_custom_call.1} parent=39 // pred_check_branch
          %1027 = sbr.rel (%p1025) target = $region88
        $region87: #{tpu_custom_call.1} parent=39 // pred_region
          %p1028 = scmp.lt.s32.totalorder %s44, 1
          %s1029 = scalar_select %p1028, %s44, 1
          %s1030 = scalar_lea.vmem %s15, %s1029
        $region88: #{tpu_custom_call.1} parent=39 // pred_fallthru
          _
        // Predicated region
        $region89: #{tpu_custom_call.1} parent=39 // pred_check
          %p1031 = pneg %p484
        $region90: #{tpu_custom_call.1} parent=39 // pred_check_branch
          %1033 = sbr.rel (%p1031) target = $region92
        $region91: #{tpu_custom_call.1} parent=39 // pred_region
          %p1034 = scmp.lt.s32.totalorder %s44, 1
          %s1035 = scalar_select %p1034, %s44, 1
          %s1036 = scalar_lea.vmem %s16, %s1035
        $region92: #{tpu_custom_call.1} parent=39 // pred_fallthru
          _
        // Predicated region
        $region93: #{tpu_custom_call.1} parent=39 // pred_check
          %p1037 = pneg %p510
        $region94: #{tpu_custom_call.1} parent=39 // pred_check_branch
          %1039 = sbr.rel (%p1037) target = $region96
        $region95: #{tpu_custom_call.1} parent=39 // pred_region
          %p1040 = scmp.lt.s32.totalorder %s44, 1
          %s1041 = scalar_select %p1040, %s44, 1
          %s1042 = scalar_lea.vmem %s17, %s1041
        $region96: #{tpu_custom_call.1} parent=39 // pred_fallthru
          _
        // Predicated region
        $region97: #{tpu_custom_call.1} parent=39 // pred_check
          %p1043 = pneg %p536
        $region98: #{tpu_custom_call.1} parent=39 // pred_check_branch
          %1045 = sbr.rel (%p1043) target = $region100
        $region99: #{tpu_custom_call.1} parent=39 // pred_region
          %s1046 = sand.u32 %s36, 1
          %s1047 = scalar_lea.sflag [#allocation3], %s1046
          %s1048 = sand.u32 %s526, 1
          %s1049 = smul.addr %s1048, 128
          %s1050 = scalar_lea.vmem [#allocation19], %s1049
          %1052 = vsyncadd %s1047, 0
          %s1053 = smul.addr %s44, 32
          %s1054 = smul.addr %s1053, 4
          %s1055 = scalar_lea.hbm %s18, %s1054
          %s1056 = sshll.u32 %s1055, 4
          %s1057 = int_to_ptr.hbm [resolvable:$true] %s1056
          %s1058 = sshll.u32 %s1050, 4
          %s1059 = int_to_ptr.vmem [resolvable:$true] %s1058
          %1064 = dma.hbm_to_vmem [thread:$0]  %s1057, 2048, %s1059, %s1047, 128, 128, 8
        $region100: #{tpu_custom_call.1} parent=39 // pred_fallthru
          _
        // Predicated region
        $region101: #{tpu_custom_call.1} parent=39 // pred_check
          %p1065 = pneg %p562
        $region102: #{tpu_custom_call.1} parent=39 // pred_check_branch
          %1067 = sbr.rel (%p1065) target = $region104
        $region103: #{tpu_custom_call.1} parent=39 // pred_region
          %p1068 = scmp.lt.s32.totalorder %s44, 1
          %s1069 = scalar_select %p1068, %s44, 1
          %s1070 = smul.addr %s1069, 2
          %s1071 = scalar_lea.vmem %s19, %s1070
        $region104: #{tpu_custom_call.1} parent=39 // pred_fallthru
          _
        // Predicated region
        $region105: #{tpu_custom_call.1} parent=39 // pred_check
          %p1072 = pneg %p588
        $region106: #{tpu_custom_call.1} parent=39 // pred_check_branch
          %1074 = sbr.rel (%p1072) target = $region108
        $region107: #{tpu_custom_call.1} parent=39 // pred_region
          %s1075 = sand.u32 %s36, 1
          %s1076 = scalar_lea.sflag [#allocation3], %s1075
          %s1077 = sand.u32 %s578, 1
          %s1078 = smul.addr %s1077, 128
          %s1079 = scalar_lea.vmem [#allocation20], %s1078
          %1081 = vsyncadd %s1076, 0
          %s1082 = smul.addr %s44, 32
          %s1083 = smul.addr %s1082, 4
          %s1084 = scalar_lea.hbm %s20, %s1083
          %s1085 = sshll.u32 %s1084, 4
          %s1086 = int_to_ptr.hbm [resolvable:$true] %s1085
          %s1087 = sshll.u32 %s1079, 4
          %s1088 = int_to_ptr.vmem [resolvable:$true] %s1087
          %1093 = dma.hbm_to_vmem [thread:$0]  %s1086, 2048, %s1088, %s1076, 64, 64, 4
        $region108: #{tpu_custom_call.1} parent=39 // pred_fallthru
          _
        // Predicated region
        $region109: #{tpu_custom_call.1} parent=39 // pred_check
          %p1094 = pneg %p614
        $region110: #{tpu_custom_call.1} parent=39 // pred_check_branch
          %1096 = sbr.rel (%p1094) target = $region112
        $region111: #{tpu_custom_call.1} parent=39 // pred_region
          %p1097 = scmp.lt.s32.totalorder %s44, 1
          %s1098 = scalar_select %p1097, %s44, 1
          %s1099 = scalar_lea.vmem %s21, %s1098
        $region112: #{tpu_custom_call.1} parent=39 // pred_fallthru
          _
        // Predicated region
        $region113: #{tpu_custom_call.1} parent=39 // pred_check
          %p1100 = pneg %p640
        $region114: #{tpu_custom_call.1} parent=39 // pred_check_branch
          %1102 = sbr.rel (%p1100) target = $region116
        $region115: #{tpu_custom_call.1} parent=39 // pred_region
          %p1103 = scmp.lt.s32.totalorder %s44, 1
          %s1104 = scalar_select %p1103, %s44, 1
          %s1105 = scalar_lea.vmem %s22, %s1104
        $region116: #{tpu_custom_call.1} parent=39 // pred_fallthru
          _
        // Predicated region
        $region117: #{tpu_custom_call.1} parent=39 // pred_check
          %p1106 = pneg %p666
        $region118: #{tpu_custom_call.1} parent=39 // pred_check_branch
          %1108 = sbr.rel (%p1106) target = $region120
        $region119: #{tpu_custom_call.1} parent=39 // pred_region
          %p1109 = scmp.lt.s32.totalorder %s44, 1
          %s1110 = scalar_select %p1109, %s44, 1
          %s1111 = scalar_lea.vmem %s23, %s1110
        $region120: #{tpu_custom_call.1} parent=39 // pred_fallthru
          _
      $region40: #{tpu_custom_call.1} parent=5 // pred_fallthru
        _
      %p1112 = scmp.le.s32.totalorder 1, %s36
      %p1113 = scmp.lt.s32.totalorder %s36, 3
      %p1114 = pnand %p1112, %p1113
      %p1115 = pneg %p1114
      // Predicated region
      $region121: #{tpu_custom_call.1} parent=5 // pred_check
        _
      $region122: #{tpu_custom_call.1} parent=5 // pred_check_branch
        %1117 = sbr.rel (%p1114) target = $region124
      $region123: #{tpu_custom_call.1} parent=5 // pred_region
        %s1118 = ssub.s32 %s36, 1
        // Predicated region
        $region125: #{tpu_custom_call.1} parent=123 // pred_check
          %p1119 = pneg %p74
        $region126: #{tpu_custom_call.1} parent=123 // pred_check_branch
          %1121 = sbr.rel (%p1119) target = $region128
        $region127: #{tpu_custom_call.1} parent=123 // pred_region
          %1123 = dma.done [#allocation3], 128
        $region128: #{tpu_custom_call.1} parent=123 // pred_fallthru
          _
        // Predicated region
        $region129: #{tpu_custom_call.1} parent=123 // pred_check
          %p1124 = pneg %p100
        $region130: #{tpu_custom_call.1} parent=123 // pred_check_branch
          %1126 = sbr.rel (%p1124) target = $region132
        $region131: #{tpu_custom_call.1} parent=123 // pred_region
          %1128 = dma.done [#allocation6], 256
        $region132: #{tpu_custom_call.1} parent=123 // pred_fallthru
          _
        // Predicated region
        $region133: #{tpu_custom_call.1} parent=123 // pred_check
          %p1129 = pneg %p126
        $region134: #{tpu_custom_call.1} parent=123 // pred_check_branch
          %1131 = sbr.rel (%p1129) target = $region136
        $region135: #{tpu_custom_call.1} parent=123 // pred_region
          %1133 = dma.done [#allocation6], 256
        $region136: #{tpu_custom_call.1} parent=123 // pred_fallthru
          _
        // Predicated region
        $region137: #{tpu_custom_call.1} parent=123 // pred_check
          %p1134 = pneg %p152
        $region138: #{tpu_custom_call.1} parent=123 // pred_check_branch
          %1136 = sbr.rel (%p1134) target = $region140
        $region139: #{tpu_custom_call.1} parent=123 // pred_region
          %1138 = dma.done [#allocation9], 32
        $region140: #{tpu_custom_call.1} parent=123 // pred_fallthru
          _
        %s1139 = sand.u32 %s41, 1
        %s1140 = scalar_lea.sflag [#allocation3], %s1139
        %s1141 = sand.u32 %s165, 1
        %s1142 = smul.addr %s1141, 192
        %s1143 = scalar_lea.vmem [#allocation10], %s1142
        // Predicated region
        $region141: #{tpu_custom_call.1} parent=123 // pred_check
          %p1144 = pneg %p178
        $region142: #{tpu_custom_call.1} parent=123 // pred_check_branch
          %1146 = sbr.rel (%p1144) target = $region144
        $region143: #{tpu_custom_call.1} parent=123 // pred_region
          %1148 = dma.done %s1140, 3072
        $region144: #{tpu_custom_call.1} parent=123 // pred_fallthru
          _
        %s1149 = sand.u32 %s41, 1
        %s1150 = scalar_lea.sflag [#allocation3], %s1149
        %s1151 = sand.u32 %s191, 1
        %s1152 = smul.addr %s1151, 3
        %s1153 = scalar_lea.vmem [#allocation11], %s1152
        // Predicated region
        $region145: #{tpu_custom_call.1} parent=123 // pred_check
          %p1154 = pneg %p204
        $region146: #{tpu_custom_call.1} parent=123 // pred_check_branch
          %1156 = sbr.rel (%p1154) target = $region148
        $region147: #{tpu_custom_call.1} parent=123 // pred_region
          %1158 = dma.done %s1150, 48
        $region148: #{tpu_custom_call.1} parent=123 // pred_fallthru
          _
        %s1159 = sand.u32 %s41, 1
        %s1160 = scalar_lea.sflag [#allocation3], %s1159
        %s1161 = sand.u32 %s217, 1
        %s1162 = smul.addr %s1161, 64
        %s1163 = scalar_lea.vmem [#allocation12], %s1162
        // Predicated region
        $region149: #{tpu_custom_call.1} parent=123 // pred_check
          %p1164 = pneg %p230
        $region150: #{tpu_custom_call.1} parent=123 // pred_check_branch
          %1166 = sbr.rel (%p1164) target = $region152
        $region151: #{tpu_custom_call.1} parent=123 // pred_region
          %1168 = dma.done %s1160, 1024
        $region152: #{tpu_custom_call.1} parent=123 // pred_fallthru
          _
        %s1169 = sand.u32 %s41, 1
        %s1170 = scalar_lea.sflag [#allocation3], %s1169
        %s1171 = sand.u32 %s243, 1
        %s1172 = scalar_lea.vmem [#allocation13], %s1171
        // Predicated region
        $region153: #{tpu_custom_call.1} parent=123 // pred_check
          %p1173 = pneg %p256
        $region154: #{tpu_custom_call.1} parent=123 // pred_check_branch
          %1175 = sbr.rel (%p1173) target = $region156
        $region155: #{tpu_custom_call.1} parent=123 // pred_region
          %1177 = dma.done %s1170, 16
        $region156: #{tpu_custom_call.1} parent=123 // pred_fallthru
          _
        %s1178 = sand.u32 %s41, 1
        %s1179 = scalar_lea.sflag [#allocation3], %s1178
        %s1180 = sand.u32 %s269, 1
        %s1181 = scalar_lea.vmem [#allocation14], %s1180
        // Predicated region
        $region157: #{tpu_custom_call.1} parent=123 // pred_check
          %p1182 = pneg %p282
        $region158: #{tpu_custom_call.1} parent=123 // pred_check_branch
          %1184 = sbr.rel (%p1182) target = $region160
        $region159: #{tpu_custom_call.1} parent=123 // pred_region
          %1186 = dma.done %s1179, 16
        $region160: #{tpu_custom_call.1} parent=123 // pred_fallthru
          _
        %s1187 = sand.u32 %s41, 1
        %s1188 = scalar_lea.sflag [#allocation3], %s1187
        %s1189 = sand.u32 %s295, 1
        %s1190 = scalar_lea.vmem [#allocation15], %s1189
        // Predicated region
        $region161: #{tpu_custom_call.1} parent=123 // pred_check
          %p1191 = pneg %p308
        $region162: #{tpu_custom_call.1} parent=123 // pred_check_branch
          %1193 = sbr.rel (%p1191) target = $region164
        $region163: #{tpu_custom_call.1} parent=123 // pred_region
          %1195 = dma.done %s1188, 16
        $region164: #{tpu_custom_call.1} parent=123 // pred_fallthru
          _
        %s1196 = sand.u32 %s41, 1
        %s1197 = scalar_lea.sflag [#allocation3], %s1196
        %s1198 = sand.u32 %s321, 1
        %s1199 = smul.addr %s1198, 64
        %s1200 = scalar_lea.vmem [#allocation16], %s1199
        // Predicated region
        $region165: #{tpu_custom_call.1} parent=123 // pred_check
          %p1201 = pneg %p334
        $region166: #{tpu_custom_call.1} parent=123 // pred_check_branch
          %1203 = sbr.rel (%p1201) target = $region168
        $region167: #{tpu_custom_call.1} parent=123 // pred_region
          %1205 = dma.done %s1197, 1024
        $region168: #{tpu_custom_call.1} parent=123 // pred_fallthru
          _
        %s1206 = sand.u32 %s41, 1
        %s1207 = scalar_lea.sflag [#allocation3], %s1206
        %s1208 = sand.u32 %s373, 1
        %s1209 = smul.addr %s1208, 128
        %s1210 = scalar_lea.vmem [#allocation17], %s1209
        // Predicated region
        $region169: #{tpu_custom_call.1} parent=123 // pred_check
          %p1211 = pneg %p386
        $region170: #{tpu_custom_call.1} parent=123 // pred_check_branch
          %1213 = sbr.rel (%p1211) target = $region172
        $region171: #{tpu_custom_call.1} parent=123 // pred_region
          %1215 = dma.done %s1207, 2048
        $region172: #{tpu_custom_call.1} parent=123 // pred_fallthru
          _
        %s1216 = sand.u32 %s41, 1
        %s1217 = scalar_lea.sflag [#allocation3], %s1216
        %s1218 = sand.u32 %s425, 1
        %s1219 = smul.addr %s1218, 64
        %s1220 = scalar_lea.vmem [#allocation18], %s1219
        // Predicated region
        $region173: #{tpu_custom_call.1} parent=123 // pred_check
          %p1221 = pneg %p438
        $region174: #{tpu_custom_call.1} parent=123 // pred_check_branch
          %1223 = sbr.rel (%p1221) target = $region176
        $region175: #{tpu_custom_call.1} parent=123 // pred_region
          %1225 = dma.done %s1217, 1024
        $region176: #{tpu_custom_call.1} parent=123 // pred_fallthru
          _
        %s1226 = sand.u32 %s41, 1
        %s1227 = scalar_lea.sflag [#allocation3], %s1226
        %s1228 = sand.u32 %s529, 1
        %s1229 = smul.addr %s1228, 128
        %s1230 = scalar_lea.vmem [#allocation19], %s1229
        // Predicated region
        $region177: #{tpu_custom_call.1} parent=123 // pred_check
          %p1231 = pneg %p542
        $region178: #{tpu_custom_call.1} parent=123 // pred_check_branch
          %1233 = sbr.rel (%p1231) target = $region180
        $region179: #{tpu_custom_call.1} parent=123 // pred_region
          %1235 = dma.done %s1227, 2048
        $region180: #{tpu_custom_call.1} parent=123 // pred_fallthru
          _
        %s1236 = sand.u32 %s41, 1
        %s1237 = scalar_lea.sflag [#allocation3], %s1236
        %s1238 = sand.u32 %s581, 1
        %s1239 = smul.addr %s1238, 128
        %s1240 = scalar_lea.vmem [#allocation20], %s1239
        // Predicated region
        $region181: #{tpu_custom_call.1} parent=123 // pred_check
          %p1241 = pneg %p594
        $region182: #{tpu_custom_call.1} parent=123 // pred_check_branch
          %1243 = sbr.rel (%p1241) target = $region184
        $region183: #{tpu_custom_call.1} parent=123 // pred_region
          %1245 = dma.done %s1237, 2048
        $region184: #{tpu_custom_call.1} parent=123 // pred_fallthru
          _
        %p1246 = pneg %p74
        %p1247 = pneg %p71
        %p1248 = pneg %p100
        %p1249 = pneg %p97
        %p1250 = pneg %p126
        %p1251 = pneg %p123
        %p1252 = pneg %p152
        %p1253 = pneg %p149
        %s1254 = sand.u32 %s41, 1
        %s1255 = scalar_lea.sflag [#allocation3], %s1254
        %s1256 = sand.u32 %s165, 1
        %s1257 = smul.addr %s1256, 192
        %s1258 = scalar_lea.vmem [#allocation10], %s1257
        %p1259 = pneg %p178
        %p1260 = pneg %p175
        %s1261 = sand.u32 %s41, 1
        %s1262 = scalar_lea.sflag [#allocation3], %s1261
        %s1263 = sand.u32 %s191, 1
        %s1264 = smul.addr %s1263, 3
        %s1265 = scalar_lea.vmem [#allocation11], %s1264
        %p1266 = pneg %p204
        %p1267 = pneg %p201
        %s1268 = sand.u32 %s41, 1
        %s1269 = scalar_lea.sflag [#allocation3], %s1268
        %s1270 = sand.u32 %s217, 1
        %s1271 = smul.addr %s1270, 64
        %s1272 = scalar_lea.vmem [#allocation12], %s1271
        %p1273 = pneg %p230
        %p1274 = pneg %p227
        %s1275 = sand.u32 %s41, 1
        %s1276 = scalar_lea.sflag [#allocation3], %s1275
        %s1277 = sand.u32 %s243, 1
        %s1278 = scalar_lea.vmem [#allocation13], %s1277
        %p1279 = pneg %p256
        %p1280 = pneg %p253
        %s1281 = sand.u32 %s41, 1
        %s1282 = scalar_lea.sflag [#allocation3], %s1281
        %s1283 = sand.u32 %s269, 1
        %s1284 = scalar_lea.vmem [#allocation14], %s1283
        %p1285 = pneg %p282
        %p1286 = pneg %p279
        %s1287 = sand.u32 %s41, 1
        %s1288 = scalar_lea.sflag [#allocation3], %s1287
        %s1289 = sand.u32 %s295, 1
        %s1290 = scalar_lea.vmem [#allocation15], %s1289
        %p1291 = pneg %p308
        %p1292 = pneg %p305
        %s1293 = sand.u32 %s41, 1
        %s1294 = scalar_lea.sflag [#allocation3], %s1293
        %s1295 = sand.u32 %s321, 1
        %s1296 = smul.addr %s1295, 64
        %s1297 = scalar_lea.vmem [#allocation16], %s1296
        %p1298 = pneg %p334
        %p1299 = pneg %p331
        %p1300 = scmp.lt.s32.totalorder %s46, 1
        %s1301 = scalar_select %p1300, %s46, 1
        %s1302 = scalar_lea.vmem %s11, %s1301
        %p1303 = pneg %p360
        %p1304 = pneg %p357
        %s1305 = sand.u32 %s41, 1
        %s1306 = scalar_lea.sflag [#allocation3], %s1305
        %s1307 = sand.u32 %s373, 1
        %s1308 = smul.addr %s1307, 128
        %s1309 = scalar_lea.vmem [#allocation17], %s1308
        %p1310 = pneg %p386
        %p1311 = pneg %p383
        %p1312 = scmp.lt.s32.totalorder %s46, 1
        %s1313 = scalar_select %p1312, %s46, 1
        %s1314 = smul.addr %s1313, 2
        %s1315 = scalar_lea.vmem %s13, %s1314
        %p1316 = pneg %p412
        %p1317 = pneg %p409
        %s1318 = sand.u32 %s41, 1
        %s1319 = scalar_lea.sflag [#allocation3], %s1318
        %s1320 = sand.u32 %s425, 1
        %s1321 = smul.addr %s1320, 64
        %s1322 = scalar_lea.vmem [#allocation18], %s1321
        %p1323 = pneg %p438
        %p1324 = pneg %p435
        %p1325 = scmp.lt.s32.totalorder %s46, 1
        %s1326 = scalar_select %p1325, %s46, 1
        %s1327 = scalar_lea.vmem %s15, %s1326
        %p1328 = pneg %p464
        %p1329 = pneg %p461
        %p1330 = scmp.lt.s32.totalorder %s46, 1
        %s1331 = scalar_select %p1330, %s46, 1
        %s1332 = scalar_lea.vmem %s16, %s1331
        %p1333 = pneg %p490
        %p1334 = pneg %p487
        %p1335 = scmp.lt.s32.totalorder %s46, 1
        %s1336 = scalar_select %p1335, %s46, 1
        %s1337 = scalar_lea.vmem %s17, %s1336
        %p1338 = pneg %p516
        %p1339 = pneg %p513
        %s1340 = sand.u32 %s41, 1
        %s1341 = scalar_lea.sflag [#allocation3], %s1340
        %s1342 = sand.u32 %s529, 1
        %s1343 = smul.addr %s1342, 128
        %s1344 = scalar_lea.vmem [#allocation19], %s1343
        %p1345 = pneg %p542
        %p1346 = pneg %p539
        %p1347 = scmp.lt.s32.totalorder %s46, 1
        %s1348 = scalar_select %p1347, %s46, 1
        %s1349 = smul.addr %s1348, 2
        %s1350 = scalar_lea.vmem %s19, %s1349
        %p1351 = pneg %p568
        %p1352 = pneg %p565
        %s1353 = sand.u32 %s41, 1
        %s1354 = scalar_lea.sflag [#allocation3], %s1353
        %s1355 = sand.u32 %s581, 1
        %s1356 = smul.addr %s1355, 128
        %s1357 = scalar_lea.vmem [#allocation20], %s1356
        %p1358 = pneg %p594
        %p1359 = pneg %p591
        %p1360 = scmp.lt.s32.totalorder %s46, 1
        %s1361 = scalar_select %p1360, %s46, 1
        %s1362 = scalar_lea.vmem %s21, %s1361
        %p1363 = pneg %p620
        %p1364 = pneg %p617
        %p1365 = scmp.lt.s32.totalorder %s46, 1
        %s1366 = scalar_select %p1365, %s46, 1
        %s1367 = scalar_lea.vmem %s22, %s1366
        %p1368 = pneg %p646
        %p1369 = pneg %p643
        %p1370 = scmp.lt.s32.totalorder %s46, 1
        %s1371 = scalar_select %p1370, %s46, 1
        %s1372 = scalar_lea.vmem %s23, %s1371
        %p1373 = pneg %p672
        %p1374 = pneg %p669
        %p1375 = pneg %p693
        %p1376 = pneg %p690
        %p1377 = pneg %p714
        %p1378 = pneg %p711
        %p1379 = pneg %p740
        %p1380 = pneg %p737
        %s1381 = smul.u32 2, %s45
        %s1382 = smul.u32 4, %s45
        %s1383 = smul.u32 2, %s45
        %s1384 = smul.u32 2, %s45
        %p1385 = scmp.lt.s32.totalorder %s46, 1
        %s1386 = scalar_select %p1385, %s46, 1
        %s1387 = scalar_lea.vmem %s11, %s1386
        %p1388 = scmp.lt.s32.totalorder %s46, 1
        %s1389 = scalar_select %p1388, %s46, 1
        %s1390 = smul.addr %s1389, 2
        %s1391 = scalar_lea.vmem %s13, %s1390
        %p1392 = scmp.lt.s32.totalorder %s46, 1
        %s1393 = scalar_select %p1392, %s46, 1
        %s1394 = scalar_lea.vmem %s15, %s1393
        %p1395 = scmp.lt.s32.totalorder %s46, 1
        %s1396 = scalar_select %p1395, %s46, 1
        %s1397 = scalar_lea.vmem %s16, %s1396
        %p1398 = scmp.lt.s32.totalorder %s46, 1
        %s1399 = scalar_select %p1398, %s46, 1
        %s1400 = scalar_lea.vmem %s17, %s1399
        %p1401 = scmp.lt.s32.totalorder %s46, 1
        %s1402 = scalar_select %p1401, %s46, 1
        %s1403 = smul.addr %s1402, 2
        %s1404 = scalar_lea.vmem %s19, %s1403
        %p1405 = scmp.lt.s32.totalorder %s46, 1
        %s1406 = scalar_select %p1405, %s46, 1
        %s1407 = scalar_lea.vmem %s21, %s1406
        %p1408 = scmp.lt.s32.totalorder %s46, 1
        %s1409 = scalar_select %p1408, %s46, 1
        %s1410 = scalar_lea.vmem %s22, %s1409
        %p1411 = scmp.lt.s32.totalorder %s46, 1
        %s1412 = scalar_select %p1411, %s46, 1
        %s1413 = scalar_lea.vmem %s23, %s1412
        %s1414 = smul.u32 2, %s45
        %p1416 = scmp.eq.s32.totalorder %s46, 0
        // Predicated region
        $region185: #{tpu_custom_call.1} parent=123 // pred_check
          %p1417 = pneg %p1416
        $region186: #{tpu_custom_call.1} parent=123 // pred_check_branch
          %1419 = sbr.rel (%p1417) target = $region188
        $region187: #{tpu_custom_call.1} parent=123 // pred_region
          %v1420 = vld [vmem:[#allocation2] sm:$0xf]
          %v1421 = vld [vmem:[#allocation2 + $0x4] sm:$0xf]
          %1422 = vst [vmem:[#allocation21] sm:$0xf] %v1420
          %1423 = vst [vmem:[#allocation21 + $0x4] sm:$0xf] %v1421
        $region188: #{tpu_custom_call.1} parent=123 // pred_fallthru
          _
        %v1424 = vld [vmem:[#allocation21] sm:$0xf]
        %v1425 = vld [vmem:[#allocation21 + $0x4] sm:$0xf]
        %v1426 = vunpack.c.l.bf16 %v1424
        %v1427 = vunpack.c.l.bf16 %v1425
        %v1428 = vld [vmem:[%s1143] sm:$0xff]
        %v1429 = vld [vmem:[%s1143 + $0x8] sm:$0xf]
        %v1430 = vld [vmem:[%s1143 + $0xc] sm:$0xff]
        %v1431 = vld [vmem:[%s1143 + $0x14] sm:$0xf]
        %v1432 = vld [vmem:[%s1143 + $0x18] sm:$0xff]
        %v1433 = vld [vmem:[%s1143 + $0x20] sm:$0xf]
        %v1434 = vld [vmem:[%s1143 + $0x24] sm:$0xff]
        %v1435 = vld [vmem:[%s1143 + $0x2c] sm:$0xf]
        %v1436 = vld [vmem:[%s1143 + $0x30] sm:$0xff]
        %v1437 = vld [vmem:[%s1143 + $0x38] sm:$0xf]
        %v1438 = vld [vmem:[%s1143 + $0x3c] sm:$0xff]
        %v1439 = vld [vmem:[%s1143 + $0x44] sm:$0xf]
        %v1440 = vld [vmem:[%s1143 + $0x48] sm:$0xff]
        %v1441 = vld [vmem:[%s1143 + $0x50] sm:$0xf]
        %v1442 = vld [vmem:[%s1143 + $0x54] sm:$0xff]
        %v1443 = vld [vmem:[%s1143 + $0x5c] sm:$0xf]
        %v1444 = vld [vmem:[%s1143 + $0x60] sm:$0xff]
        %v1445 = vld [vmem:[%s1143 + $0x68] sm:$0xf]
        %v1446 = vld [vmem:[%s1143 + $0x6c] sm:$0xff]
        %v1447 = vld [vmem:[%s1143 + $0x74] sm:$0xf]
        %v1448 = vld [vmem:[%s1143 + $0x78] sm:$0xff]
        %v1449 = vld [vmem:[%s1143 + $0x80] sm:$0xf]
        %v1450 = vld [vmem:[%s1143 + $0x84] sm:$0xff]
        %v1451 = vld [vmem:[%s1143 + $0x8c] sm:$0xf]
        %v1452 = vld [vmem:[%s1143 + $0x90] sm:$0xff]
        %v1453 = vld [vmem:[%s1143 + $0x98] sm:$0xf]
        %v1454 = vld [vmem:[%s1143 + $0x9c] sm:$0xff]
        %v1455 = vld [vmem:[%s1143 + $0xa4] sm:$0xf]
        %v1456 = vld [vmem:[%s1143 + $0xa8] sm:$0xff]
        %v1457 = vld [vmem:[%s1143 + $0xb0] sm:$0xf]
        %v1458 = vld [vmem:[%s1143 + $0xb4] sm:$0xff]
        %v1459 = vld [vmem:[%s1143 + $0xbc] sm:$0xf]
        %v1460 = vld [vmem:[%s1153] sm:$0x7]
        %v1462 = vperm.slane %v1460, 0
        %v1463 = vperm.slane %v1460, 1
        %v1464 = vperm.slane %v1460, 2
        %v1470 = vunpack.c.l.b16 %v1424
        %v1471 = vunpack.c.l.b16 %v1425
        %v1472 = vpack.c.b16 %v1471, %v1470
        %v1506 = vunpack.c.l.b16 %v1428
        %v1507 = vunpack.c.h.b16 %v1428
        %v1508 = vunpack.c.l.b16 %v1429
        %v1509 = vunpack.c.l.b16 %v1430
        %v1510 = vunpack.c.h.b16 %v1430
        %v1511 = vunpack.c.l.b16 %v1431
        %v1512 = vunpack.c.l.b16 %v1432
        %v1513 = vunpack.c.h.b16 %v1432
        %v1514 = vunpack.c.l.b16 %v1433
        %v1515 = vunpack.c.l.b16 %v1434
        %v1516 = vunpack.c.h.b16 %v1434
        %v1517 = vunpack.c.l.b16 %v1435
        %v1518 = vunpack.c.l.b16 %v1436
        %v1519 = vunpack.c.h.b16 %v1436
        %v1520 = vunpack.c.l.b16 %v1437
        %v1521 = vunpack.c.l.b16 %v1438
        %v1522 = vunpack.c.h.b16 %v1438
        %v1523 = vunpack.c.l.b16 %v1439
        %v1524 = vunpack.c.l.b16 %v1440
        %v1525 = vunpack.c.h.b16 %v1440
        %v1526 = vunpack.c.l.b16 %v1441
        %v1527 = vunpack.c.l.b16 %v1442
        %v1528 = vunpack.c.h.b16 %v1442
        %v1529 = vunpack.c.l.b16 %v1443
        %v1530 = vunpack.c.l.b16 %v1444
        %v1531 = vunpack.c.h.b16 %v1444
        %v1532 = vunpack.c.l.b16 %v1445
        %v1533 = vunpack.c.l.b16 %v1446
        %v1534 = vunpack.c.h.b16 %v1446
        %v1535 = vunpack.c.l.b16 %v1447
        %v1536 = vunpack.c.l.b16 %v1448
        %v1537 = vunpack.c.h.b16 %v1448
        %v1538 = vunpack.c.l.b16 %v1449
        %v1539 = vunpack.c.l.b16 %v1450
        %v1540 = vunpack.c.h.b16 %v1450
        %v1541 = vunpack.c.l.b16 %v1451
        %v1542 = vunpack.c.l.b16 %v1452
        %v1543 = vunpack.c.h.b16 %v1452
        %v1544 = vunpack.c.l.b16 %v1453
        %v1545 = vunpack.c.l.b16 %v1454
        %v1546 = vunpack.c.h.b16 %v1454
        %v1547 = vunpack.c.l.b16 %v1455
        %v1548 = vunpack.c.l.b16 %v1456
        %v1549 = vunpack.c.h.b16 %v1456
        %v1550 = vunpack.c.l.b16 %v1457
        %v1551 = vunpack.c.l.b16 %v1458
        %v1552 = vunpack.c.h.b16 %v1458
        %v1553 = vunpack.c.l.b16 %v1459
        %v1554 = vpack.c.b16 %v1509, %v1506
        %v1555 = vpack.c.b16 %v1510, %v1507
        %v1556 = vpack.c.b16 %v1511, %v1508
        %v1557 = vpack.c.b16 %v1515, %v1512
        %v1558 = vpack.c.b16 %v1516, %v1513
        %v1559 = vpack.c.b16 %v1517, %v1514
        %v1560 = vpack.c.b16 %v1521, %v1518
        %v1561 = vpack.c.b16 %v1522, %v1519
        %v1562 = vpack.c.b16 %v1523, %v1520
        %v1563 = vpack.c.b16 %v1527, %v1524
        %v1564 = vpack.c.b16 %v1528, %v1525
        %v1565 = vpack.c.b16 %v1529, %v1526
        %v1566 = vpack.c.b16 %v1533, %v1530
        %v1567 = vpack.c.b16 %v1534, %v1531
        %v1568 = vpack.c.b16 %v1535, %v1532
        %v1569 = vpack.c.b16 %v1539, %v1536
        %v1570 = vpack.c.b16 %v1540, %v1537
        %v1571 = vpack.c.b16 %v1541, %v1538
        %v1572 = vpack.c.b16 %v1545, %v1542
        %v1573 = vpack.c.b16 %v1546, %v1543
        %v1574 = vpack.c.b16 %v1547, %v1544
        %v1575 = vpack.c.b16 %v1551, %v1548
        %v1576 = vpack.c.b16 %v1552, %v1549
        %v1577 = vpack.c.b16 %v1553, %v1550
        %1602 = vmatpush.bf16.msra.mxu0 %v1575
        %1603 = vmatpush.bf16.msra.mxu0 %v1572
        %1604 = vmatpush.bf16.msra.mxu0 %v1569
        %1605 = vmatpush.bf16.msra.mxu0 %v1566
        %1606 = vmatpush.bf16.msra.mxu0 %v1563
        %1607 = vmatpush.bf16.msra.mxu0 %v1560
        %1608 = vmatpush.bf16.msra.mxu0 %v1557
        %1609 = vmatpush.bf16.msra.mxu0 %v1554
        %1610 = vmatmul.bf16.gmra.mxu0 %v1472
        %v1611 = vpop.f32.mrf.mxu0
        %v1612 = vadd.f32 %v1462, %v1611
        %v1613 = vpop.f32.mrf.mxu0
        %v1614 = vadd.f32 %v1462, %v1613
        %1615 = vdwg.mxu0
        %1616 = vmatpush.bf16.msra.mxu0 %v1576
        %1617 = vmatpush.bf16.msra.mxu0 %v1573
        %1618 = vmatpush.bf16.msra.mxu0 %v1570
        %1619 = vmatpush.bf16.msra.mxu0 %v1567
        %1620 = vmatpush.bf16.msra.mxu0 %v1564
        %1621 = vmatpush.bf16.msra.mxu0 %v1561
        %1622 = vmatpush.bf16.msra.mxu0 %v1558
        %1623 = vmatpush.bf16.msra.mxu0 %v1555
        %1624 = vmatmul.bf16.gmra.mxu0 %v1472
        %v1625 = vpop.f32.mrf.mxu0
        %v1626 = vadd.f32 %v1463, %v1625
        %v1627 = vpop.f32.mrf.mxu0
        %v1628 = vadd.f32 %v1463, %v1627
        %1629 = vdwg.mxu0
        %1630 = vmatpush.bf16.msra.mxu0 %v1577
        %1631 = vmatpush.bf16.msra.mxu0 %v1574
        %1632 = vmatpush.bf16.msra.mxu0 %v1571
        %1633 = vmatpush.bf16.msra.mxu0 %v1568
        %1634 = vmatpush.bf16.msra.mxu0 %v1565
        %1635 = vmatpush.bf16.msra.mxu0 %v1562
        %1636 = vmatpush.bf16.msra.mxu0 %v1559
        %1637 = vmatpush.bf16.msra.mxu0 %v1556
        %1638 = vmatmul.bf16.gmra.mxu0 %v1472
        %v1639 = vpop.f32.mrf.mxu0
        %v1640 = vadd.f32 %v1464, %v1639
        %v1641 = vpop.f32.mrf.mxu0
        %v1642 = vadd.f32 %v1464, %v1641
        %1643 = vdwg.mxu0
        %v1644 = vld [vmem:[#allocation7] sm:$0xff]
        %v1645 = vpack.c.bf16 %v1612, %v1612
        %1647 = vrot.lane.b32.xlu0 %v1645, 96
        %v1648 = vpop.permute.xlu0 %1647
        %1649 = vrot.lane.b32.xlu0 %v1645, 64
        %v1650 = vpop.permute.xlu0 %1649
        %1651 = vrot.lane.b32.xlu0 %v1645, 32
        %v1652 = vpop.permute.xlu0 %1651
        %v1655 = vpack.i.b16 %v1648, %v1645
        %v1656 = vshrl.u32 %v1645, 16
        %v1657 = vshrl.u32 %v1648, 16
        %v1658 = vpack.i.b16 %v1657, %v1656
        %v1661 = vpack.i.b16 %v1652, %v1650
        %v1662 = vshrl.u32 %v1650, 16
        %v1663 = vshrl.u32 %v1652, 16
        %v1664 = vpack.i.b16 %v1663, %v1662
        %v1667 = vunpack.c.l.s4 1983009808
        %v1668 = vunpack.c.0.s8 %v1667
        %v1669 = vperm.slane %v1655, %v1668
        %v1672 = vunpack.c.l.s4 1983009808
        %v1673 = vunpack.c.0.s8 %v1672
        %v1674 = vperm.slane %v1661, %v1673
        %v1675 = vrot.slane %v1674, 4
        %vm1676 = vcmask 1047556
        %v1677 = vsel %vm1676, %v1675, %v1669
        %v1678 = vrot.slane %v1669, 4
        %v1679 = vsel %vm1676, %v1674, %v1678
        %v1681 = vunpack.c.l.s4 1934713408
        %v1682 = vunpack.c.0.s8 %v1681
        %v1683 = vperm.slane %v1677, %v1682
        %v1685 = vunpack.c.l.s4 1934713408
        %v1686 = vunpack.c.0.s8 %v1685
        %v1687 = vperm.slane %v1679, %v1686
        %v1688 = vrot.slane %v1683, 4
        %v1689 = vsel %vm1676, 0, %v1688
        %v1690 = vrot.slane %v1687, 4
        %v1691 = vsel %vm1676, 0, %v1690
        %v1694 = vunpack.c.l.s4 1983009808
        %v1695 = vunpack.c.0.s8 %v1694
        %v1696 = vperm.slane %v1658, %v1695
        %v1699 = vunpack.c.l.s4 1983009808
        %v1700 = vunpack.c.0.s8 %v1699
        %v1701 = vperm.slane %v1664, %v1700
        %v1702 = vrot.slane %v1701, 4
        %v1703 = vsel %vm1676, %v1702, %v1696
        %v1704 = vrot.slane %v1696, 4
        %v1705 = vsel %vm1676, %v1701, %v1704
        %v1707 = vunpack.c.l.s4 1934713408
        %v1708 = vunpack.c.0.s8 %v1707
        %v1709 = vperm.slane %v1703, %v1708
        %v1711 = vunpack.c.l.s4 1934713408
        %v1712 = vunpack.c.0.s8 %v1711
        %v1713 = vperm.slane %v1705, %v1712
        %v1714 = vrot.slane %v1709, 4
        %v1715 = vsel %vm1676, 0, %v1714
        %v1716 = vrot.slane %v1713, 4
        %v1717 = vsel %vm1676, 0, %v1716
        %v1718 = vsel %vm1676, %v1690, %v1683
        %v1720 = vunpack.c.l.s4 1983009808
        %v1721 = vunpack.c.0.s8 %v1720
        %v1722 = vperm.slane %v1718, %v1721
        %v1723 = vrot.slane %v1691, 4
        %v1724 = vsel %vm1676, %v1723, %v1689
        %v1726 = vunpack.c.l.s4 1983009808
        %v1727 = vunpack.c.0.s8 %v1726
        %v1728 = vperm.slane %v1724, %v1727
        %v1729 = vrot.slane %v1728, 4
        %v1730 = vsel %vm1676, %v1729, %v1722
        %v1732 = vunpack.c.l.s4 1934713408
        %v1733 = vunpack.c.0.s8 %v1732
        %v1734 = vperm.slane %v1730, %v1733
        %v1735 = vrot.slane %v1734, 4
        %v1736 = vsel %vm1676, 0, %v1735
        %v1737 = vsel %vm1676, %v1716, %v1709
        %v1739 = vunpack.c.l.s4 1983009808
        %v1740 = vunpack.c.0.s8 %v1739
        %v1741 = vperm.slane %v1737, %v1740
        %v1742 = vrot.slane %v1717, 4
        %v1743 = vsel %vm1676, %v1742, %v1715
        %v1745 = vunpack.c.l.s4 1983009808
        %v1746 = vunpack.c.0.s8 %v1745
        %v1747 = vperm.slane %v1743, %v1746
        %v1748 = vrot.slane %v1747, 4
        %v1749 = vsel %vm1676, %v1748, %v1741
        %v1751 = vunpack.c.l.s4 1934713408
        %v1752 = vunpack.c.0.s8 %v1751
        %v1753 = vperm.slane %v1749, %v1752
        %v1754 = vrot.slane %v1753, 4
        %v1755 = vsel %vm1676, 0, %v1754
        %v1758 = vpack.i.b16 %v1753, %v1734
        %v1759 = vshrl.u32 %v1734, 16
        %v1760 = vshrl.u32 %v1753, 16
        %v1761 = vpack.i.b16 %v1760, %v1759
        %v1764 = vpack.i.b16 %v1755, %v1736
        %v1765 = vshrl.u32 %v1736, 16
        %v1766 = vshrl.u32 %v1755, 16
        %v1767 = vpack.i.b16 %v1766, %v1765
        %v1768 = vpack.c.bf16 %v1626, %v1626
        %1770 = vrot.lane.b32.xlu0 %v1768, 96
        %v1771 = vpop.permute.xlu0 %1770
        %1772 = vrot.lane.b32.xlu0 %v1768, 64
        %v1773 = vpop.permute.xlu0 %1772
        %1774 = vrot.lane.b32.xlu0 %v1768, 32
        %v1775 = vpop.permute.xlu0 %1774
        %v1778 = vpack.i.b16 %v1771, %v1768
        %v1779 = vshrl.u32 %v1768, 16
        %v1780 = vshrl.u32 %v1771, 16
        %v1781 = vpack.i.b16 %v1780, %v1779
        %v1784 = vpack.i.b16 %v1775, %v1773
        %v1785 = vshrl.u32 %v1773, 16
        %v1786 = vshrl.u32 %v1775, 16
        %v1787 = vpack.i.b16 %v1786, %v1785
        %v1790 = vunpack.c.l.s4 1983009808
        %v1791 = vunpack.c.0.s8 %v1790
        %v1792 = vperm.slane %v1778, %v1791
        %v1795 = vunpack.c.l.s4 1983009808
        %v1796 = vunpack.c.0.s8 %v1795
        %v1797 = vperm.slane %v1784, %v1796
        %v1798 = vrot.slane %v1797, 4
        %v1799 = vsel %vm1676, %v1798, %v1792
        %v1800 = vrot.slane %v1792, 4
        %v1801 = vsel %vm1676, %v1797, %v1800
        %v1803 = vunpack.c.l.s4 1934713408
        %v1804 = vunpack.c.0.s8 %v1803
        %v1805 = vperm.slane %v1799, %v1804
        %v1807 = vunpack.c.l.s4 1934713408
        %v1808 = vunpack.c.0.s8 %v1807
        %v1809 = vperm.slane %v1801, %v1808
        %v1810 = vrot.slane %v1805, 4
        %v1811 = vsel %vm1676, 0, %v1810
        %v1812 = vrot.slane %v1809, 4
        %v1813 = vsel %vm1676, 0, %v1812
        %v1816 = vunpack.c.l.s4 1983009808
        %v1817 = vunpack.c.0.s8 %v1816
        %v1818 = vperm.slane %v1781, %v1817
        %v1821 = vunpack.c.l.s4 1983009808
        %v1822 = vunpack.c.0.s8 %v1821
        %v1823 = vperm.slane %v1787, %v1822
        %v1824 = vrot.slane %v1823, 4
        %v1825 = vsel %vm1676, %v1824, %v1818
        %v1826 = vrot.slane %v1818, 4
        %v1827 = vsel %vm1676, %v1823, %v1826
        %v1829 = vunpack.c.l.s4 1934713408
        %v1830 = vunpack.c.0.s8 %v1829
        %v1831 = vperm.slane %v1825, %v1830
        %v1833 = vunpack.c.l.s4 1934713408
        %v1834 = vunpack.c.0.s8 %v1833
        %v1835 = vperm.slane %v1827, %v1834
        %v1836 = vrot.slane %v1831, 4
        %v1837 = vsel %vm1676, 0, %v1836
        %v1838 = vrot.slane %v1835, 4
        %v1839 = vsel %vm1676, 0, %v1838
        %v1840 = vsel %vm1676, %v1812, %v1805
        %v1842 = vunpack.c.l.s4 1983009808
        %v1843 = vunpack.c.0.s8 %v1842
        %v1844 = vperm.slane %v1840, %v1843
        %v1845 = vrot.slane %v1813, 4
        %v1846 = vsel %vm1676, %v1845, %v1811
        %v1848 = vunpack.c.l.s4 1983009808
        %v1849 = vunpack.c.0.s8 %v1848
        %v1850 = vperm.slane %v1846, %v1849
        %v1851 = vrot.slane %v1850, 4
        %v1852 = vsel %vm1676, %v1851, %v1844
        %v1854 = vunpack.c.l.s4 1934713408
        %v1855 = vunpack.c.0.s8 %v1854
        %v1856 = vperm.slane %v1852, %v1855
        %v1857 = vrot.slane %v1856, 4
        %v1858 = vsel %vm1676, 0, %v1857
        %v1859 = vsel %vm1676, %v1838, %v1831
        %v1861 = vunpack.c.l.s4 1983009808
        %v1862 = vunpack.c.0.s8 %v1861
        %v1863 = vperm.slane %v1859, %v1862
        %v1864 = vrot.slane %v1839, 4
        %v1865 = vsel %vm1676, %v1864, %v1837
        %v1867 = vunpack.c.l.s4 1983009808
        %v1868 = vunpack.c.0.s8 %v1867
        %v1869 = vperm.slane %v1865, %v1868
        %v1870 = vrot.slane %v1869, 4
        %v1871 = vsel %vm1676, %v1870, %v1863
        %v1873 = vunpack.c.l.s4 1934713408
        %v1874 = vunpack.c.0.s8 %v1873
        %v1875 = vperm.slane %v1871, %v1874
        %v1876 = vrot.slane %v1875, 4
        %v1877 = vsel %vm1676, 0, %v1876
        %v1880 = vpack.i.b16 %v1875, %v1856
        %v1881 = vshrl.u32 %v1856, 16
        %v1882 = vshrl.u32 %v1875, 16
        %v1883 = vpack.i.b16 %v1882, %v1881
        %v1886 = vpack.i.b16 %v1877, %v1858
        %v1887 = vshrl.u32 %v1858, 16
        %v1888 = vshrl.u32 %v1877, 16
        %v1889 = vpack.i.b16 %v1888, %v1887
        %v1890 = vpack.c.bf16 %v1640, %v1640
        %1892 = vrot.lane.b32.xlu0 %v1890, 96
        %v1893 = vpop.permute.xlu0 %1892
        %1894 = vrot.lane.b32.xlu0 %v1890, 64
        %v1895 = vpop.permute.xlu0 %1894
        %1896 = vrot.lane.b32.xlu0 %v1890, 32
        %v1897 = vpop.permute.xlu0 %1896
        %v1900 = vpack.i.b16 %v1893, %v1890
        %v1901 = vshrl.u32 %v1890, 16
        %v1902 = vshrl.u32 %v1893, 16
        %v1903 = vpack.i.b16 %v1902, %v1901
        %v1906 = vpack.i.b16 %v1897, %v1895
        %v1907 = vshrl.u32 %v1895, 16
        %v1908 = vshrl.u32 %v1897, 16
        %v1909 = vpack.i.b16 %v1908, %v1907
        %v1912 = vunpack.c.l.s4 1983009808
        %v1913 = vunpack.c.0.s8 %v1912
        %v1914 = vperm.slane %v1900, %v1913
        %v1917 = vunpack.c.l.s4 1983009808
        %v1918 = vunpack.c.0.s8 %v1917
        %v1919 = vperm.slane %v1906, %v1918
        %v1920 = vrot.slane %v1919, 4
        %v1921 = vsel %vm1676, %v1920, %v1914
        %v1922 = vrot.slane %v1914, 4
        %v1923 = vsel %vm1676, %v1919, %v1922
        %v1925 = vunpack.c.l.s4 1934713408
        %v1926 = vunpack.c.0.s8 %v1925
        %v1927 = vperm.slane %v1921, %v1926
        %v1929 = vunpack.c.l.s4 1934713408
        %v1930 = vunpack.c.0.s8 %v1929
        %v1931 = vperm.slane %v1923, %v1930
        %v1932 = vrot.slane %v1927, 4
        %v1933 = vsel %vm1676, 0, %v1932
        %v1934 = vrot.slane %v1931, 4
        %v1935 = vsel %vm1676, 0, %v1934
        %v1938 = vunpack.c.l.s4 1983009808
        %v1939 = vunpack.c.0.s8 %v1938
        %v1940 = vperm.slane %v1903, %v1939
        %v1943 = vunpack.c.l.s4 1983009808
        %v1944 = vunpack.c.0.s8 %v1943
        %v1945 = vperm.slane %v1909, %v1944
        %v1946 = vrot.slane %v1945, 4
        %v1947 = vsel %vm1676, %v1946, %v1940
        %v1948 = vrot.slane %v1940, 4
        %v1949 = vsel %vm1676, %v1945, %v1948
        %v1951 = vunpack.c.l.s4 1934713408
        %v1952 = vunpack.c.0.s8 %v1951
        %v1953 = vperm.slane %v1947, %v1952
        %v1955 = vunpack.c.l.s4 1934713408
        %v1956 = vunpack.c.0.s8 %v1955
        %v1957 = vperm.slane %v1949, %v1956
        %v1958 = vrot.slane %v1953, 4
        %v1959 = vsel %vm1676, 0, %v1958
        %v1960 = vrot.slane %v1957, 4
        %v1961 = vsel %vm1676, 0, %v1960
        %v1962 = vsel %vm1676, %v1934, %v1927
        %v1964 = vunpack.c.l.s4 1983009808
        %v1965 = vunpack.c.0.s8 %v1964
        %v1966 = vperm.slane %v1962, %v1965
        %v1967 = vrot.slane %v1935, 4
        %v1968 = vsel %vm1676, %v1967, %v1933
        %v1970 = vunpack.c.l.s4 1983009808
        %v1971 = vunpack.c.0.s8 %v1970
        %v1972 = vperm.slane %v1968, %v1971
        %v1973 = vrot.slane %v1972, 4
        %v1974 = vsel %vm1676, %v1973, %v1966
        %v1976 = vunpack.c.l.s4 1934713408
        %v1977 = vunpack.c.0.s8 %v1976
        %v1978 = vperm.slane %v1974, %v1977
        %v1979 = vrot.slane %v1978, 4
        %v1980 = vsel %vm1676, 0, %v1979
        %v1981 = vsel %vm1676, %v1960, %v1953
        %v1983 = vunpack.c.l.s4 1983009808
        %v1984 = vunpack.c.0.s8 %v1983
        %v1985 = vperm.slane %v1981, %v1984
        %v1986 = vrot.slane %v1961, 4
        %v1987 = vsel %vm1676, %v1986, %v1959
        %v1989 = vunpack.c.l.s4 1983009808
        %v1990 = vunpack.c.0.s8 %v1989
        %v1991 = vperm.slane %v1987, %v1990
        %v1992 = vrot.slane %v1991, 4
        %v1993 = vsel %vm1676, %v1992, %v1985
        %v1995 = vunpack.c.l.s4 1934713408
        %v1996 = vunpack.c.0.s8 %v1995
        %v1997 = vperm.slane %v1993, %v1996
        %v1998 = vrot.slane %v1997, 4
        %v1999 = vsel %vm1676, 0, %v1998
        %v2002 = vpack.i.b16 %v1997, %v1978
        %v2003 = vshrl.u32 %v1978, 16
        %v2004 = vshrl.u32 %v1997, 16
        %v2005 = vpack.i.b16 %v2004, %v2003
        %v2008 = vpack.i.b16 %v1999, %v1980
        %v2009 = vshrl.u32 %v1980, 16
        %v2010 = vshrl.u32 %v1999, 16
        %v2011 = vpack.i.b16 %v2010, %v2009
        %vm2012 = vcmask 261120
        %v2014 = vsel %vm2012, %v1758, 0
        %v2017 = vsel %vm2012, %v1880, 0
        %2019 = vmatpush.bf16.xpose.msra.mxu0 0
        %2020 = vmatpush.bf16.xpose.msra.mxu0 0
        %2021 = vmatpush.bf16.xpose.msra.mxu0 0
        %2022 = vmatpush.bf16.xpose.msra.mxu0 0
        %2023 = vmatpush.bf16.xpose.msra.mxu0 0
        %2024 = vmatpush.bf16.xpose.msra.mxu0 0
        %2025 = vmatpush.bf16.xpose.msra.mxu0 0
        %2026 = vmatpush.bf16.xpose.msra.mxu0 %v2017
        %2027 = vmatmul.bf16.gmra.mxu0 %v2014
        %v2028 = vpop.f32.mrf.mxu0
        %v2029 = vadd.f32 %v1644, %v2028
        %v2030 = vpop.f32.mrf.mxu0
        %2031 = vdwg.mxu0
        %v2033 = vsel %vm2012, %v1761, 0
        %v2036 = vsel %vm2012, %v1883, 0
        %2038 = vmatpush.bf16.xpose.msra.mxu0 0
        %2039 = vmatpush.bf16.xpose.msra.mxu0 0
        %2040 = vmatpush.bf16.xpose.msra.mxu0 0
        %2041 = vmatpush.bf16.xpose.msra.mxu0 0
        %2042 = vmatpush.bf16.xpose.msra.mxu0 0
        %2043 = vmatpush.bf16.xpose.msra.mxu0 0
        %2044 = vmatpush.bf16.xpose.msra.mxu0 0
        %2045 = vmatpush.bf16.xpose.msra.mxu0 %v2036
        %2046 = vmatmul.bf16.gmra.mxu0 %v2033
        %v2047 = vpop.f32.mrf.mxu0
        %v2048 = vadd.f32 %v1644, %v2047
        %v2049 = vpop.f32.mrf.mxu0
        %2050 = vdwg.mxu0
        %v2052 = vsel %vm2012, %v1764, 0
        %v2055 = vsel %vm2012, %v1886, 0
        %2057 = vmatpush.bf16.xpose.msra.mxu0 0
        %2058 = vmatpush.bf16.xpose.msra.mxu0 0
        %2059 = vmatpush.bf16.xpose.msra.mxu0 0
        %2060 = vmatpush.bf16.xpose.msra.mxu0 0
        %2061 = vmatpush.bf16.xpose.msra.mxu0 0
        %2062 = vmatpush.bf16.xpose.msra.mxu0 0
        %2063 = vmatpush.bf16.xpose.msra.mxu0 0
        %2064 = vmatpush.bf16.xpose.msra.mxu0 %v2055
        %2065 = vmatmul.bf16.gmra.mxu0 %v2052
        %v2066 = vpop.f32.mrf.mxu0
        %v2067 = vadd.f32 %v1644, %v2066
        %v2068 = vpop.f32.mrf.mxu0
        %2069 = vdwg.mxu0
        %v2071 = vsel %vm2012, %v1767, 0
        %v2074 = vsel %vm2012, %v1889, 0
        %2076 = vmatpush.bf16.xpose.msra.mxu0 0
        %2077 = vmatpush.bf16.xpose.msra.mxu0 0
        %2078 = vmatpush.bf16.xpose.msra.mxu0 0
        %2079 = vmatpush.bf16.xpose.msra.mxu0 0
        %2080 = vmatpush.bf16.xpose.msra.mxu0 0
        %2081 = vmatpush.bf16.xpose.msra.mxu0 0
        %2082 = vmatpush.bf16.xpose.msra.mxu0 0
        %2083 = vmatpush.bf16.xpose.msra.mxu0 %v2074
        %2084 = vmatmul.bf16.gmra.mxu0 %v2071
        %v2085 = vpop.f32.mrf.mxu0
        %v2086 = vadd.f32 %v1644, %v2085
        %v2087 = vpop.f32.mrf.mxu0
        %2088 = vdwg.mxu0
        %vm2089 = vcmask 64512
        %v2090 = vsel %vm2089, %v2029, -inf
        %2091 = vmax.xlane.f32.xlu0 %v2090
        %v2092 = vpop.xlane.xlu0 %2091
        %v2093 = vsel %vm2089, %v2048, -inf
        %2094 = vmax.xlane.f32.xlu0 %v2093
        %v2095 = vpop.xlane.xlu0 %2094
        %v2096 = vsel %vm2089, %v2067, -inf
        %2097 = vmax.xlane.f32.xlu0 %v2096
        %v2098 = vpop.xlane.xlu0 %2097
        %v2099 = vsel %vm2089, %v2086, -inf
        %2100 = vmax.xlane.f32.xlu0 %v2099
        %v2101 = vpop.xlane.xlu0 %2100
        %v2102 = vsub.f32 %v2029, %v2092
        %v2103 = vsub.f32 %v2048, %v2095
        %v2104 = vsub.f32 %v2067, %v2098
        %v2105 = vsub.f32 %v2086, %v2101
        %v2106 = vmul.f32 %v2102, 1.442695
        %v2107 = vpow.pop %v2106
        %v2108 = vmul.f32 %v2103, 1.442695
        %v2109 = vpow.pop %v2108
        %v2110 = vmul.f32 %v2104, 1.442695
        %v2111 = vpow.pop %v2110
        %v2112 = vmul.f32 %v2105, 1.442695
        %v2113 = vpow.pop %v2112
        %v2114 = vsel %vm2089, %v2107, 0.0
        %2115 = vadd.xlane.f32.xlu0 %v2114
        %v2116 = vpop.xlane.xlu0 %2115
        %v2117 = vsel %vm2089, %v2109, 0.0
        %2118 = vadd.xlane.f32.xlu0 %v2117
        %v2119 = vpop.xlane.xlu0 %2118
        %v2120 = vsel %vm2089, %v2111, 0.0
        %2121 = vadd.xlane.f32.xlu0 %v2120
        %v2122 = vpop.xlane.xlu0 %2121
        %v2123 = vsel %vm2089, %v2113, 0.0
        %2124 = vadd.xlane.f32.xlu0 %v2123
        %v2125 = vpop.xlane.xlu0 %2124
        %v2126 = vrcp.pop %v2116
        %v2127 = vrcp.pop %v2119
        %v2128 = vrcp.pop %v2122
        %v2129 = vrcp.pop %v2125
        %v2130 = vmul.f32 %v2107, %v2126
        %v2131 = vmul.f32 %v2109, %v2127
        %v2132 = vmul.f32 %v2111, %v2128
        %v2133 = vmul.f32 %v2113, %v2129
        %v2134 = vpack.c.bf16 %v2130, %v2130
        %v2135 = vpack.c.bf16 %v2131, %v2131
        %v2136 = vpack.c.bf16 %v2132, %v2132
        %v2137 = vpack.c.bf16 %v2133, %v2133
        %v2139 = vsel %vm2089, %v2134, 0
        %vm2141 = vcmask 1043456
        %v2143 = vsel %vm2141, %v2002, 0
        %2145 = vmatpush.bf16.msra.mxu0 0
        %2146 = vmatpush.bf16.msra.mxu0 0
        %2147 = vmatpush.bf16.msra.mxu0 0
        %2148 = vmatpush.bf16.msra.mxu0 0
        %2149 = vmatpush.bf16.msra.mxu0 0
        %2150 = vmatpush.bf16.msra.mxu0 0
        %2151 = vmatpush.bf16.msra.mxu0 0
        %2152 = vmatpush.bf16.msra.mxu0 %v2143
        %2153 = vmatmul.bf16.gmra.mxu0 %v2139
        %v2154 = vpop.f32.mrf.mxu0
        %v2155 = vadd.f32 0.0, %v2154
        %v2156 = vpop.f32.mrf.mxu0
        %2157 = vdwg.mxu0
        %v2159 = vsel %vm2089, %v2135, 0
        %v2162 = vsel %vm2141, %v2005, 0
        %2164 = vmatpush.bf16.msra.mxu0 0
        %2165 = vmatpush.bf16.msra.mxu0 0
        %2166 = vmatpush.bf16.msra.mxu0 0
        %2167 = vmatpush.bf16.msra.mxu0 0
        %2168 = vmatpush.bf16.msra.mxu0 0
        %2169 = vmatpush.bf16.msra.mxu0 0
        %2170 = vmatpush.bf16.msra.mxu0 0
        %2171 = vmatpush.bf16.msra.mxu0 %v2162
        %2172 = vmatmul.bf16.gmra.mxu0 %v2159
        %v2173 = vpop.f32.mrf.mxu0
        %v2174 = vadd.f32 0.0, %v2173
        %v2175 = vpop.f32.mrf.mxu0
        %2176 = vdwg.mxu0
        %v2178 = vsel %vm2089, %v2136, 0
        %v2181 = vsel %vm2141, %v2008, 0
        %2183 = vmatpush.bf16.msra.mxu0 0
        %2184 = vmatpush.bf16.msra.mxu0 0
        %2185 = vmatpush.bf16.msra.mxu0 0
        %2186 = vmatpush.bf16.msra.mxu0 0
        %2187 = vmatpush.bf16.msra.mxu0 0
        %2188 = vmatpush.bf16.msra.mxu0 0
        %2189 = vmatpush.bf16.msra.mxu0 0
        %2190 = vmatpush.bf16.msra.mxu0 %v2181
        %2191 = vmatmul.bf16.gmra.mxu0 %v2178
        %v2192 = vpop.f32.mrf.mxu0
        %v2193 = vadd.f32 0.0, %v2192
        %v2194 = vpop.f32.mrf.mxu0
        %2195 = vdwg.mxu0
        %v2197 = vsel %vm2089, %v2137, 0
        %v2200 = vsel %vm2141, %v2011, 0
        %2202 = vmatpush.bf16.msra.mxu0 0
        %2203 = vmatpush.bf16.msra.mxu0 0
        %2204 = vmatpush.bf16.msra.mxu0 0
        %2205 = vmatpush.bf16.msra.mxu0 0
        %2206 = vmatpush.bf16.msra.mxu0 0
        %2207 = vmatpush.bf16.msra.mxu0 0
        %2208 = vmatpush.bf16.msra.mxu0 0
        %2209 = vmatpush.bf16.msra.mxu0 %v2200
        %2210 = vmatmul.bf16.gmra.mxu0 %v2197
        %v2211 = vpop.f32.mrf.mxu0
        %v2212 = vadd.f32 0.0, %v2211
        %v2213 = vpop.f32.mrf.mxu0
        %2214 = vdwg.mxu0
        %v2215 = vrot.slane %v2193, 4
        %vm2216 = vcmask 1047556
        %v2217 = vsel %vm2216, %v2215, %v2155
        %v2218 = vrot.slane %v2155, 4
        %v2219 = vsel %vm2216, %v2193, %v2218
        %v2221 = vunpack.c.l.s4 1983009808
        %v2222 = vunpack.c.0.s8 %v2221
        %v2223 = vperm.slane %v2217, %v2222
        %v2225 = vunpack.c.l.s4 1983009808
        %v2226 = vunpack.c.0.s8 %v2225
        %v2227 = vperm.slane %v2219, %v2226
        %v2228 = vrot.slane %v2212, 4
        %v2229 = vsel %vm2216, %v2228, %v2174
        %v2230 = vrot.slane %v2174, 4
        %v2231 = vsel %vm2216, %v2212, %v2230
        %v2233 = vunpack.c.l.s4 1983009808
        %v2234 = vunpack.c.0.s8 %v2233
        %v2235 = vperm.slane %v2229, %v2234
        %v2237 = vunpack.c.l.s4 1983009808
        %v2238 = vunpack.c.0.s8 %v2237
        %v2239 = vperm.slane %v2231, %v2238
        %v2240 = vrot.slane %v2235, 4
        %v2241 = vsel %vm2216, %v2240, %v2223
        %v2242 = vrot.slane %v2223, 4
        %v2243 = vsel %vm2216, %v2235, %v2242
        %v2245 = vunpack.c.l.s4 1934713408
        %v2246 = vunpack.c.0.s8 %v2245
        %v2247 = vperm.slane %v2241, %v2246
        %v2249 = vunpack.c.l.s4 1934713408
        %v2250 = vunpack.c.0.s8 %v2249
        %v2251 = vperm.slane %v2243, %v2250
        %v2252 = vrot.slane %v2239, 4
        %v2253 = vsel %vm2216, %v2252, %v2227
        %v2254 = vrot.slane %v2227, 4
        %v2255 = vsel %vm2216, %v2239, %v2254
        %v2257 = vunpack.c.l.s4 1934713408
        %v2258 = vunpack.c.0.s8 %v2257
        %v2259 = vperm.slane %v2253, %v2258
        %v2261 = vunpack.c.l.s4 1934713408
        %v2262 = vunpack.c.0.s8 %v2261
        %v2263 = vperm.slane %v2255, %v2262
        %v2264 = vrot.slane %v2247, 4
        %v2265 = vsel %vm2216, 0.0, %v2264
        %v2266 = vrot.slane %v2251, 4
        %v2267 = vsel %vm2216, 0.0, %v2266
        %v2268 = vrot.slane %v2259, 4
        %v2269 = vsel %vm2216, 0.0, %v2268
        %v2270 = vrot.slane %v2263, 4
        %v2271 = vsel %vm2216, 0.0, %v2270
        %v2272 = vsel %vm2216, %v2266, %v2247
        %v2274 = vunpack.c.l.s4 1983009808
        %v2275 = vunpack.c.0.s8 %v2274
        %v2276 = vperm.slane %v2272, %v2275
        %v2277 = vrot.slane %v2267, 4
        %v2278 = vsel %vm2216, %v2277, %v2265
        %v2280 = vunpack.c.l.s4 1983009808
        %v2281 = vunpack.c.0.s8 %v2280
        %v2282 = vperm.slane %v2278, %v2281
        %v2283 = vsel %vm2216, %v2270, %v2259
        %v2285 = vunpack.c.l.s4 1983009808
        %v2286 = vunpack.c.0.s8 %v2285
        %v2287 = vperm.slane %v2283, %v2286
        %v2288 = vrot.slane %v2271, 4
        %v2289 = vsel %vm2216, %v2288, %v2269
        %v2291 = vunpack.c.l.s4 1983009808
        %v2292 = vunpack.c.0.s8 %v2291
        %v2293 = vperm.slane %v2289, %v2292
        %v2294 = vrot.slane %v2282, 4
        %v2295 = vsel %vm2216, %v2294, %v2276
        %v2296 = vrot.slane %v2276, 4
        %v2297 = vsel %vm2216, %v2282, %v2296
        %v2299 = vunpack.c.l.s4 1934713408
        %v2300 = vunpack.c.0.s8 %v2299
        %v2301 = vperm.slane %v2295, %v2300
        %v2303 = vunpack.c.l.s4 1934713408
        %v2304 = vunpack.c.0.s8 %v2303
        %v2305 = vperm.slane %v2297, %v2304
        %v2306 = vrot.slane %v2293, 4
        %v2307 = vsel %vm2216, %v2306, %v2287
        %v2308 = vrot.slane %v2287, 4
        %v2309 = vsel %vm2216, %v2293, %v2308
        %v2311 = vunpack.c.l.s4 1934713408
        %v2312 = vunpack.c.0.s8 %v2311
        %v2313 = vperm.slane %v2307, %v2312
        %v2315 = vunpack.c.l.s4 1934713408
        %v2316 = vunpack.c.0.s8 %v2315
        %v2317 = vperm.slane %v2309, %v2316
        %v2318 = vrot.slane %v2313, 4
        %v2319 = vsel %vm2216, %v2318, %v2301
        %v2320 = vrot.slane %v2301, 4
        %v2321 = vsel %vm2216, %v2313, %v2320
        %v2322 = vrot.slane %v2317, 4
        %v2323 = vsel %vm2216, %v2322, %v2305
        %v2324 = vrot.slane %v2305, 4
        %v2325 = vsel %vm2216, %v2317, %v2324
        %2327 = vrot.lane.b32.xlu0 %v2321, 32
        %v2328 = vpop.permute.xlu0 %2327
        %2331 = vrot.lane.b32.xlu0 %v2323, 64
        %v2332 = vpop.permute.xlu0 %2331
        %2335 = vrot.lane.b32.xlu0 %v2325, 96
        %v2336 = vpop.permute.xlu0 %2335
        %v2338 = vsel %vm2012, %v2319, %v2328
        %vm2339 = vcmask 523264
        %v2340 = vsel %vm2339, %v2338, %v2332
        %vm2341 = vcmask 785408
        %v2342 = vsel %vm2341, %v2340, %v2336
        %s2343 = scalar_lea.vmem [#allocation7], 8
        %v2344 = vld [vmem:[%s2343] sm:$0xff]
        %v2345 = vpack.c.bf16 %v1614, %v1614
        %2347 = vrot.lane.b32.xlu0 %v2345, 96
        %v2348 = vpop.permute.xlu0 %2347
        %2349 = vrot.lane.b32.xlu0 %v2345, 64
        %v2350 = vpop.permute.xlu0 %2349
        %2351 = vrot.lane.b32.xlu0 %v2345, 32
        %v2352 = vpop.permute.xlu0 %2351
        %v2355 = vpack.i.b16 %v2348, %v2345
        %v2356 = vshrl.u32 %v2345, 16
        %v2357 = vshrl.u32 %v2348, 16
        %v2358 = vpack.i.b16 %v2357, %v2356
        %v2361 = vpack.i.b16 %v2352, %v2350
        %v2362 = vshrl.u32 %v2350, 16
        %v2363 = vshrl.u32 %v2352, 16
        %v2364 = vpack.i.b16 %v2363, %v2362
        %v2367 = vunpack.c.l.s4 1983009808
        %v2368 = vunpack.c.0.s8 %v2367
        %v2369 = vperm.slane %v2355, %v2368
        %v2372 = vunpack.c.l.s4 1983009808
        %v2373 = vunpack.c.0.s8 %v2372
        %v2374 = vperm.slane %v2361, %v2373
        %v2375 = vrot.slane %v2374, 4
        %v2376 = vsel %vm1676, %v2375, %v2369
        %v2377 = vrot.slane %v2369, 4
        %v2378 = vsel %vm1676, %v2374, %v2377
        %v2380 = vunpack.c.l.s4 1934713408
        %v2381 = vunpack.c.0.s8 %v2380
        %v2382 = vperm.slane %v2376, %v2381
        %v2384 = vunpack.c.l.s4 1934713408
        %v2385 = vunpack.c.0.s8 %v2384
        %v2386 = vperm.slane %v2378, %v2385
        %v2387 = vrot.slane %v2382, 4
        %v2388 = vsel %vm1676, 0, %v2387
        %v2389 = vrot.slane %v2386, 4
        %v2390 = vsel %vm1676, 0, %v2389
        %v2393 = vunpack.c.l.s4 1983009808
        %v2394 = vunpack.c.0.s8 %v2393
        %v2395 = vperm.slane %v2358, %v2394
        %v2398 = vunpack.c.l.s4 1983009808
        %v2399 = vunpack.c.0.s8 %v2398
        %v2400 = vperm.slane %v2364, %v2399
        %v2401 = vrot.slane %v2400, 4
        %v2402 = vsel %vm1676, %v2401, %v2395
        %v2403 = vrot.slane %v2395, 4
        %v2404 = vsel %vm1676, %v2400, %v2403
        %v2406 = vunpack.c.l.s4 1934713408
        %v2407 = vunpack.c.0.s8 %v2406
        %v2408 = vperm.slane %v2402, %v2407
        %v2410 = vunpack.c.l.s4 1934713408
        %v2411 = vunpack.c.0.s8 %v2410
        %v2412 = vperm.slane %v2404, %v2411
        %v2413 = vrot.slane %v2408, 4
        %v2414 = vsel %vm1676, 0, %v2413
        %v2415 = vrot.slane %v2412, 4
        %v2416 = vsel %vm1676, 0, %v2415
        %v2417 = vsel %vm1676, %v2389, %v2382
        %v2419 = vunpack.c.l.s4 1983009808
        %v2420 = vunpack.c.0.s8 %v2419
        %v2421 = vperm.slane %v2417, %v2420
        %v2422 = vrot.slane %v2390, 4
        %v2423 = vsel %vm1676, %v2422, %v2388
        %v2425 = vunpack.c.l.s4 1983009808
        %v2426 = vunpack.c.0.s8 %v2425
        %v2427 = vperm.slane %v2423, %v2426
        %v2428 = vrot.slane %v2427, 4
        %v2429 = vsel %vm1676, %v2428, %v2421
        %v2431 = vunpack.c.l.s4 1934713408
        %v2432 = vunpack.c.0.s8 %v2431
        %v2433 = vperm.slane %v2429, %v2432
        %v2434 = vrot.slane %v2433, 4
        %v2435 = vsel %vm1676, 0, %v2434
        %v2436 = vsel %vm1676, %v2415, %v2408
        %v2438 = vunpack.c.l.s4 1983009808
        %v2439 = vunpack.c.0.s8 %v2438
        %v2440 = vperm.slane %v2436, %v2439
        %v2441 = vrot.slane %v2416, 4
        %v2442 = vsel %vm1676, %v2441, %v2414
        %v2444 = vunpack.c.l.s4 1983009808
        %v2445 = vunpack.c.0.s8 %v2444
        %v2446 = vperm.slane %v2442, %v2445
        %v2447 = vrot.slane %v2446, 4
        %v2448 = vsel %vm1676, %v2447, %v2440
        %v2450 = vunpack.c.l.s4 1934713408
        %v2451 = vunpack.c.0.s8 %v2450
        %v2452 = vperm.slane %v2448, %v2451
        %v2453 = vrot.slane %v2452, 4
        %v2454 = vsel %vm1676, 0, %v2453
        %v2457 = vpack.i.b16 %v2452, %v2433
        %v2458 = vshrl.u32 %v2433, 16
        %v2459 = vshrl.u32 %v2452, 16
        %v2460 = vpack.i.b16 %v2459, %v2458
        %v2463 = vpack.i.b16 %v2454, %v2435
        %v2464 = vshrl.u32 %v2435, 16
        %v2465 = vshrl.u32 %v2454, 16
        %v2466 = vpack.i.b16 %v2465, %v2464
        %v2467 = vpack.c.bf16 %v1628, %v1628
        %2469 = vrot.lane.b32.xlu0 %v2467, 96
        %v2470 = vpop.permute.xlu0 %2469
        %2471 = vrot.lane.b32.xlu0 %v2467, 64
        %v2472 = vpop.permute.xlu0 %2471
        %2473 = vrot.lane.b32.xlu0 %v2467, 32
        %v2474 = vpop.permute.xlu0 %2473
        %v2477 = vpack.i.b16 %v2470, %v2467
        %v2478 = vshrl.u32 %v2467, 16
        %v2479 = vshrl.u32 %v2470, 16
        %v2480 = vpack.i.b16 %v2479, %v2478
        %v2483 = vpack.i.b16 %v2474, %v2472
        %v2484 = vshrl.u32 %v2472, 16
        %v2485 = vshrl.u32 %v2474, 16
        %v2486 = vpack.i.b16 %v2485, %v2484
        %v2489 = vunpack.c.l.s4 1983009808
        %v2490 = vunpack.c.0.s8 %v2489
        %v2491 = vperm.slane %v2477, %v2490
        %v2494 = vunpack.c.l.s4 1983009808
        %v2495 = vunpack.c.0.s8 %v2494
        %v2496 = vperm.slane %v2483, %v2495
        %v2497 = vrot.slane %v2496, 4
        %v2498 = vsel %vm1676, %v2497, %v2491
        %v2499 = vrot.slane %v2491, 4
        %v2500 = vsel %vm1676, %v2496, %v2499
        %v2502 = vunpack.c.l.s4 1934713408
        %v2503 = vunpack.c.0.s8 %v2502
        %v2504 = vperm.slane %v2498, %v2503
        %v2506 = vunpack.c.l.s4 1934713408
        %v2507 = vunpack.c.0.s8 %v2506
        %v2508 = vperm.slane %v2500, %v2507
        %v2509 = vrot.slane %v2504, 4
        %v2510 = vsel %vm1676, 0, %v2509
        %v2511 = vrot.slane %v2508, 4
        %v2512 = vsel %vm1676, 0, %v2511
        %v2515 = vunpack.c.l.s4 1983009808
        %v2516 = vunpack.c.0.s8 %v2515
        %v2517 = vperm.slane %v2480, %v2516
        %v2520 = vunpack.c.l.s4 1983009808
        %v2521 = vunpack.c.0.s8 %v2520
        %v2522 = vperm.slane %v2486, %v2521
        %v2523 = vrot.slane %v2522, 4
        %v2524 = vsel %vm1676, %v2523, %v2517
        %v2525 = vrot.slane %v2517, 4
        %v2526 = vsel %vm1676, %v2522, %v2525
        %v2528 = vunpack.c.l.s4 1934713408
        %v2529 = vunpack.c.0.s8 %v2528
        %v2530 = vperm.slane %v2524, %v2529
        %v2532 = vunpack.c.l.s4 1934713408
        %v2533 = vunpack.c.0.s8 %v2532
        %v2534 = vperm.slane %v2526, %v2533
        %v2535 = vrot.slane %v2530, 4
        %v2536 = vsel %vm1676, 0, %v2535
        %v2537 = vrot.slane %v2534, 4
        %v2538 = vsel %vm1676, 0, %v2537
        %v2539 = vsel %vm1676, %v2511, %v2504
        %v2541 = vunpack.c.l.s4 1983009808
        %v2542 = vunpack.c.0.s8 %v2541
        %v2543 = vperm.slane %v2539, %v2542
        %v2544 = vrot.slane %v2512, 4
        %v2545 = vsel %vm1676, %v2544, %v2510
        %v2547 = vunpack.c.l.s4 1983009808
        %v2548 = vunpack.c.0.s8 %v2547
        %v2549 = vperm.slane %v2545, %v2548
        %v2550 = vrot.slane %v2549, 4
        %v2551 = vsel %vm1676, %v2550, %v2543
        %v2553 = vunpack.c.l.s4 1934713408
        %v2554 = vunpack.c.0.s8 %v2553
        %v2555 = vperm.slane %v2551, %v2554
        %v2556 = vrot.slane %v2555, 4
        %v2557 = vsel %vm1676, 0, %v2556
        %v2558 = vsel %vm1676, %v2537, %v2530
        %v2560 = vunpack.c.l.s4 1983009808
        %v2561 = vunpack.c.0.s8 %v2560
        %v2562 = vperm.slane %v2558, %v2561
        %v2563 = vrot.slane %v2538, 4
        %v2564 = vsel %vm1676, %v2563, %v2536
        %v2566 = vunpack.c.l.s4 1983009808
        %v2567 = vunpack.c.0.s8 %v2566
        %v2568 = vperm.slane %v2564, %v2567
        %v2569 = vrot.slane %v2568, 4
        %v2570 = vsel %vm1676, %v2569, %v2562
        %v2572 = vunpack.c.l.s4 1934713408
        %v2573 = vunpack.c.0.s8 %v2572
        %v2574 = vperm.slane %v2570, %v2573
        %v2575 = vrot.slane %v2574, 4
        %v2576 = vsel %vm1676, 0, %v2575
        %v2579 = vpack.i.b16 %v2574, %v2555
        %v2580 = vshrl.u32 %v2555, 16
        %v2581 = vshrl.u32 %v2574, 16
        %v2582 = vpack.i.b16 %v2581, %v2580
        %v2585 = vpack.i.b16 %v2576, %v2557
        %v2586 = vshrl.u32 %v2557, 16
        %v2587 = vshrl.u32 %v2576, 16
        %v2588 = vpack.i.b16 %v2587, %v2586
        %v2589 = vpack.c.bf16 %v1642, %v1642
        %2591 = vrot.lane.b32.xlu0 %v2589, 96
        %v2592 = vpop.permute.xlu0 %2591
        %2593 = vrot.lane.b32.xlu0 %v2589, 64
        %v2594 = vpop.permute.xlu0 %2593
        %2595 = vrot.lane.b32.xlu0 %v2589, 32
        %v2596 = vpop.permute.xlu0 %2595
        %v2599 = vpack.i.b16 %v2592, %v2589
        %v2600 = vshrl.u32 %v2589, 16
        %v2601 = vshrl.u32 %v2592, 16
        %v2602 = vpack.i.b16 %v2601, %v2600
        %v2605 = vpack.i.b16 %v2596, %v2594
        %v2606 = vshrl.u32 %v2594, 16
        %v2607 = vshrl.u32 %v2596, 16
        %v2608 = vpack.i.b16 %v2607, %v2606
        %v2611 = vunpack.c.l.s4 1983009808
        %v2612 = vunpack.c.0.s8 %v2611
        %v2613 = vperm.slane %v2599, %v2612
        %v2616 = vunpack.c.l.s4 1983009808
        %v2617 = vunpack.c.0.s8 %v2616
        %v2618 = vperm.slane %v2605, %v2617
        %v2619 = vrot.slane %v2618, 4
        %v2620 = vsel %vm1676, %v2619, %v2613
        %v2621 = vrot.slane %v2613, 4
        %v2622 = vsel %vm1676, %v2618, %v2621
        %v2624 = vunpack.c.l.s4 1934713408
        %v2625 = vunpack.c.0.s8 %v2624
        %v2626 = vperm.slane %v2620, %v2625
        %v2628 = vunpack.c.l.s4 1934713408
        %v2629 = vunpack.c.0.s8 %v2628
        %v2630 = vperm.slane %v2622, %v2629
        %v2631 = vrot.slane %v2626, 4
        %v2632 = vsel %vm1676, 0, %v2631
        %v2633 = vrot.slane %v2630, 4
        %v2634 = vsel %vm1676, 0, %v2633
        %v2637 = vunpack.c.l.s4 1983009808
        %v2638 = vunpack.c.0.s8 %v2637
        %v2639 = vperm.slane %v2602, %v2638
        %v2642 = vunpack.c.l.s4 1983009808
        %v2643 = vunpack.c.0.s8 %v2642
        %v2644 = vperm.slane %v2608, %v2643
        %v2645 = vrot.slane %v2644, 4
        %v2646 = vsel %vm1676, %v2645, %v2639
        %v2647 = vrot.slane %v2639, 4
        %v2648 = vsel %vm1676, %v2644, %v2647
        %v2650 = vunpack.c.l.s4 1934713408
        %v2651 = vunpack.c.0.s8 %v2650
        %v2652 = vperm.slane %v2646, %v2651
        %v2654 = vunpack.c.l.s4 1934713408
        %v2655 = vunpack.c.0.s8 %v2654
        %v2656 = vperm.slane %v2648, %v2655
        %v2657 = vrot.slane %v2652, 4
        %v2658 = vsel %vm1676, 0, %v2657
        %v2659 = vrot.slane %v2656, 4
        %v2660 = vsel %vm1676, 0, %v2659
        %v2661 = vsel %vm1676, %v2633, %v2626
        %v2663 = vunpack.c.l.s4 1983009808
        %v2664 = vunpack.c.0.s8 %v2663
        %v2665 = vperm.slane %v2661, %v2664
        %v2666 = vrot.slane %v2634, 4
        %v2667 = vsel %vm1676, %v2666, %v2632
        %v2669 = vunpack.c.l.s4 1983009808
        %v2670 = vunpack.c.0.s8 %v2669
        %v2671 = vperm.slane %v2667, %v2670
        %v2672 = vrot.slane %v2671, 4
        %v2673 = vsel %vm1676, %v2672, %v2665
        %v2675 = vunpack.c.l.s4 1934713408
        %v2676 = vunpack.c.0.s8 %v2675
        %v2677 = vperm.slane %v2673, %v2676
        %v2678 = vrot.slane %v2677, 4
        %v2679 = vsel %vm1676, 0, %v2678
        %v2680 = vsel %vm1676, %v2659, %v2652
        %v2682 = vunpack.c.l.s4 1983009808
        %v2683 = vunpack.c.0.s8 %v2682
        %v2684 = vperm.slane %v2680, %v2683
        %v2685 = vrot.slane %v2660, 4
        %v2686 = vsel %vm1676, %v2685, %v2658
        %v2688 = vunpack.c.l.s4 1983009808
        %v2689 = vunpack.c.0.s8 %v2688
        %v2690 = vperm.slane %v2686, %v2689
        %v2691 = vrot.slane %v2690, 4
        %v2692 = vsel %vm1676, %v2691, %v2684
        %v2694 = vunpack.c.l.s4 1934713408
        %v2695 = vunpack.c.0.s8 %v2694
        %v2696 = vperm.slane %v2692, %v2695
        %v2697 = vrot.slane %v2696, 4
        %v2698 = vsel %vm1676, 0, %v2697
        %v2701 = vpack.i.b16 %v2696, %v2677
        %v2702 = vshrl.u32 %v2677, 16
        %v2703 = vshrl.u32 %v2696, 16
        %v2704 = vpack.i.b16 %v2703, %v2702
        %v2707 = vpack.i.b16 %v2698, %v2679
        %v2708 = vshrl.u32 %v2679, 16
        %v2709 = vshrl.u32 %v2698, 16
        %v2710 = vpack.i.b16 %v2709, %v2708
        %v2712 = vsel %vm2012, %v2457, 0
        %v2715 = vsel %vm2012, %v2579, 0
        %2717 = vmatpush.bf16.xpose.msra.mxu0 0
        %2718 = vmatpush.bf16.xpose.msra.mxu0 0
        %2719 = vmatpush.bf16.xpose.msra.mxu0 0
        %2720 = vmatpush.bf16.xpose.msra.mxu0 0
        %2721 = vmatpush.bf16.xpose.msra.mxu0 0
        %2722 = vmatpush.bf16.xpose.msra.mxu0 0
        %2723 = vmatpush.bf16.xpose.msra.mxu0 0
        %2724 = vmatpush.bf16.xpose.msra.mxu0 %v2715
        %2725 = vmatmul.bf16.gmra.mxu0 %v2712
        %v2726 = vpop.f32.mrf.mxu0
        %v2727 = vadd.f32 %v2344, %v2726
        %v2728 = vpop.f32.mrf.mxu0
        %2729 = vdwg.mxu0
        %v2731 = vsel %vm2012, %v2460, 0
        %v2734 = vsel %vm2012, %v2582, 0
        %2736 = vmatpush.bf16.xpose.msra.mxu0 0
        %2737 = vmatpush.bf16.xpose.msra.mxu0 0
        %2738 = vmatpush.bf16.xpose.msra.mxu0 0
        %2739 = vmatpush.bf16.xpose.msra.mxu0 0
        %2740 = vmatpush.bf16.xpose.msra.mxu0 0
        %2741 = vmatpush.bf16.xpose.msra.mxu0 0
        %2742 = vmatpush.bf16.xpose.msra.mxu0 0
        %2743 = vmatpush.bf16.xpose.msra.mxu0 %v2734
        %2744 = vmatmul.bf16.gmra.mxu0 %v2731
        %v2745 = vpop.f32.mrf.mxu0
        %v2746 = vadd.f32 %v2344, %v2745
        %v2747 = vpop.f32.mrf.mxu0
        %2748 = vdwg.mxu0
        %v2750 = vsel %vm2012, %v2463, 0
        %v2753 = vsel %vm2012, %v2585, 0
        %2755 = vmatpush.bf16.xpose.msra.mxu0 0
        %2756 = vmatpush.bf16.xpose.msra.mxu0 0
        %2757 = vmatpush.bf16.xpose.msra.mxu0 0
        %2758 = vmatpush.bf16.xpose.msra.mxu0 0
        %2759 = vmatpush.bf16.xpose.msra.mxu0 0
        %2760 = vmatpush.bf16.xpose.msra.mxu0 0
        %2761 = vmatpush.bf16.xpose.msra.mxu0 0
        %2762 = vmatpush.bf16.xpose.msra.mxu0 %v2753
        %2763 = vmatmul.bf16.gmra.mxu0 %v2750
        %v2764 = vpop.f32.mrf.mxu0
        %v2765 = vadd.f32 %v2344, %v2764
        %v2766 = vpop.f32.mrf.mxu0
        %2767 = vdwg.mxu0
        %v2769 = vsel %vm2012, %v2466, 0
        %v2772 = vsel %vm2012, %v2588, 0
        %2774 = vmatpush.bf16.xpose.msra.mxu0 0
        %2775 = vmatpush.bf16.xpose.msra.mxu0 0
        %2776 = vmatpush.bf16.xpose.msra.mxu0 0
        %2777 = vmatpush.bf16.xpose.msra.mxu0 0
        %2778 = vmatpush.bf16.xpose.msra.mxu0 0
        %2779 = vmatpush.bf16.xpose.msra.mxu0 0
        %2780 = vmatpush.bf16.xpose.msra.mxu0 0
        %2781 = vmatpush.bf16.xpose.msra.mxu0 %v2772
        %2782 = vmatmul.bf16.gmra.mxu0 %v2769
        %v2783 = vpop.f32.mrf.mxu0
        %v2784 = vadd.f32 %v2344, %v2783
        %v2785 = vpop.f32.mrf.mxu0
        %2786 = vdwg.mxu0
        %v2787 = vsel %vm2089, %v2727, -inf
        %2788 = vmax.xlane.f32.xlu0 %v2787
        %v2789 = vpop.xlane.xlu0 %2788
        %v2790 = vsel %vm2089, %v2746, -inf
        %2791 = vmax.xlane.f32.xlu0 %v2790
        %v2792 = vpop.xlane.xlu0 %2791
        %v2793 = vsel %vm2089, %v2765, -inf
        %2794 = vmax.xlane.f32.xlu0 %v2793
        %v2795 = vpop.xlane.xlu0 %2794
        %v2796 = vsel %vm2089, %v2784, -inf
        %2797 = vmax.xlane.f32.xlu0 %v2796
        %v2798 = vpop.xlane.xlu0 %2797
        %v2799 = vsub.f32 %v2727, %v2789
        %v2800 = vsub.f32 %v2746, %v2792
        %v2801 = vsub.f32 %v2765, %v2795
        %v2802 = vsub.f32 %v2784, %v2798
        %v2803 = vmul.f32 %v2799, 1.442695
        %v2804 = vpow.pop %v2803
        %v2805 = vmul.f32 %v2800, 1.442695
        %v2806 = vpow.pop %v2805
        %v2807 = vmul.f32 %v2801, 1.442695
        %v2808 = vpow.pop %v2807
        %v2809 = vmul.f32 %v2802, 1.442695
        %v2810 = vpow.pop %v2809
        %v2811 = vsel %vm2089, %v2804, 0.0
        %2812 = vadd.xlane.f32.xlu0 %v2811
        %v2813 = vpop.xlane.xlu0 %2812
        %v2814 = vsel %vm2089, %v2806, 0.0
        %2815 = vadd.xlane.f32.xlu0 %v2814
        %v2816 = vpop.xlane.xlu0 %2815
        %v2817 = vsel %vm2089, %v2808, 0.0
        %2818 = vadd.xlane.f32.xlu0 %v2817
        %v2819 = vpop.xlane.xlu0 %2818
        %v2820 = vsel %vm2089, %v2810, 0.0
        %2821 = vadd.xlane.f32.xlu0 %v2820
        %v2822 = vpop.xlane.xlu0 %2821
        %v2823 = vrcp.pop %v2813
        %v2824 = vrcp.pop %v2816
        %v2825 = vrcp.pop %v2819
        %v2826 = vrcp.pop %v2822
        %v2827 = vmul.f32 %v2804, %v2823
        %v2828 = vmul.f32 %v2806, %v2824
        %v2829 = vmul.f32 %v2808, %v2825
        %v2830 = vmul.f32 %v2810, %v2826
        %v2831 = vpack.c.bf16 %v2827, %v2827
        %v2832 = vpack.c.bf16 %v2828, %v2828
        %v2833 = vpack.c.bf16 %v2829, %v2829
        %v2834 = vpack.c.bf16 %v2830, %v2830
        %v2836 = vsel %vm2089, %v2831, 0
        %v2839 = vsel %vm2141, %v2701, 0
        %2841 = vmatpush.bf16.msra.mxu0 0
        %2842 = vmatpush.bf16.msra.mxu0 0
        %2843 = vmatpush.bf16.msra.mxu0 0
        %2844 = vmatpush.bf16.msra.mxu0 0
        %2845 = vmatpush.bf16.msra.mxu0 0
        %2846 = vmatpush.bf16.msra.mxu0 0
        %2847 = vmatpush.bf16.msra.mxu0 0
        %2848 = vmatpush.bf16.msra.mxu0 %v2839
        %2849 = vmatmul.bf16.gmra.mxu0 %v2836
        %v2850 = vpop.f32.mrf.mxu0
        %v2851 = vadd.f32 0.0, %v2850
        %v2852 = vpop.f32.mrf.mxu0
        %2853 = vdwg.mxu0
        %v2855 = vsel %vm2089, %v2832, 0
        %v2858 = vsel %vm2141, %v2704, 0
        %2860 = vmatpush.bf16.msra.mxu0 0
        %2861 = vmatpush.bf16.msra.mxu0 0
        %2862 = vmatpush.bf16.msra.mxu0 0
        %2863 = vmatpush.bf16.msra.mxu0 0
        %2864 = vmatpush.bf16.msra.mxu0 0
        %2865 = vmatpush.bf16.msra.mxu0 0
        %2866 = vmatpush.bf16.msra.mxu0 0
        %2867 = vmatpush.bf16.msra.mxu0 %v2858
        %2868 = vmatmul.bf16.gmra.mxu0 %v2855
        %v2869 = vpop.f32.mrf.mxu0
        %v2870 = vadd.f32 0.0, %v2869
        %v2871 = vpop.f32.mrf.mxu0
        %2872 = vdwg.mxu0
        %v2874 = vsel %vm2089, %v2833, 0
        %v2877 = vsel %vm2141, %v2707, 0
        %2879 = vmatpush.bf16.msra.mxu0 0
        %2880 = vmatpush.bf16.msra.mxu0 0
        %2881 = vmatpush.bf16.msra.mxu0 0
        %2882 = vmatpush.bf16.msra.mxu0 0
        %2883 = vmatpush.bf16.msra.mxu0 0
        %2884 = vmatpush.bf16.msra.mxu0 0
        %2885 = vmatpush.bf16.msra.mxu0 0
        %2886 = vmatpush.bf16.msra.mxu0 %v2877
        %2887 = vmatmul.bf16.gmra.mxu0 %v2874
        %v2888 = vpop.f32.mrf.mxu0
        %v2889 = vadd.f32 0.0, %v2888
        %v2890 = vpop.f32.mrf.mxu0
        %2891 = vdwg.mxu0
        %v2893 = vsel %vm2089, %v2834, 0
        %v2896 = vsel %vm2141, %v2710, 0
        %2898 = vmatpush.bf16.msra.mxu0 0
        %2899 = vmatpush.bf16.msra.mxu0 0
        %2900 = vmatpush.bf16.msra.mxu0 0
        %2901 = vmatpush.bf16.msra.mxu0 0
        %2902 = vmatpush.bf16.msra.mxu0 0
        %2903 = vmatpush.bf16.msra.mxu0 0
        %2904 = vmatpush.bf16.msra.mxu0 0
        %2905 = vmatpush.bf16.msra.mxu0 %v2896
        %2906 = vmatmul.bf16.gmra.mxu0 %v2893
        %v2907 = vpop.f32.mrf.mxu0
        %v2908 = vadd.f32 0.0, %v2907
        %v2909 = vpop.f32.mrf.mxu0
        %2910 = vdwg.mxu0
        %v2911 = vrot.slane %v2889, 4
        %v2912 = vsel %vm2216, %v2911, %v2851
        %v2913 = vrot.slane %v2851, 4
        %v2914 = vsel %vm2216, %v2889, %v2913
        %v2916 = vunpack.c.l.s4 1983009808
        %v2917 = vunpack.c.0.s8 %v2916
        %v2918 = vperm.slane %v2912, %v2917
        %v2920 = vunpack.c.l.s4 1983009808
        %v2921 = vunpack.c.0.s8 %v2920
        %v2922 = vperm.slane %v2914, %v2921
        %v2923 = vrot.slane %v2908, 4
        %v2924 = vsel %vm2216, %v2923, %v2870
        %v2925 = vrot.slane %v2870, 4
        %v2926 = vsel %vm2216, %v2908, %v2925
        %v2928 = vunpack.c.l.s4 1983009808
        %v2929 = vunpack.c.0.s8 %v2928
        %v2930 = vperm.slane %v2924, %v2929
        %v2932 = vunpack.c.l.s4 1983009808
        %v2933 = vunpack.c.0.s8 %v2932
        %v2934 = vperm.slane %v2926, %v2933
        %v2935 = vrot.slane %v2930, 4
        %v2936 = vsel %vm2216, %v2935, %v2918
        %v2937 = vrot.slane %v2918, 4
        %v2938 = vsel %vm2216, %v2930, %v2937
        %v2940 = vunpack.c.l.s4 1934713408
        %v2941 = vunpack.c.0.s8 %v2940
        %v2942 = vperm.slane %v2936, %v2941
        %v2944 = vunpack.c.l.s4 1934713408
        %v2945 = vunpack.c.0.s8 %v2944
        %v2946 = vperm.slane %v2938, %v2945
        %v2947 = vrot.slane %v2934, 4
        %v2948 = vsel %vm2216, %v2947, %v2922
        %v2949 = vrot.slane %v2922, 4
        %v2950 = vsel %vm2216, %v2934, %v2949
        %v2952 = vunpack.c.l.s4 1934713408
        %v2953 = vunpack.c.0.s8 %v2952
        %v2954 = vperm.slane %v2948, %v2953
        %v2956 = vunpack.c.l.s4 1934713408
        %v2957 = vunpack.c.0.s8 %v2956
        %v2958 = vperm.slane %v2950, %v2957
        %v2959 = vrot.slane %v2942, 4
        %v2960 = vsel %vm2216, 0.0, %v2959
        %v2961 = vrot.slane %v2946, 4
        %v2962 = vsel %vm2216, 0.0, %v2961
        %v2963 = vrot.slane %v2954, 4
        %v2964 = vsel %vm2216, 0.0, %v2963
        %v2965 = vrot.slane %v2958, 4
        %v2966 = vsel %vm2216, 0.0, %v2965
        %v2967 = vsel %vm2216, %v2961, %v2942
        %v2969 = vunpack.c.l.s4 1983009808
        %v2970 = vunpack.c.0.s8 %v2969
        %v2971 = vperm.slane %v2967, %v2970
        %v2972 = vrot.slane %v2962, 4
        %v2973 = vsel %vm2216, %v2972, %v2960
        %v2975 = vunpack.c.l.s4 1983009808
        %v2976 = vunpack.c.0.s8 %v2975
        %v2977 = vperm.slane %v2973, %v2976
        %v2978 = vsel %vm2216, %v2965, %v2954
        %v2980 = vunpack.c.l.s4 1983009808
        %v2981 = vunpack.c.0.s8 %v2980
        %v2982 = vperm.slane %v2978, %v2981
        %v2983 = vrot.slane %v2966, 4
        %v2984 = vsel %vm2216, %v2983, %v2964
        %v2986 = vunpack.c.l.s4 1983009808
        %v2987 = vunpack.c.0.s8 %v2986
        %v2988 = vperm.slane %v2984, %v2987
        %v2989 = vrot.slane %v2977, 4
        %v2990 = vsel %vm2216, %v2989, %v2971
        %v2991 = vrot.slane %v2971, 4
        %v2992 = vsel %vm2216, %v2977, %v2991
        %v2994 = vunpack.c.l.s4 1934713408
        %v2995 = vunpack.c.0.s8 %v2994
        %v2996 = vperm.slane %v2990, %v2995
        %v2998 = vunpack.c.l.s4 1934713408
        %v2999 = vunpack.c.0.s8 %v2998
        %v3000 = vperm.slane %v2992, %v2999
        %v3001 = vrot.slane %v2988, 4
        %v3002 = vsel %vm2216, %v3001, %v2982
        %v3003 = vrot.slane %v2982, 4
        %v3004 = vsel %vm2216, %v2988, %v3003
        %v3006 = vunpack.c.l.s4 1934713408
        %v3007 = vunpack.c.0.s8 %v3006
        %v3008 = vperm.slane %v3002, %v3007
        %v3010 = vunpack.c.l.s4 1934713408
        %v3011 = vunpack.c.0.s8 %v3010
        %v3012 = vperm.slane %v3004, %v3011
        %v3013 = vrot.slane %v3008, 4
        %v3014 = vsel %vm2216, %v3013, %v2996
        %v3015 = vrot.slane %v2996, 4
        %v3016 = vsel %vm2216, %v3008, %v3015
        %v3017 = vrot.slane %v3012, 4
        %v3018 = vsel %vm2216, %v3017, %v3000
        %v3019 = vrot.slane %v3000, 4
        %v3020 = vsel %vm2216, %v3012, %v3019
        %3022 = vrot.lane.b32.xlu0 %v3016, 32
        %v3023 = vpop.permute.xlu0 %3022
        %3026 = vrot.lane.b32.xlu0 %v3018, 64
        %v3027 = vpop.permute.xlu0 %3026
        %3030 = vrot.lane.b32.xlu0 %v3020, 96
        %v3031 = vpop.permute.xlu0 %3030
        %v3033 = vsel %vm2012, %v3014, %v3023
        %v3034 = vsel %vm2339, %v3033, %v3027
        %v3035 = vsel %vm2341, %v3034, %v3031
        %v3036 = vpack.c.bf16 %v3035, %v2342
        %v3037 = vld [vmem:[%s1163] sm:$0xf]
        %v3038 = vld [vmem:[%s1163 + $0x4] sm:$0xf]
        %v3039 = vld [vmem:[%s1163 + $0x8] sm:$0xf]
        %v3040 = vld [vmem:[%s1163 + $0xc] sm:$0xf]
        %v3041 = vld [vmem:[%s1163 + $0x10] sm:$0xf]
        %v3042 = vld [vmem:[%s1163 + $0x14] sm:$0xf]
        %v3043 = vld [vmem:[%s1163 + $0x18] sm:$0xf]
        %v3044 = vld [vmem:[%s1163 + $0x1c] sm:$0xf]
        %v3045 = vld [vmem:[%s1163 + $0x20] sm:$0xf]
        %v3046 = vld [vmem:[%s1163 + $0x24] sm:$0xf]
        %v3047 = vld [vmem:[%s1163 + $0x28] sm:$0xf]
        %v3048 = vld [vmem:[%s1163 + $0x2c] sm:$0xf]
        %v3049 = vld [vmem:[%s1163 + $0x30] sm:$0xf]
        %v3050 = vld [vmem:[%s1163 + $0x34] sm:$0xf]
        %v3051 = vld [vmem:[%s1163 + $0x38] sm:$0xf]
        %v3052 = vld [vmem:[%s1163 + $0x3c] sm:$0xf]
        %v3053 = vld [vmem:[%s1172] sm:$0x1]
        %v3055 = vperm.slane %v3053, 0
        %v3073 = vunpack.c.l.b16 %v3037
        %v3074 = vunpack.c.l.b16 %v3038
        %v3075 = vunpack.c.l.b16 %v3039
        %v3076 = vunpack.c.l.b16 %v3040
        %v3077 = vunpack.c.l.b16 %v3041
        %v3078 = vunpack.c.l.b16 %v3042
        %v3079 = vunpack.c.l.b16 %v3043
        %v3080 = vunpack.c.l.b16 %v3044
        %v3081 = vunpack.c.l.b16 %v3045
        %v3082 = vunpack.c.l.b16 %v3046
        %v3083 = vunpack.c.l.b16 %v3047
        %v3084 = vunpack.c.l.b16 %v3048
        %v3085 = vunpack.c.l.b16 %v3049
        %v3086 = vunpack.c.l.b16 %v3050
        %v3087 = vunpack.c.l.b16 %v3051
        %v3088 = vunpack.c.l.b16 %v3052
        %v3089 = vpack.c.b16 %v3074, %v3073
        %v3090 = vpack.c.b16 %v3076, %v3075
        %v3091 = vpack.c.b16 %v3078, %v3077
        %v3092 = vpack.c.b16 %v3080, %v3079
        %v3093 = vpack.c.b16 %v3082, %v3081
        %v3094 = vpack.c.b16 %v3084, %v3083
        %v3095 = vpack.c.b16 %v3086, %v3085
        %v3096 = vpack.c.b16 %v3088, %v3087
        %3105 = vmatpush.bf16.msra.mxu0 %v3096
        %3106 = vmatpush.bf16.msra.mxu0 %v3095
        %3107 = vmatpush.bf16.msra.mxu0 %v3094
        %3108 = vmatpush.bf16.msra.mxu0 %v3093
        %3109 = vmatpush.bf16.msra.mxu0 %v3092
        %3110 = vmatpush.bf16.msra.mxu0 %v3091
        %3111 = vmatpush.bf16.msra.mxu0 %v3090
        %3112 = vmatpush.bf16.msra.mxu0 %v3089
        %3113 = vmatmul.bf16.gmra.mxu0 %v3036
        %v3114 = vpop.f32.mrf.mxu0
        %v3115 = vadd.f32 %v3055, %v3114
        %v3116 = vpop.f32.mrf.mxu0
        %v3117 = vadd.f32 %v3055, %v3116
        %3118 = vdwg.mxu0
        %v3119 = vadd.f32 %v1426, %v3115
        %v3120 = vadd.f32 %v1427, %v3117
        %v3121 = vld [vmem:[%s1181] sm:$0x1]
        %v3122 = vld [vmem:[%s1190] sm:$0x1]
        %3123 = vadd.xlane.f32.xlu0 %v3119
        %v3124 = vpop.xlane.xlu0 %3123
        %3125 = vadd.xlane.f32.xlu0 %v3120
        %v3126 = vpop.xlane.xlu0 %3125
        %v3127 = vrcp.pop 128.0
        %v3128 = vmul.f32 128.0, %v3127
        %v3129 = vsub.f32 1.0, %v3128
        %v3130 = vmul.f32 %v3127, %v3129
        %v3131 = vadd.f32 %v3127, %v3130
        %vm3132 = vweird.f32 %v3127
        %v3133 = vsel %vm3132, %v3127, %v3131
        %v3134 = vmul.f32 %v3124, %v3133
        %v3135 = vmul.f32 %v3126, %v3133
        %v3136 = vsub.f32 %v3119, %v3134
        %v3137 = vsub.f32 %v3120, %v3135
        %v3138 = vmul.f32 %v3136, %v3136
        %v3139 = vmul.f32 %v3137, %v3137
        %3140 = vadd.xlane.f32.xlu0 %v3138
        %v3141 = vpop.xlane.xlu0 %3140
        %3142 = vadd.xlane.f32.xlu0 %v3139
        %v3143 = vpop.xlane.xlu0 %3142
        %v3144 = vmul.f32 %v3141, %v3133
        %v3145 = vmul.f32 %v3143, %v3133
        %v3146 = vadd.f32 %v3144, 1e-05
        %v3147 = vadd.f32 %v3145, 1e-05
        %v3148 = vrsqrt.pop %v3146
        %v3149 = vmul.f32 %v3148, %v3146
        %v3150 = vmul.f32 %v3149, %v3148
        %v3151 = vmul.f32 0.5, %v3150
        %v3152 = vsub.f32 1.5, %v3151
        %v3153 = vmul.f32 %v3148, %v3152
        %vm3154 = vweird.f32 %v3146
        %vm3155 = vweird.f32 %v3148
        %vm3156 = vmor %vm3154, %vm3155
        %v3157 = vsel %vm3156, %v3148, %v3153
        %v3158 = vrsqrt.pop %v3147
        %v3159 = vmul.f32 %v3158, %v3147
        %v3160 = vmul.f32 %v3159, %v3158
        %v3161 = vmul.f32 0.5, %v3160
        %v3162 = vsub.f32 1.5, %v3161
        %v3163 = vmul.f32 %v3158, %v3162
        %vm3164 = vweird.f32 %v3147
        %vm3165 = vweird.f32 %v3158
        %vm3166 = vmor %vm3164, %vm3165
        %v3167 = vsel %vm3166, %v3158, %v3163
        %v3168 = vmul.f32 %v3136, %v3157
        %v3169 = vmul.f32 %v3137, %v3167
        %v3171 = vperm.slane %v3121, 0
        %v3173 = vmul.f32 %v3168, %v3171
        %v3174 = vmul.f32 %v3169, %v3171
        %v3176 = vperm.slane %v3122, 0
        %v3178 = vadd.f32 %v3173, %v3176
        %v3179 = vadd.f32 %v3174, %v3176
        %v3180 = vpack.c.bf16 %v3179, %v3178
        %v3181 = vld [vmem:[%s1200] sm:$0xf]
        %v3182 = vld [vmem:[%s1200 + $0x4] sm:$0xf]
        %v3183 = vld [vmem:[%s1200 + $0x8] sm:$0xf]
        %v3184 = vld [vmem:[%s1200 + $0xc] sm:$0xf]
        %v3185 = vld [vmem:[%s1200 + $0x10] sm:$0xf]
        %v3186 = vld [vmem:[%s1200 + $0x14] sm:$0xf]
        %v3187 = vld [vmem:[%s1200 + $0x18] sm:$0xf]
        %v3188 = vld [vmem:[%s1200 + $0x1c] sm:$0xf]
        %v3189 = vld [vmem:[%s1200 + $0x20] sm:$0xf]
        %v3190 = vld [vmem:[%s1200 + $0x24] sm:$0xf]
        %v3191 = vld [vmem:[%s1200 + $0x28] sm:$0xf]
        %v3192 = vld [vmem:[%s1200 + $0x2c] sm:$0xf]
        %v3193 = vld [vmem:[%s1200 + $0x30] sm:$0xf]
        %v3194 = vld [vmem:[%s1200 + $0x34] sm:$0xf]
        %v3195 = vld [vmem:[%s1200 + $0x38] sm:$0xf]
        %v3196 = vld [vmem:[%s1200 + $0x3c] sm:$0xf]
        %v3197 = vld [vmem:[%s1387] sm:$0x1]
        %v3199 = vperm.slane %v3197, 0
        %v3217 = vunpack.c.l.b16 %v3181
        %v3218 = vunpack.c.l.b16 %v3182
        %v3219 = vunpack.c.l.b16 %v3183
        %v3220 = vunpack.c.l.b16 %v3184
        %v3221 = vunpack.c.l.b16 %v3185
        %v3222 = vunpack.c.l.b16 %v3186
        %v3223 = vunpack.c.l.b16 %v3187
        %v3224 = vunpack.c.l.b16 %v3188
        %v3225 = vunpack.c.l.b16 %v3189
        %v3226 = vunpack.c.l.b16 %v3190
        %v3227 = vunpack.c.l.b16 %v3191
        %v3228 = vunpack.c.l.b16 %v3192
        %v3229 = vunpack.c.l.b16 %v3193
        %v3230 = vunpack.c.l.b16 %v3194
        %v3231 = vunpack.c.l.b16 %v3195
        %v3232 = vunpack.c.l.b16 %v3196
        %v3233 = vpack.c.b16 %v3218, %v3217
        %v3234 = vpack.c.b16 %v3220, %v3219
        %v3235 = vpack.c.b16 %v3222, %v3221
        %v3236 = vpack.c.b16 %v3224, %v3223
        %v3237 = vpack.c.b16 %v3226, %v3225
        %v3238 = vpack.c.b16 %v3228, %v3227
        %v3239 = vpack.c.b16 %v3230, %v3229
        %v3240 = vpack.c.b16 %v3232, %v3231
        %3249 = vmatpush.bf16.msra.mxu0 %v3240
        %3250 = vmatpush.bf16.msra.mxu0 %v3239
        %3251 = vmatpush.bf16.msra.mxu0 %v3238
        %3252 = vmatpush.bf16.msra.mxu0 %v3237
        %3253 = vmatpush.bf16.msra.mxu0 %v3236
        %3254 = vmatpush.bf16.msra.mxu0 %v3235
        %3255 = vmatpush.bf16.msra.mxu0 %v3234
        %3256 = vmatpush.bf16.msra.mxu0 %v3233
        %3257 = vmatmul.bf16.gmra.mxu0 %v3180
        %v3258 = vpop.f32.mrf.mxu0
        %v3259 = vadd.f32 %v3199, %v3258
        %v3260 = vpop.f32.mrf.mxu0
        %v3261 = vadd.f32 %v3199, %v3260
        %3262 = vdwg.mxu0
        %v3263 = vld [vmem:[#allocation5] sm:$0xf]
        %v3264 = vld [vmem:[#allocation5 + $0x4] sm:$0xf]
        %v3265 = vld [vmem:[#allocation5 + $0x8] sm:$0xf]
        %v3266 = vld [vmem:[#allocation5 + $0xc] sm:$0xf]
        %v3267 = vld [vmem:[%s1210] sm:$0xff]
        %v3268 = vld [vmem:[%s1210 + $0x8] sm:$0xff]
        %v3269 = vld [vmem:[%s1210 + $0x10] sm:$0xff]
        %v3270 = vld [vmem:[%s1210 + $0x18] sm:$0xff]
        %v3271 = vld [vmem:[%s1210 + $0x20] sm:$0xff]
        %v3272 = vld [vmem:[%s1210 + $0x28] sm:$0xff]
        %v3273 = vld [vmem:[%s1210 + $0x30] sm:$0xff]
        %v3274 = vld [vmem:[%s1210 + $0x38] sm:$0xff]
        %v3275 = vld [vmem:[%s1210 + $0x40] sm:$0xff]
        %v3276 = vld [vmem:[%s1210 + $0x48] sm:$0xff]
        %v3277 = vld [vmem:[%s1210 + $0x50] sm:$0xff]
        %v3278 = vld [vmem:[%s1210 + $0x58] sm:$0xff]
        %v3279 = vld [vmem:[%s1210 + $0x60] sm:$0xff]
        %v3280 = vld [vmem:[%s1210 + $0x68] sm:$0xff]
        %v3281 = vld [vmem:[%s1210 + $0x70] sm:$0xff]
        %v3282 = vld [vmem:[%s1210 + $0x78] sm:$0xff]
        %v3283 = vld [vmem:[%s1391] sm:$0x3]
        %v3285 = vperm.slane %v3283, 0
        %v3286 = vperm.slane %v3283, 1
        %v3293 = vunpack.c.l.b16 %v3263
        %v3294 = vunpack.c.l.b16 %v3264
        %v3295 = vunpack.c.l.b16 %v3265
        %v3296 = vunpack.c.l.b16 %v3266
        %v3297 = vpack.c.b16 %v3294, %v3293
        %v3298 = vpack.c.b16 %v3296, %v3295
        %v3317 = vunpack.c.l.b16 %v3267
        %v3318 = vunpack.c.h.b16 %v3267
        %v3319 = vunpack.c.l.b16 %v3268
        %v3320 = vunpack.c.h.b16 %v3268
        %v3321 = vunpack.c.l.b16 %v3269
        %v3322 = vunpack.c.h.b16 %v3269
        %v3323 = vunpack.c.l.b16 %v3270
        %v3324 = vunpack.c.h.b16 %v3270
        %v3325 = vunpack.c.l.b16 %v3271
        %v3326 = vunpack.c.h.b16 %v3271
        %v3327 = vunpack.c.l.b16 %v3272
        %v3328 = vunpack.c.h.b16 %v3272
        %v3329 = vunpack.c.l.b16 %v3273
        %v3330 = vunpack.c.h.b16 %v3273
        %v3331 = vunpack.c.l.b16 %v3274
        %v3332 = vunpack.c.h.b16 %v3274
        %v3333 = vunpack.c.l.b16 %v3275
        %v3334 = vunpack.c.h.b16 %v3275
        %v3335 = vunpack.c.l.b16 %v3276
        %v3336 = vunpack.c.h.b16 %v3276
        %v3337 = vunpack.c.l.b16 %v3277
        %v3338 = vunpack.c.h.b16 %v3277
        %v3339 = vunpack.c.l.b16 %v3278
        %v3340 = vunpack.c.h.b16 %v3278
        %v3341 = vunpack.c.l.b16 %v3279
        %v3342 = vunpack.c.h.b16 %v3279
        %v3343 = vunpack.c.l.b16 %v3280
        %v3344 = vunpack.c.h.b16 %v3280
        %v3345 = vunpack.c.l.b16 %v3281
        %v3346 = vunpack.c.h.b16 %v3281
        %v3347 = vunpack.c.l.b16 %v3282
        %v3348 = vunpack.c.h.b16 %v3282
        %v3349 = vpack.c.b16 %v3319, %v3317
        %v3350 = vpack.c.b16 %v3320, %v3318
        %v3351 = vpack.c.b16 %v3323, %v3321
        %v3352 = vpack.c.b16 %v3324, %v3322
        %v3353 = vpack.c.b16 %v3327, %v3325
        %v3354 = vpack.c.b16 %v3328, %v3326
        %v3355 = vpack.c.b16 %v3331, %v3329
        %v3356 = vpack.c.b16 %v3332, %v3330
        %v3357 = vpack.c.b16 %v3335, %v3333
        %v3358 = vpack.c.b16 %v3336, %v3334
        %v3359 = vpack.c.b16 %v3339, %v3337
        %v3360 = vpack.c.b16 %v3340, %v3338
        %v3361 = vpack.c.b16 %v3343, %v3341
        %v3362 = vpack.c.b16 %v3344, %v3342
        %v3363 = vpack.c.b16 %v3347, %v3345
        %v3364 = vpack.c.b16 %v3348, %v3346
        %3381 = vmatpush.bf16.msra.mxu0 %v3363
        %3382 = vmatpush.bf16.msra.mxu0 %v3361
        %3383 = vmatpush.bf16.msra.mxu0 %v3359
        %3384 = vmatpush.bf16.msra.mxu0 %v3357
        %3385 = vmatpush.bf16.msra.mxu0 %v3355
        %3386 = vmatpush.bf16.msra.mxu0 %v3353
        %3387 = vmatpush.bf16.msra.mxu0 %v3351
        %3388 = vmatpush.bf16.msra.mxu0 %v3349
        %3389 = vmatmul.bf16.gmra.mxu0 %v3297
        %v3390 = vpop.f32.mrf.mxu0
        %v3391 = vadd.f32 %v3285, %v3390
        %v3392 = vpop.f32.mrf.mxu0
        %v3393 = vadd.f32 %v3285, %v3392
        %3394 = vmatmul.bf16.gmra.mxu0 %v3298
        %v3395 = vpop.f32.mrf.mxu0
        %v3396 = vadd.f32 %v3285, %v3395
        %v3397 = vpop.f32.mrf.mxu0
        %v3398 = vadd.f32 %v3285, %v3397
        %3399 = vdwg.mxu0
        %3400 = vmatpush.bf16.msra.mxu0 %v3364
        %3401 = vmatpush.bf16.msra.mxu0 %v3362
        %3402 = vmatpush.bf16.msra.mxu0 %v3360
        %3403 = vmatpush.bf16.msra.mxu0 %v3358
        %3404 = vmatpush.bf16.msra.mxu0 %v3356
        %3405 = vmatpush.bf16.msra.mxu0 %v3354
        %3406 = vmatpush.bf16.msra.mxu0 %v3352
        %3407 = vmatpush.bf16.msra.mxu0 %v3350
        %3408 = vmatmul.bf16.gmra.mxu0 %v3297
        %v3409 = vpop.f32.mrf.mxu0
        %v3410 = vadd.f32 %v3286, %v3409
        %v3411 = vpop.f32.mrf.mxu0
        %v3412 = vadd.f32 %v3286, %v3411
        %3413 = vmatmul.bf16.gmra.mxu0 %v3298
        %v3414 = vpop.f32.mrf.mxu0
        %v3415 = vadd.f32 %v3286, %v3414
        %v3416 = vpop.f32.mrf.mxu0
        %v3417 = vadd.f32 %v3286, %v3416
        %3418 = vdwg.mxu0
        %v3419 = vld [vmem:[#allocation8] sm:$0x1]
        %v3420 = vpack.c.bf16 %v3259, %v3259
        %3422 = vrot.lane.b32.xlu0 %v3420, 96
        %v3423 = vpop.permute.xlu0 %3422
        %3424 = vrot.lane.b32.xlu0 %v3420, 64
        %v3425 = vpop.permute.xlu0 %3424
        %3426 = vrot.lane.b32.xlu0 %v3420, 32
        %v3427 = vpop.permute.xlu0 %3426
        %v3430 = vpack.i.b16 %v3423, %v3420
        %v3431 = vshrl.u32 %v3420, 16
        %v3432 = vshrl.u32 %v3423, 16
        %v3433 = vpack.i.b16 %v3432, %v3431
        %v3436 = vpack.i.b16 %v3427, %v3425
        %v3437 = vshrl.u32 %v3425, 16
        %v3438 = vshrl.u32 %v3427, 16
        %v3439 = vpack.i.b16 %v3438, %v3437
        %v3442 = vunpack.c.l.s4 1983009808
        %v3443 = vunpack.c.0.s8 %v3442
        %v3444 = vperm.slane %v3430, %v3443
        %v3447 = vunpack.c.l.s4 1983009808
        %v3448 = vunpack.c.0.s8 %v3447
        %v3449 = vperm.slane %v3436, %v3448
        %v3450 = vrot.slane %v3449, 4
        %v3451 = vsel %vm1676, %v3450, %v3444
        %v3452 = vrot.slane %v3444, 4
        %v3453 = vsel %vm1676, %v3449, %v3452
        %v3455 = vunpack.c.l.s4 1934713408
        %v3456 = vunpack.c.0.s8 %v3455
        %v3457 = vperm.slane %v3451, %v3456
        %v3459 = vunpack.c.l.s4 1934713408
        %v3460 = vunpack.c.0.s8 %v3459
        %v3461 = vperm.slane %v3453, %v3460
        %v3462 = vrot.slane %v3457, 4
        %v3463 = vsel %vm1676, 0, %v3462
        %v3464 = vrot.slane %v3461, 4
        %v3465 = vsel %vm1676, 0, %v3464
        %v3468 = vunpack.c.l.s4 1983009808
        %v3469 = vunpack.c.0.s8 %v3468
        %v3470 = vperm.slane %v3433, %v3469
        %v3473 = vunpack.c.l.s4 1983009808
        %v3474 = vunpack.c.0.s8 %v3473
        %v3475 = vperm.slane %v3439, %v3474
        %v3476 = vrot.slane %v3475, 4
        %v3477 = vsel %vm1676, %v3476, %v3470
        %v3478 = vrot.slane %v3470, 4
        %v3479 = vsel %vm1676, %v3475, %v3478
        %v3481 = vunpack.c.l.s4 1934713408
        %v3482 = vunpack.c.0.s8 %v3481
        %v3483 = vperm.slane %v3477, %v3482
        %v3485 = vunpack.c.l.s4 1934713408
        %v3486 = vunpack.c.0.s8 %v3485
        %v3487 = vperm.slane %v3479, %v3486
        %v3488 = vrot.slane %v3483, 4
        %v3489 = vsel %vm1676, 0, %v3488
        %v3490 = vrot.slane %v3487, 4
        %v3491 = vsel %vm1676, 0, %v3490
        %v3492 = vsel %vm1676, %v3464, %v3457
        %v3494 = vunpack.c.l.s4 1983009808
        %v3495 = vunpack.c.0.s8 %v3494
        %v3496 = vperm.slane %v3492, %v3495
        %v3497 = vrot.slane %v3465, 4
        %v3498 = vsel %vm1676, %v3497, %v3463
        %v3500 = vunpack.c.l.s4 1983009808
        %v3501 = vunpack.c.0.s8 %v3500
        %v3502 = vperm.slane %v3498, %v3501
        %v3503 = vrot.slane %v3502, 4
        %v3504 = vsel %vm1676, %v3503, %v3496
        %v3506 = vunpack.c.l.s4 1934713408
        %v3507 = vunpack.c.0.s8 %v3506
        %v3508 = vperm.slane %v3504, %v3507
        %v3509 = vrot.slane %v3508, 4
        %v3510 = vsel %vm1676, 0, %v3509
        %v3511 = vsel %vm1676, %v3490, %v3483
        %v3513 = vunpack.c.l.s4 1983009808
        %v3514 = vunpack.c.0.s8 %v3513
        %v3515 = vperm.slane %v3511, %v3514
        %v3516 = vrot.slane %v3491, 4
        %v3517 = vsel %vm1676, %v3516, %v3489
        %v3519 = vunpack.c.l.s4 1983009808
        %v3520 = vunpack.c.0.s8 %v3519
        %v3521 = vperm.slane %v3517, %v3520
        %v3522 = vrot.slane %v3521, 4
        %v3523 = vsel %vm1676, %v3522, %v3515
        %v3525 = vunpack.c.l.s4 1934713408
        %v3526 = vunpack.c.0.s8 %v3525
        %v3527 = vperm.slane %v3523, %v3526
        %v3528 = vrot.slane %v3527, 4
        %v3529 = vsel %vm1676, 0, %v3528
        %v3532 = vpack.i.b16 %v3527, %v3508
        %v3533 = vshrl.u32 %v3508, 16
        %v3534 = vshrl.u32 %v3527, 16
        %v3535 = vpack.i.b16 %v3534, %v3533
        %v3538 = vpack.i.b16 %v3529, %v3510
        %v3539 = vshrl.u32 %v3510, 16
        %v3540 = vshrl.u32 %v3529, 16
        %v3541 = vpack.i.b16 %v3540, %v3539
        %v3542 = vpack.c.bf16 %v3391, %v3391
        %v3543 = vpack.c.bf16 %v3393, %v3393
        %3546 = vrot.lane.b32.xlu0 %v3542, 96
        %v3547 = vpop.permute.xlu0 %3546
        %3548 = vrot.lane.b32.xlu0 %v3543, 96
        %v3549 = vpop.permute.xlu0 %3548
        %3550 = vrot.lane.b32.xlu0 %v3542, 64
        %v3551 = vpop.permute.xlu0 %3550
        %3552 = vrot.lane.b32.xlu0 %v3543, 64
        %v3553 = vpop.permute.xlu0 %3552
        %3554 = vrot.lane.b32.xlu0 %v3542, 32
        %v3555 = vpop.permute.xlu0 %3554
        %3556 = vrot.lane.b32.xlu0 %v3543, 32
        %v3557 = vpop.permute.xlu0 %3556
        %v3560 = vpack.i.b16 %v3547, %v3542
        %v3561 = vshrl.u32 %v3542, 16
        %v3562 = vshrl.u32 %v3547, 16
        %v3563 = vpack.i.b16 %v3562, %v3561
        %v3566 = vpack.i.b16 %v3555, %v3551
        %v3567 = vshrl.u32 %v3551, 16
        %v3568 = vshrl.u32 %v3555, 16
        %v3569 = vpack.i.b16 %v3568, %v3567
        %v3572 = vpack.i.b16 %v3549, %v3543
        %v3573 = vshrl.u32 %v3543, 16
        %v3574 = vshrl.u32 %v3549, 16
        %v3575 = vpack.i.b16 %v3574, %v3573
        %v3578 = vpack.i.b16 %v3557, %v3553
        %v3579 = vshrl.u32 %v3553, 16
        %v3580 = vshrl.u32 %v3557, 16
        %v3581 = vpack.i.b16 %v3580, %v3579
        %v3584 = vunpack.c.l.s4 1983009808
        %v3585 = vunpack.c.0.s8 %v3584
        %v3586 = vperm.slane %v3560, %v3585
        %v3589 = vunpack.c.l.s4 1983009808
        %v3590 = vunpack.c.0.s8 %v3589
        %v3591 = vperm.slane %v3566, %v3590
        %v3592 = vrot.slane %v3591, 4
        %v3593 = vsel %vm1676, %v3592, %v3586
        %v3594 = vrot.slane %v3586, 4
        %v3595 = vsel %vm1676, %v3591, %v3594
        %v3597 = vunpack.c.l.s4 1934713408
        %v3598 = vunpack.c.0.s8 %v3597
        %v3599 = vperm.slane %v3593, %v3598
        %v3601 = vunpack.c.l.s4 1934713408
        %v3602 = vunpack.c.0.s8 %v3601
        %v3603 = vperm.slane %v3595, %v3602
        %v3604 = vrot.slane %v3599, 4
        %v3605 = vsel %vm1676, 0, %v3604
        %v3606 = vrot.slane %v3603, 4
        %v3607 = vsel %vm1676, 0, %v3606
        %v3610 = vunpack.c.l.s4 1983009808
        %v3611 = vunpack.c.0.s8 %v3610
        %v3612 = vperm.slane %v3563, %v3611
        %v3615 = vunpack.c.l.s4 1983009808
        %v3616 = vunpack.c.0.s8 %v3615
        %v3617 = vperm.slane %v3569, %v3616
        %v3618 = vrot.slane %v3617, 4
        %v3619 = vsel %vm1676, %v3618, %v3612
        %v3620 = vrot.slane %v3612, 4
        %v3621 = vsel %vm1676, %v3617, %v3620
        %v3623 = vunpack.c.l.s4 1934713408
        %v3624 = vunpack.c.0.s8 %v3623
        %v3625 = vperm.slane %v3619, %v3624
        %v3627 = vunpack.c.l.s4 1934713408
        %v3628 = vunpack.c.0.s8 %v3627
        %v3629 = vperm.slane %v3621, %v3628
        %v3630 = vrot.slane %v3625, 4
        %v3631 = vsel %vm1676, 0, %v3630
        %v3632 = vrot.slane %v3629, 4
        %v3633 = vsel %vm1676, 0, %v3632
        %v3636 = vunpack.c.l.s4 1983009808
        %v3637 = vunpack.c.0.s8 %v3636
        %v3638 = vperm.slane %v3572, %v3637
        %v3641 = vunpack.c.l.s4 1983009808
        %v3642 = vunpack.c.0.s8 %v3641
        %v3643 = vperm.slane %v3578, %v3642
        %v3644 = vrot.slane %v3643, 4
        %v3645 = vsel %vm1676, %v3644, %v3638
        %v3646 = vrot.slane %v3638, 4
        %v3647 = vsel %vm1676, %v3643, %v3646
        %v3649 = vunpack.c.l.s4 1934713408
        %v3650 = vunpack.c.0.s8 %v3649
        %v3651 = vperm.slane %v3645, %v3650
        %v3653 = vunpack.c.l.s4 1934713408
        %v3654 = vunpack.c.0.s8 %v3653
        %v3655 = vperm.slane %v3647, %v3654
        %v3656 = vrot.slane %v3651, 4
        %v3657 = vsel %vm1676, 0, %v3656
        %v3658 = vrot.slane %v3655, 4
        %v3659 = vsel %vm1676, 0, %v3658
        %v3662 = vunpack.c.l.s4 1983009808
        %v3663 = vunpack.c.0.s8 %v3662
        %v3664 = vperm.slane %v3575, %v3663
        %v3667 = vunpack.c.l.s4 1983009808
        %v3668 = vunpack.c.0.s8 %v3667
        %v3669 = vperm.slane %v3581, %v3668
        %v3670 = vrot.slane %v3669, 4
        %v3671 = vsel %vm1676, %v3670, %v3664
        %v3672 = vrot.slane %v3664, 4
        %v3673 = vsel %vm1676, %v3669, %v3672
        %v3675 = vunpack.c.l.s4 1934713408
        %v3676 = vunpack.c.0.s8 %v3675
        %v3677 = vperm.slane %v3671, %v3676
        %v3679 = vunpack.c.l.s4 1934713408
        %v3680 = vunpack.c.0.s8 %v3679
        %v3681 = vperm.slane %v3673, %v3680
        %v3682 = vrot.slane %v3677, 4
        %v3683 = vsel %vm1676, 0, %v3682
        %v3684 = vrot.slane %v3681, 4
        %v3685 = vsel %vm1676, 0, %v3684
        %v3686 = vsel %vm1676, %v3606, %v3599
        %v3688 = vunpack.c.l.s4 1983009808
        %v3689 = vunpack.c.0.s8 %v3688
        %v3690 = vperm.slane %v3686, %v3689
        %v3691 = vrot.slane %v3607, 4
        %v3692 = vsel %vm1676, %v3691, %v3605
        %v3694 = vunpack.c.l.s4 1983009808
        %v3695 = vunpack.c.0.s8 %v3694
        %v3696 = vperm.slane %v3692, %v3695
        %v3697 = vrot.slane %v3696, 4
        %v3698 = vsel %vm1676, %v3697, %v3690
        %v3700 = vunpack.c.l.s4 1934713408
        %v3701 = vunpack.c.0.s8 %v3700
        %v3702 = vperm.slane %v3698, %v3701
        %v3703 = vrot.slane %v3702, 4
        %v3704 = vsel %vm1676, 0, %v3703
        %v3705 = vsel %vm1676, %v3632, %v3625
        %v3707 = vunpack.c.l.s4 1983009808
        %v3708 = vunpack.c.0.s8 %v3707
        %v3709 = vperm.slane %v3705, %v3708
        %v3710 = vrot.slane %v3633, 4
        %v3711 = vsel %vm1676, %v3710, %v3631
        %v3713 = vunpack.c.l.s4 1983009808
        %v3714 = vunpack.c.0.s8 %v3713
        %v3715 = vperm.slane %v3711, %v3714
        %v3716 = vrot.slane %v3715, 4
        %v3717 = vsel %vm1676, %v3716, %v3709
        %v3719 = vunpack.c.l.s4 1934713408
        %v3720 = vunpack.c.0.s8 %v3719
        %v3721 = vperm.slane %v3717, %v3720
        %v3722 = vrot.slane %v3721, 4
        %v3723 = vsel %vm1676, 0, %v3722
        %v3724 = vsel %vm1676, %v3658, %v3651
        %v3726 = vunpack.c.l.s4 1983009808
        %v3727 = vunpack.c.0.s8 %v3726
        %v3728 = vperm.slane %v3724, %v3727
        %v3729 = vrot.slane %v3659, 4
        %v3730 = vsel %vm1676, %v3729, %v3657
        %v3732 = vunpack.c.l.s4 1983009808
        %v3733 = vunpack.c.0.s8 %v3732
        %v3734 = vperm.slane %v3730, %v3733
        %v3735 = vrot.slane %v3734, 4
        %v3736 = vsel %vm1676, %v3735, %v3728
        %v3738 = vunpack.c.l.s4 1934713408
        %v3739 = vunpack.c.0.s8 %v3738
        %v3740 = vperm.slane %v3736, %v3739
        %v3741 = vrot.slane %v3740, 4
        %v3742 = vsel %vm1676, 0, %v3741
        %v3743 = vsel %vm1676, %v3684, %v3677
        %v3745 = vunpack.c.l.s4 1983009808
        %v3746 = vunpack.c.0.s8 %v3745
        %v3747 = vperm.slane %v3743, %v3746
        %v3748 = vrot.slane %v3685, 4
        %v3749 = vsel %vm1676, %v3748, %v3683
        %v3751 = vunpack.c.l.s4 1983009808
        %v3752 = vunpack.c.0.s8 %v3751
        %v3753 = vperm.slane %v3749, %v3752
        %v3754 = vrot.slane %v3753, 4
        %v3755 = vsel %vm1676, %v3754, %v3747
        %v3757 = vunpack.c.l.s4 1934713408
        %v3758 = vunpack.c.0.s8 %v3757
        %v3759 = vperm.slane %v3755, %v3758
        %v3760 = vrot.slane %v3759, 4
        %v3761 = vsel %vm1676, 0, %v3760
        %v3764 = vpack.i.b16 %v3721, %v3702
        %v3765 = vshrl.u32 %v3702, 16
        %v3766 = vshrl.u32 %v3721, 16
        %v3767 = vpack.i.b16 %v3766, %v3765
        %v3770 = vpack.i.b16 %v3723, %v3704
        %v3771 = vshrl.u32 %v3704, 16
        %v3772 = vshrl.u32 %v3723, 16
        %v3773 = vpack.i.b16 %v3772, %v3771
        %v3776 = vpack.i.b16 %v3759, %v3740
        %v3777 = vshrl.u32 %v3740, 16
        %v3778 = vshrl.u32 %v3759, 16
        %v3779 = vpack.i.b16 %v3778, %v3777
        %v3782 = vpack.i.b16 %v3761, %v3742
        %v3783 = vshrl.u32 %v3742, 16
        %v3784 = vshrl.u32 %v3761, 16
        %v3785 = vpack.i.b16 %v3784, %v3783
        %v3786 = vpack.c.bf16 %v3410, %v3410
        %v3787 = vpack.c.bf16 %v3412, %v3412
        %3790 = vrot.lane.b32.xlu0 %v3786, 96
        %v3791 = vpop.permute.xlu0 %3790
        %3792 = vrot.lane.b32.xlu0 %v3787, 96
        %v3793 = vpop.permute.xlu0 %3792
        %3794 = vrot.lane.b32.xlu0 %v3786, 64
        %v3795 = vpop.permute.xlu0 %3794
        %3796 = vrot.lane.b32.xlu0 %v3787, 64
        %v3797 = vpop.permute.xlu0 %3796
        %3798 = vrot.lane.b32.xlu0 %v3786, 32
        %v3799 = vpop.permute.xlu0 %3798
        %3800 = vrot.lane.b32.xlu0 %v3787, 32
        %v3801 = vpop.permute.xlu0 %3800
        %v3804 = vpack.i.b16 %v3791, %v3786
        %v3805 = vshrl.u32 %v3786, 16
        %v3806 = vshrl.u32 %v3791, 16
        %v3807 = vpack.i.b16 %v3806, %v3805
        %v3810 = vpack.i.b16 %v3799, %v3795
        %v3811 = vshrl.u32 %v3795, 16
        %v3812 = vshrl.u32 %v3799, 16
        %v3813 = vpack.i.b16 %v3812, %v3811
        %v3816 = vpack.i.b16 %v3793, %v3787
        %v3817 = vshrl.u32 %v3787, 16
        %v3818 = vshrl.u32 %v3793, 16
        %v3819 = vpack.i.b16 %v3818, %v3817
        %v3822 = vpack.i.b16 %v3801, %v3797
        %v3823 = vshrl.u32 %v3797, 16
        %v3824 = vshrl.u32 %v3801, 16
        %v3825 = vpack.i.b16 %v3824, %v3823
        %v3828 = vunpack.c.l.s4 1983009808
        %v3829 = vunpack.c.0.s8 %v3828
        %v3830 = vperm.slane %v3804, %v3829
        %v3833 = vunpack.c.l.s4 1983009808
        %v3834 = vunpack.c.0.s8 %v3833
        %v3835 = vperm.slane %v3810, %v3834
        %v3836 = vrot.slane %v3835, 4
        %v3837 = vsel %vm1676, %v3836, %v3830
        %v3838 = vrot.slane %v3830, 4
        %v3839 = vsel %vm1676, %v3835, %v3838
        %v3841 = vunpack.c.l.s4 1934713408
        %v3842 = vunpack.c.0.s8 %v3841
        %v3843 = vperm.slane %v3837, %v3842
        %v3845 = vunpack.c.l.s4 1934713408
        %v3846 = vunpack.c.0.s8 %v3845
        %v3847 = vperm.slane %v3839, %v3846
        %v3848 = vrot.slane %v3843, 4
        %v3849 = vsel %vm1676, 0, %v3848
        %v3850 = vrot.slane %v3847, 4
        %v3851 = vsel %vm1676, 0, %v3850
        %v3854 = vunpack.c.l.s4 1983009808
        %v3855 = vunpack.c.0.s8 %v3854
        %v3856 = vperm.slane %v3807, %v3855
        %v3859 = vunpack.c.l.s4 1983009808
        %v3860 = vunpack.c.0.s8 %v3859
        %v3861 = vperm.slane %v3813, %v3860
        %v3862 = vrot.slane %v3861, 4
        %v3863 = vsel %vm1676, %v3862, %v3856
        %v3864 = vrot.slane %v3856, 4
        %v3865 = vsel %vm1676, %v3861, %v3864
        %v3867 = vunpack.c.l.s4 1934713408
        %v3868 = vunpack.c.0.s8 %v3867
        %v3869 = vperm.slane %v3863, %v3868
        %v3871 = vunpack.c.l.s4 1934713408
        %v3872 = vunpack.c.0.s8 %v3871
        %v3873 = vperm.slane %v3865, %v3872
        %v3874 = vrot.slane %v3869, 4
        %v3875 = vsel %vm1676, 0, %v3874
        %v3876 = vrot.slane %v3873, 4
        %v3877 = vsel %vm1676, 0, %v3876
        %v3880 = vunpack.c.l.s4 1983009808
        %v3881 = vunpack.c.0.s8 %v3880
        %v3882 = vperm.slane %v3816, %v3881
        %v3885 = vunpack.c.l.s4 1983009808
        %v3886 = vunpack.c.0.s8 %v3885
        %v3887 = vperm.slane %v3822, %v3886
        %v3888 = vrot.slane %v3887, 4
        %v3889 = vsel %vm1676, %v3888, %v3882
        %v3890 = vrot.slane %v3882, 4
        %v3891 = vsel %vm1676, %v3887, %v3890
        %v3893 = vunpack.c.l.s4 1934713408
        %v3894 = vunpack.c.0.s8 %v3893
        %v3895 = vperm.slane %v3889, %v3894
        %v3897 = vunpack.c.l.s4 1934713408
        %v3898 = vunpack.c.0.s8 %v3897
        %v3899 = vperm.slane %v3891, %v3898
        %v3900 = vrot.slane %v3895, 4
        %v3901 = vsel %vm1676, 0, %v3900
        %v3902 = vrot.slane %v3899, 4
        %v3903 = vsel %vm1676, 0, %v3902
        %v3906 = vunpack.c.l.s4 1983009808
        %v3907 = vunpack.c.0.s8 %v3906
        %v3908 = vperm.slane %v3819, %v3907
        %v3911 = vunpack.c.l.s4 1983009808
        %v3912 = vunpack.c.0.s8 %v3911
        %v3913 = vperm.slane %v3825, %v3912
        %v3914 = vrot.slane %v3913, 4
        %v3915 = vsel %vm1676, %v3914, %v3908
        %v3916 = vrot.slane %v3908, 4
        %v3917 = vsel %vm1676, %v3913, %v3916
        %v3919 = vunpack.c.l.s4 1934713408
        %v3920 = vunpack.c.0.s8 %v3919
        %v3921 = vperm.slane %v3915, %v3920
        %v3923 = vunpack.c.l.s4 1934713408
        %v3924 = vunpack.c.0.s8 %v3923
        %v3925 = vperm.slane %v3917, %v3924
        %v3926 = vrot.slane %v3921, 4
        %v3927 = vsel %vm1676, 0, %v3926
        %v3928 = vrot.slane %v3925, 4
        %v3929 = vsel %vm1676, 0, %v3928
        %v3930 = vsel %vm1676, %v3850, %v3843
        %v3932 = vunpack.c.l.s4 1983009808
        %v3933 = vunpack.c.0.s8 %v3932
        %v3934 = vperm.slane %v3930, %v3933
        %v3935 = vrot.slane %v3851, 4
        %v3936 = vsel %vm1676, %v3935, %v3849
        %v3938 = vunpack.c.l.s4 1983009808
        %v3939 = vunpack.c.0.s8 %v3938
        %v3940 = vperm.slane %v3936, %v3939
        %v3941 = vrot.slane %v3940, 4
        %v3942 = vsel %vm1676, %v3941, %v3934
        %v3944 = vunpack.c.l.s4 1934713408
        %v3945 = vunpack.c.0.s8 %v3944
        %v3946 = vperm.slane %v3942, %v3945
        %v3947 = vrot.slane %v3946, 4
        %v3948 = vsel %vm1676, 0, %v3947
        %v3949 = vsel %vm1676, %v3876, %v3869
        %v3951 = vunpack.c.l.s4 1983009808
        %v3952 = vunpack.c.0.s8 %v3951
        %v3953 = vperm.slane %v3949, %v3952
        %v3954 = vrot.slane %v3877, 4
        %v3955 = vsel %vm1676, %v3954, %v3875
        %v3957 = vunpack.c.l.s4 1983009808
        %v3958 = vunpack.c.0.s8 %v3957
        %v3959 = vperm.slane %v3955, %v3958
        %v3960 = vrot.slane %v3959, 4
        %v3961 = vsel %vm1676, %v3960, %v3953
        %v3963 = vunpack.c.l.s4 1934713408
        %v3964 = vunpack.c.0.s8 %v3963
        %v3965 = vperm.slane %v3961, %v3964
        %v3966 = vrot.slane %v3965, 4
        %v3967 = vsel %vm1676, 0, %v3966
        %v3968 = vsel %vm1676, %v3902, %v3895
        %v3970 = vunpack.c.l.s4 1983009808
        %v3971 = vunpack.c.0.s8 %v3970
        %v3972 = vperm.slane %v3968, %v3971
        %v3973 = vrot.slane %v3903, 4
        %v3974 = vsel %vm1676, %v3973, %v3901
        %v3976 = vunpack.c.l.s4 1983009808
        %v3977 = vunpack.c.0.s8 %v3976
        %v3978 = vperm.slane %v3974, %v3977
        %v3979 = vrot.slane %v3978, 4
        %v3980 = vsel %vm1676, %v3979, %v3972
        %v3982 = vunpack.c.l.s4 1934713408
        %v3983 = vunpack.c.0.s8 %v3982
        %v3984 = vperm.slane %v3980, %v3983
        %v3985 = vrot.slane %v3984, 4
        %v3986 = vsel %vm1676, 0, %v3985
        %v3987 = vsel %vm1676, %v3928, %v3921
        %v3989 = vunpack.c.l.s4 1983009808
        %v3990 = vunpack.c.0.s8 %v3989
        %v3991 = vperm.slane %v3987, %v3990
        %v3992 = vrot.slane %v3929, 4
        %v3993 = vsel %vm1676, %v3992, %v3927
        %v3995 = vunpack.c.l.s4 1983009808
        %v3996 = vunpack.c.0.s8 %v3995
        %v3997 = vperm.slane %v3993, %v3996
        %v3998 = vrot.slane %v3997, 4
        %v3999 = vsel %vm1676, %v3998, %v3991
        %v4001 = vunpack.c.l.s4 1934713408
        %v4002 = vunpack.c.0.s8 %v4001
        %v4003 = vperm.slane %v3999, %v4002
        %v4004 = vrot.slane %v4003, 4
        %v4005 = vsel %vm1676, 0, %v4004
        %v4008 = vpack.i.b16 %v3965, %v3946
        %v4009 = vshrl.u32 %v3946, 16
        %v4010 = vshrl.u32 %v3965, 16
        %v4011 = vpack.i.b16 %v4010, %v4009
        %v4014 = vpack.i.b16 %v3967, %v3948
        %v4015 = vshrl.u32 %v3948, 16
        %v4016 = vshrl.u32 %v3967, 16
        %v4017 = vpack.i.b16 %v4016, %v4015
        %v4020 = vpack.i.b16 %v4003, %v3984
        %v4021 = vshrl.u32 %v3984, 16
        %v4022 = vshrl.u32 %v4003, 16
        %v4023 = vpack.i.b16 %v4022, %v4021
        %v4026 = vpack.i.b16 %v4005, %v3986
        %v4027 = vshrl.u32 %v3986, 16
        %v4028 = vshrl.u32 %v4005, 16
        %v4029 = vpack.i.b16 %v4028, %v4027
        %v4031 = vperm.slane %v3419, 0
        %v4033 = vunpack.c.l.b16 %v3764
        %v4034 = vunpack.c.l.b16 %v3776
        %v4035 = vpack.c.b16 %v4034, %v4033
        %v4037 = vsel %vm2012, %v3532, 0
        %v4040 = vsel %vm2012, %v4035, 0
        %4042 = vmatpush.bf16.xpose.msra.mxu0 0
        %4043 = vmatpush.bf16.xpose.msra.mxu0 0
        %4044 = vmatpush.bf16.xpose.msra.mxu0 0
        %4045 = vmatpush.bf16.xpose.msra.mxu0 0
        %4046 = vmatpush.bf16.xpose.msra.mxu0 0
        %4047 = vmatpush.bf16.xpose.msra.mxu0 0
        %4048 = vmatpush.bf16.xpose.msra.mxu0 0
        %4049 = vmatpush.bf16.xpose.msra.mxu0 %v4040
        %4050 = vmatmul.bf16.gmra.mxu0 %v4037
        %v4051 = vpop.f32.mrf.mxu0
        %v4052 = vadd.f32 %v4031, %v4051
        %v4053 = vpop.f32.mrf.mxu0
        %4054 = vdwg.mxu0
        %v4055 = vunpack.c.l.b16 %v3767
        %v4056 = vunpack.c.l.b16 %v3779
        %v4057 = vpack.c.b16 %v4056, %v4055
        %v4059 = vsel %vm2012, %v3535, 0
        %v4062 = vsel %vm2012, %v4057, 0
        %4064 = vmatpush.bf16.xpose.msra.mxu0 0
        %4065 = vmatpush.bf16.xpose.msra.mxu0 0
        %4066 = vmatpush.bf16.xpose.msra.mxu0 0
        %4067 = vmatpush.bf16.xpose.msra.mxu0 0
        %4068 = vmatpush.bf16.xpose.msra.mxu0 0
        %4069 = vmatpush.bf16.xpose.msra.mxu0 0
        %4070 = vmatpush.bf16.xpose.msra.mxu0 0
        %4071 = vmatpush.bf16.xpose.msra.mxu0 %v4062
        %4072 = vmatmul.bf16.gmra.mxu0 %v4059
        %v4073 = vpop.f32.mrf.mxu0
        %v4074 = vadd.f32 %v4031, %v4073
        %v4075 = vpop.f32.mrf.mxu0
        %4076 = vdwg.mxu0
        %v4077 = vunpack.c.l.b16 %v3770
        %v4078 = vunpack.c.l.b16 %v3782
        %v4079 = vpack.c.b16 %v4078, %v4077
        %v4081 = vsel %vm2012, %v3538, 0
        %v4084 = vsel %vm2012, %v4079, 0
        %4086 = vmatpush.bf16.xpose.msra.mxu0 0
        %4087 = vmatpush.bf16.xpose.msra.mxu0 0
        %4088 = vmatpush.bf16.xpose.msra.mxu0 0
        %4089 = vmatpush.bf16.xpose.msra.mxu0 0
        %4090 = vmatpush.bf16.xpose.msra.mxu0 0
        %4091 = vmatpush.bf16.xpose.msra.mxu0 0
        %4092 = vmatpush.bf16.xpose.msra.mxu0 0
        %4093 = vmatpush.bf16.xpose.msra.mxu0 %v4084
        %4094 = vmatmul.bf16.gmra.mxu0 %v4081
        %v4095 = vpop.f32.mrf.mxu0
        %v4096 = vadd.f32 %v4031, %v4095
        %v4097 = vpop.f32.mrf.mxu0
        %4098 = vdwg.mxu0
        %v4099 = vunpack.c.l.b16 %v3773
        %v4100 = vunpack.c.l.b16 %v3785
        %v4101 = vpack.c.b16 %v4100, %v4099
        %v4103 = vsel %vm2012, %v3541, 0
        %v4106 = vsel %vm2012, %v4101, 0
        %4108 = vmatpush.bf16.xpose.msra.mxu0 0
        %4109 = vmatpush.bf16.xpose.msra.mxu0 0
        %4110 = vmatpush.bf16.xpose.msra.mxu0 0
        %4111 = vmatpush.bf16.xpose.msra.mxu0 0
        %4112 = vmatpush.bf16.xpose.msra.mxu0 0
        %4113 = vmatpush.bf16.xpose.msra.mxu0 0
        %4114 = vmatpush.bf16.xpose.msra.mxu0 0
        %4115 = vmatpush.bf16.xpose.msra.mxu0 %v4106
        %4116 = vmatmul.bf16.gmra.mxu0 %v4103
        %v4117 = vpop.f32.mrf.mxu0
        %v4118 = vadd.f32 %v4031, %v4117
        %v4119 = vpop.f32.mrf.mxu0
        %4120 = vdwg.mxu0
        %vm4121 = vcmask 130048
        %v4122 = vsel %vm4121, %v4052, -inf
        %4123 = vmax.xlane.f32.xlu0 %v4122
        %v4124 = vpop.xlane.xlu0 %4123
        %v4125 = vsel %vm4121, %v4074, -inf
        %4126 = vmax.xlane.f32.xlu0 %v4125
        %v4127 = vpop.xlane.xlu0 %4126
        %v4128 = vsel %vm4121, %v4096, -inf
        %4129 = vmax.xlane.f32.xlu0 %v4128
        %v4130 = vpop.xlane.xlu0 %4129
        %v4131 = vsel %vm4121, %v4118, -inf
        %4132 = vmax.xlane.f32.xlu0 %v4131
        %v4133 = vpop.xlane.xlu0 %4132
        %v4134 = vsub.f32 %v4052, %v4124
        %v4135 = vsub.f32 %v4074, %v4127
        %v4136 = vsub.f32 %v4096, %v4130
        %v4137 = vsub.f32 %v4118, %v4133
        %v4138 = vmul.f32 %v4134, 1.442695
        %v4139 = vpow.pop %v4138
        %v4140 = vmul.f32 %v4135, 1.442695
        %v4141 = vpow.pop %v4140
        %v4142 = vmul.f32 %v4136, 1.442695
        %v4143 = vpow.pop %v4142
        %v4144 = vmul.f32 %v4137, 1.442695
        %v4145 = vpow.pop %v4144
        %v4146 = vsel %vm4121, %v4139, 0.0
        %4147 = vadd.xlane.f32.xlu0 %v4146
        %v4148 = vpop.xlane.xlu0 %4147
        %v4149 = vsel %vm4121, %v4141, 0.0
        %4150 = vadd.xlane.f32.xlu0 %v4149
        %v4151 = vpop.xlane.xlu0 %4150
        %v4152 = vsel %vm4121, %v4143, 0.0
        %4153 = vadd.xlane.f32.xlu0 %v4152
        %v4154 = vpop.xlane.xlu0 %4153
        %v4155 = vsel %vm4121, %v4145, 0.0
        %4156 = vadd.xlane.f32.xlu0 %v4155
        %v4157 = vpop.xlane.xlu0 %4156
        %v4158 = vrcp.pop %v4148
        %v4159 = vrcp.pop %v4151
        %v4160 = vrcp.pop %v4154
        %v4161 = vrcp.pop %v4157
        %v4162 = vmul.f32 %v4139, %v4158
        %v4163 = vmul.f32 %v4141, %v4159
        %v4164 = vmul.f32 %v4143, %v4160
        %v4165 = vmul.f32 %v4145, %v4161
        %v4166 = vpack.c.bf16 %v4162, %v4162
        %v4167 = vpack.c.bf16 %v4163, %v4163
        %v4168 = vpack.c.bf16 %v4164, %v4164
        %v4169 = vpack.c.bf16 %v4165, %v4165
        %v4170 = vunpack.c.l.b16 %v4008
        %v4171 = vunpack.c.l.b16 %v4020
        %v4172 = vpack.c.b16 %v4171, %v4170
        %v4175 = vsel %vm4121, %v4166, 0
        %4177 = vmatpush.bf16.msra.mxu0 0
        %4178 = vmatpush.bf16.msra.mxu0 0
        %4179 = vmatpush.bf16.msra.mxu0 0
        %4180 = vmatpush.bf16.msra.mxu0 0
        %4181 = vmatpush.bf16.msra.mxu0 0
        %4182 = vmatpush.bf16.msra.mxu0 0
        %4183 = vmatpush.bf16.msra.mxu0 0
        %4184 = vmatpush.bf16.msra.mxu0 %v4172
        %4185 = vmatmul.bf16.gmra.mxu0 %v4175
        %v4186 = vpop.f32.mrf.mxu0
        %v4187 = vadd.f32 0.0, %v4186
        %v4188 = vpop.f32.mrf.mxu0
        %4189 = vdwg.mxu0
        %v4190 = vunpack.c.l.b16 %v4011
        %v4191 = vunpack.c.l.b16 %v4023
        %v4192 = vpack.c.b16 %v4191, %v4190
        %v4195 = vsel %vm4121, %v4167, 0
        %4197 = vmatpush.bf16.msra.mxu0 0
        %4198 = vmatpush.bf16.msra.mxu0 0
        %4199 = vmatpush.bf16.msra.mxu0 0
        %4200 = vmatpush.bf16.msra.mxu0 0
        %4201 = vmatpush.bf16.msra.mxu0 0
        %4202 = vmatpush.bf16.msra.mxu0 0
        %4203 = vmatpush.bf16.msra.mxu0 0
        %4204 = vmatpush.bf16.msra.mxu0 %v4192
        %4205 = vmatmul.bf16.gmra.mxu0 %v4195
        %v4206 = vpop.f32.mrf.mxu0
        %v4207 = vadd.f32 0.0, %v4206
        %v4208 = vpop.f32.mrf.mxu0
        %4209 = vdwg.mxu0
        %v4210 = vunpack.c.l.b16 %v4014
        %v4211 = vunpack.c.l.b16 %v4026
        %v4212 = vpack.c.b16 %v4211, %v4210
        %v4215 = vsel %vm4121, %v4168, 0
        %4217 = vmatpush.bf16.msra.mxu0 0
        %4218 = vmatpush.bf16.msra.mxu0 0
        %4219 = vmatpush.bf16.msra.mxu0 0
        %4220 = vmatpush.bf16.msra.mxu0 0
        %4221 = vmatpush.bf16.msra.mxu0 0
        %4222 = vmatpush.bf16.msra.mxu0 0
        %4223 = vmatpush.bf16.msra.mxu0 0
        %4224 = vmatpush.bf16.msra.mxu0 %v4212
        %4225 = vmatmul.bf16.gmra.mxu0 %v4215
        %v4226 = vpop.f32.mrf.mxu0
        %v4227 = vadd.f32 0.0, %v4226
        %v4228 = vpop.f32.mrf.mxu0
        %4229 = vdwg.mxu0
        %v4230 = vunpack.c.l.b16 %v4017
        %v4231 = vunpack.c.l.b16 %v4029
        %v4232 = vpack.c.b16 %v4231, %v4230
        %v4235 = vsel %vm4121, %v4169, 0
        %4237 = vmatpush.bf16.msra.mxu0 0
        %4238 = vmatpush.bf16.msra.mxu0 0
        %4239 = vmatpush.bf16.msra.mxu0 0
        %4240 = vmatpush.bf16.msra.mxu0 0
        %4241 = vmatpush.bf16.msra.mxu0 0
        %4242 = vmatpush.bf16.msra.mxu0 0
        %4243 = vmatpush.bf16.msra.mxu0 0
        %4244 = vmatpush.bf16.msra.mxu0 %v4232
        %4245 = vmatmul.bf16.gmra.mxu0 %v4235
        %v4246 = vpop.f32.mrf.mxu0
        %v4247 = vadd.f32 0.0, %v4246
        %v4248 = vpop.f32.mrf.mxu0
        %4249 = vdwg.mxu0
        %v4250 = vrot.slane %v4227, 4
        %v4251 = vsel %vm2216, %v4250, %v4187
        %v4252 = vrot.slane %v4187, 4
        %v4253 = vsel %vm2216, %v4227, %v4252
        %v4255 = vunpack.c.l.s4 1983009808
        %v4256 = vunpack.c.0.s8 %v4255
        %v4257 = vperm.slane %v4251, %v4256
        %v4259 = vunpack.c.l.s4 1983009808
        %v4260 = vunpack.c.0.s8 %v4259
        %v4261 = vperm.slane %v4253, %v4260
        %v4262 = vrot.slane %v4247, 4
        %v4263 = vsel %vm2216, %v4262, %v4207
        %v4264 = vrot.slane %v4207, 4
        %v4265 = vsel %vm2216, %v4247, %v4264
        %v4267 = vunpack.c.l.s4 1983009808
        %v4268 = vunpack.c.0.s8 %v4267
        %v4269 = vperm.slane %v4263, %v4268
        %v4271 = vunpack.c.l.s4 1983009808
        %v4272 = vunpack.c.0.s8 %v4271
        %v4273 = vperm.slane %v4265, %v4272
        %v4274 = vrot.slane %v4269, 4
        %v4275 = vsel %vm2216, %v4274, %v4257
        %v4276 = vrot.slane %v4257, 4
        %v4277 = vsel %vm2216, %v4269, %v4276
        %v4279 = vunpack.c.l.s4 1934713408
        %v4280 = vunpack.c.0.s8 %v4279
        %v4281 = vperm.slane %v4275, %v4280
        %v4283 = vunpack.c.l.s4 1934713408
        %v4284 = vunpack.c.0.s8 %v4283
        %v4285 = vperm.slane %v4277, %v4284
        %v4286 = vrot.slane %v4273, 4
        %v4287 = vsel %vm2216, %v4286, %v4261
        %v4288 = vrot.slane %v4261, 4
        %v4289 = vsel %vm2216, %v4273, %v4288
        %v4291 = vunpack.c.l.s4 1934713408
        %v4292 = vunpack.c.0.s8 %v4291
        %v4293 = vperm.slane %v4287, %v4292
        %v4295 = vunpack.c.l.s4 1934713408
        %v4296 = vunpack.c.0.s8 %v4295
        %v4297 = vperm.slane %v4289, %v4296
        %v4298 = vrot.slane %v4281, 4
        %v4299 = vsel %vm2216, 0.0, %v4298
        %v4300 = vrot.slane %v4285, 4
        %v4301 = vsel %vm2216, 0.0, %v4300
        %v4302 = vrot.slane %v4293, 4
        %v4303 = vsel %vm2216, 0.0, %v4302
        %v4304 = vrot.slane %v4297, 4
        %v4305 = vsel %vm2216, 0.0, %v4304
        %v4306 = vsel %vm2216, %v4300, %v4281
        %v4308 = vunpack.c.l.s4 1983009808
        %v4309 = vunpack.c.0.s8 %v4308
        %v4310 = vperm.slane %v4306, %v4309
        %v4311 = vrot.slane %v4301, 4
        %v4312 = vsel %vm2216, %v4311, %v4299
        %v4314 = vunpack.c.l.s4 1983009808
        %v4315 = vunpack.c.0.s8 %v4314
        %v4316 = vperm.slane %v4312, %v4315
        %v4317 = vsel %vm2216, %v4304, %v4293
        %v4319 = vunpack.c.l.s4 1983009808
        %v4320 = vunpack.c.0.s8 %v4319
        %v4321 = vperm.slane %v4317, %v4320
        %v4322 = vrot.slane %v4305, 4
        %v4323 = vsel %vm2216, %v4322, %v4303
        %v4325 = vunpack.c.l.s4 1983009808
        %v4326 = vunpack.c.0.s8 %v4325
        %v4327 = vperm.slane %v4323, %v4326
        %v4328 = vrot.slane %v4316, 4
        %v4329 = vsel %vm2216, %v4328, %v4310
        %v4330 = vrot.slane %v4310, 4
        %v4331 = vsel %vm2216, %v4316, %v4330
        %v4333 = vunpack.c.l.s4 1934713408
        %v4334 = vunpack.c.0.s8 %v4333
        %v4335 = vperm.slane %v4329, %v4334
        %v4337 = vunpack.c.l.s4 1934713408
        %v4338 = vunpack.c.0.s8 %v4337
        %v4339 = vperm.slane %v4331, %v4338
        %v4340 = vrot.slane %v4327, 4
        %v4341 = vsel %vm2216, %v4340, %v4321
        %v4342 = vrot.slane %v4321, 4
        %v4343 = vsel %vm2216, %v4327, %v4342
        %v4345 = vunpack.c.l.s4 1934713408
        %v4346 = vunpack.c.0.s8 %v4345
        %v4347 = vperm.slane %v4341, %v4346
        %v4349 = vunpack.c.l.s4 1934713408
        %v4350 = vunpack.c.0.s8 %v4349
        %v4351 = vperm.slane %v4343, %v4350
        %v4352 = vrot.slane %v4347, 4
        %v4353 = vsel %vm2216, %v4352, %v4335
        %v4354 = vrot.slane %v4335, 4
        %v4355 = vsel %vm2216, %v4347, %v4354
        %v4356 = vrot.slane %v4351, 4
        %v4357 = vsel %vm2216, %v4356, %v4339
        %v4358 = vrot.slane %v4339, 4
        %v4359 = vsel %vm2216, %v4351, %v4358
        %4361 = vrot.lane.b32.xlu0 %v4355, 32
        %v4362 = vpop.permute.xlu0 %4361
        %4365 = vrot.lane.b32.xlu0 %v4357, 64
        %v4366 = vpop.permute.xlu0 %4365
        %4369 = vrot.lane.b32.xlu0 %v4359, 96
        %v4370 = vpop.permute.xlu0 %4369
        %v4372 = vsel %vm2012, %v4353, %v4362
        %v4373 = vsel %vm2339, %v4372, %v4366
        %v4374 = vsel %vm2341, %v4373, %v4370
        %s4375 = scalar_lea.vmem [#allocation8], 1
        %v4376 = vld [vmem:[%s4375] sm:$0x1]
        %v4377 = vpack.c.bf16 %v3261, %v3261
        %4379 = vrot.lane.b32.xlu0 %v4377, 96
        %v4380 = vpop.permute.xlu0 %4379
        %4381 = vrot.lane.b32.xlu0 %v4377, 64
        %v4382 = vpop.permute.xlu0 %4381
        %4383 = vrot.lane.b32.xlu0 %v4377, 32
        %v4384 = vpop.permute.xlu0 %4383
        %v4387 = vpack.i.b16 %v4380, %v4377
        %v4388 = vshrl.u32 %v4377, 16
        %v4389 = vshrl.u32 %v4380, 16
        %v4390 = vpack.i.b16 %v4389, %v4388
        %v4393 = vpack.i.b16 %v4384, %v4382
        %v4394 = vshrl.u32 %v4382, 16
        %v4395 = vshrl.u32 %v4384, 16
        %v4396 = vpack.i.b16 %v4395, %v4394
        %v4399 = vunpack.c.l.s4 1983009808
        %v4400 = vunpack.c.0.s8 %v4399
        %v4401 = vperm.slane %v4387, %v4400
        %v4404 = vunpack.c.l.s4 1983009808
        %v4405 = vunpack.c.0.s8 %v4404
        %v4406 = vperm.slane %v4393, %v4405
        %v4407 = vrot.slane %v4406, 4
        %v4408 = vsel %vm1676, %v4407, %v4401
        %v4409 = vrot.slane %v4401, 4
        %v4410 = vsel %vm1676, %v4406, %v4409
        %v4412 = vunpack.c.l.s4 1934713408
        %v4413 = vunpack.c.0.s8 %v4412
        %v4414 = vperm.slane %v4408, %v4413
        %v4416 = vunpack.c.l.s4 1934713408
        %v4417 = vunpack.c.0.s8 %v4416
        %v4418 = vperm.slane %v4410, %v4417
        %v4419 = vrot.slane %v4414, 4
        %v4420 = vsel %vm1676, 0, %v4419
        %v4421 = vrot.slane %v4418, 4
        %v4422 = vsel %vm1676, 0, %v4421
        %v4425 = vunpack.c.l.s4 1983009808
        %v4426 = vunpack.c.0.s8 %v4425
        %v4427 = vperm.slane %v4390, %v4426
        %v4430 = vunpack.c.l.s4 1983009808
        %v4431 = vunpack.c.0.s8 %v4430
        %v4432 = vperm.slane %v4396, %v4431
        %v4433 = vrot.slane %v4432, 4
        %v4434 = vsel %vm1676, %v4433, %v4427
        %v4435 = vrot.slane %v4427, 4
        %v4436 = vsel %vm1676, %v4432, %v4435
        %v4438 = vunpack.c.l.s4 1934713408
        %v4439 = vunpack.c.0.s8 %v4438
        %v4440 = vperm.slane %v4434, %v4439
        %v4442 = vunpack.c.l.s4 1934713408
        %v4443 = vunpack.c.0.s8 %v4442
        %v4444 = vperm.slane %v4436, %v4443
        %v4445 = vrot.slane %v4440, 4
        %v4446 = vsel %vm1676, 0, %v4445
        %v4447 = vrot.slane %v4444, 4
        %v4448 = vsel %vm1676, 0, %v4447
        %v4449 = vsel %vm1676, %v4421, %v4414
        %v4451 = vunpack.c.l.s4 1983009808
        %v4452 = vunpack.c.0.s8 %v4451
        %v4453 = vperm.slane %v4449, %v4452
        %v4454 = vrot.slane %v4422, 4
        %v4455 = vsel %vm1676, %v4454, %v4420
        %v4457 = vunpack.c.l.s4 1983009808
        %v4458 = vunpack.c.0.s8 %v4457
        %v4459 = vperm.slane %v4455, %v4458
        %v4460 = vrot.slane %v4459, 4
        %v4461 = vsel %vm1676, %v4460, %v4453
        %v4463 = vunpack.c.l.s4 1934713408
        %v4464 = vunpack.c.0.s8 %v4463
        %v4465 = vperm.slane %v4461, %v4464
        %v4466 = vrot.slane %v4465, 4
        %v4467 = vsel %vm1676, 0, %v4466
        %v4468 = vsel %vm1676, %v4447, %v4440
        %v4470 = vunpack.c.l.s4 1983009808
        %v4471 = vunpack.c.0.s8 %v4470
        %v4472 = vperm.slane %v4468, %v4471
        %v4473 = vrot.slane %v4448, 4
        %v4474 = vsel %vm1676, %v4473, %v4446
        %v4476 = vunpack.c.l.s4 1983009808
        %v4477 = vunpack.c.0.s8 %v4476
        %v4478 = vperm.slane %v4474, %v4477
        %v4479 = vrot.slane %v4478, 4
        %v4480 = vsel %vm1676, %v4479, %v4472
        %v4482 = vunpack.c.l.s4 1934713408
        %v4483 = vunpack.c.0.s8 %v4482
        %v4484 = vperm.slane %v4480, %v4483
        %v4485 = vrot.slane %v4484, 4
        %v4486 = vsel %vm1676, 0, %v4485
        %v4489 = vpack.i.b16 %v4484, %v4465
        %v4490 = vshrl.u32 %v4465, 16
        %v4491 = vshrl.u32 %v4484, 16
        %v4492 = vpack.i.b16 %v4491, %v4490
        %v4495 = vpack.i.b16 %v4486, %v4467
        %v4496 = vshrl.u32 %v4467, 16
        %v4497 = vshrl.u32 %v4486, 16
        %v4498 = vpack.i.b16 %v4497, %v4496
        %v4499 = vpack.c.bf16 %v3396, %v3396
        %v4500 = vpack.c.bf16 %v3398, %v3398
        %4503 = vrot.lane.b32.xlu0 %v4499, 96
        %v4504 = vpop.permute.xlu0 %4503
        %4505 = vrot.lane.b32.xlu0 %v4500, 96
        %v4506 = vpop.permute.xlu0 %4505
        %4507 = vrot.lane.b32.xlu0 %v4499, 64
        %v4508 = vpop.permute.xlu0 %4507
        %4509 = vrot.lane.b32.xlu0 %v4500, 64
        %v4510 = vpop.permute.xlu0 %4509
        %4511 = vrot.lane.b32.xlu0 %v4499, 32
        %v4512 = vpop.permute.xlu0 %4511
        %4513 = vrot.lane.b32.xlu0 %v4500, 32
        %v4514 = vpop.permute.xlu0 %4513
        %v4517 = vpack.i.b16 %v4504, %v4499
        %v4518 = vshrl.u32 %v4499, 16
        %v4519 = vshrl.u32 %v4504, 16
        %v4520 = vpack.i.b16 %v4519, %v4518
        %v4523 = vpack.i.b16 %v4512, %v4508
        %v4524 = vshrl.u32 %v4508, 16
        %v4525 = vshrl.u32 %v4512, 16
        %v4526 = vpack.i.b16 %v4525, %v4524
        %v4529 = vpack.i.b16 %v4506, %v4500
        %v4530 = vshrl.u32 %v4500, 16
        %v4531 = vshrl.u32 %v4506, 16
        %v4532 = vpack.i.b16 %v4531, %v4530
        %v4535 = vpack.i.b16 %v4514, %v4510
        %v4536 = vshrl.u32 %v4510, 16
        %v4537 = vshrl.u32 %v4514, 16
        %v4538 = vpack.i.b16 %v4537, %v4536
        %v4541 = vunpack.c.l.s4 1983009808
        %v4542 = vunpack.c.0.s8 %v4541
        %v4543 = vperm.slane %v4517, %v4542
        %v4546 = vunpack.c.l.s4 1983009808
        %v4547 = vunpack.c.0.s8 %v4546
        %v4548 = vperm.slane %v4523, %v4547
        %v4549 = vrot.slane %v4548, 4
        %v4550 = vsel %vm1676, %v4549, %v4543
        %v4551 = vrot.slane %v4543, 4
        %v4552 = vsel %vm1676, %v4548, %v4551
        %v4554 = vunpack.c.l.s4 1934713408
        %v4555 = vunpack.c.0.s8 %v4554
        %v4556 = vperm.slane %v4550, %v4555
        %v4558 = vunpack.c.l.s4 1934713408
        %v4559 = vunpack.c.0.s8 %v4558
        %v4560 = vperm.slane %v4552, %v4559
        %v4561 = vrot.slane %v4556, 4
        %v4562 = vsel %vm1676, 0, %v4561
        %v4563 = vrot.slane %v4560, 4
        %v4564 = vsel %vm1676, 0, %v4563
        %v4567 = vunpack.c.l.s4 1983009808
        %v4568 = vunpack.c.0.s8 %v4567
        %v4569 = vperm.slane %v4520, %v4568
        %v4572 = vunpack.c.l.s4 1983009808
        %v4573 = vunpack.c.0.s8 %v4572
        %v4574 = vperm.slane %v4526, %v4573
        %v4575 = vrot.slane %v4574, 4
        %v4576 = vsel %vm1676, %v4575, %v4569
        %v4577 = vrot.slane %v4569, 4
        %v4578 = vsel %vm1676, %v4574, %v4577
        %v4580 = vunpack.c.l.s4 1934713408
        %v4581 = vunpack.c.0.s8 %v4580
        %v4582 = vperm.slane %v4576, %v4581
        %v4584 = vunpack.c.l.s4 1934713408
        %v4585 = vunpack.c.0.s8 %v4584
        %v4586 = vperm.slane %v4578, %v4585
        %v4587 = vrot.slane %v4582, 4
        %v4588 = vsel %vm1676, 0, %v4587
        %v4589 = vrot.slane %v4586, 4
        %v4590 = vsel %vm1676, 0, %v4589
        %v4593 = vunpack.c.l.s4 1983009808
        %v4594 = vunpack.c.0.s8 %v4593
        %v4595 = vperm.slane %v4529, %v4594
        %v4598 = vunpack.c.l.s4 1983009808
        %v4599 = vunpack.c.0.s8 %v4598
        %v4600 = vperm.slane %v4535, %v4599
        %v4601 = vrot.slane %v4600, 4
        %v4602 = vsel %vm1676, %v4601, %v4595
        %v4603 = vrot.slane %v4595, 4
        %v4604 = vsel %vm1676, %v4600, %v4603
        %v4606 = vunpack.c.l.s4 1934713408
        %v4607 = vunpack.c.0.s8 %v4606
        %v4608 = vperm.slane %v4602, %v4607
        %v4610 = vunpack.c.l.s4 1934713408
        %v4611 = vunpack.c.0.s8 %v4610
        %v4612 = vperm.slane %v4604, %v4611
        %v4613 = vrot.slane %v4608, 4
        %v4614 = vsel %vm1676, 0, %v4613
        %v4615 = vrot.slane %v4612, 4
        %v4616 = vsel %vm1676, 0, %v4615
        %v4619 = vunpack.c.l.s4 1983009808
        %v4620 = vunpack.c.0.s8 %v4619
        %v4621 = vperm.slane %v4532, %v4620
        %v4624 = vunpack.c.l.s4 1983009808
        %v4625 = vunpack.c.0.s8 %v4624
        %v4626 = vperm.slane %v4538, %v4625
        %v4627 = vrot.slane %v4626, 4
        %v4628 = vsel %vm1676, %v4627, %v4621
        %v4629 = vrot.slane %v4621, 4
        %v4630 = vsel %vm1676, %v4626, %v4629
        %v4632 = vunpack.c.l.s4 1934713408
        %v4633 = vunpack.c.0.s8 %v4632
        %v4634 = vperm.slane %v4628, %v4633
        %v4636 = vunpack.c.l.s4 1934713408
        %v4637 = vunpack.c.0.s8 %v4636
        %v4638 = vperm.slane %v4630, %v4637
        %v4639 = vrot.slane %v4634, 4
        %v4640 = vsel %vm1676, 0, %v4639
        %v4641 = vrot.slane %v4638, 4
        %v4642 = vsel %vm1676, 0, %v4641
        %v4643 = vsel %vm1676, %v4563, %v4556
        %v4645 = vunpack.c.l.s4 1983009808
        %v4646 = vunpack.c.0.s8 %v4645
        %v4647 = vperm.slane %v4643, %v4646
        %v4648 = vrot.slane %v4564, 4
        %v4649 = vsel %vm1676, %v4648, %v4562
        %v4651 = vunpack.c.l.s4 1983009808
        %v4652 = vunpack.c.0.s8 %v4651
        %v4653 = vperm.slane %v4649, %v4652
        %v4654 = vrot.slane %v4653, 4
        %v4655 = vsel %vm1676, %v4654, %v4647
        %v4657 = vunpack.c.l.s4 1934713408
        %v4658 = vunpack.c.0.s8 %v4657
        %v4659 = vperm.slane %v4655, %v4658
        %v4660 = vrot.slane %v4659, 4
        %v4661 = vsel %vm1676, 0, %v4660
        %v4662 = vsel %vm1676, %v4589, %v4582
        %v4664 = vunpack.c.l.s4 1983009808
        %v4665 = vunpack.c.0.s8 %v4664
        %v4666 = vperm.slane %v4662, %v4665
        %v4667 = vrot.slane %v4590, 4
        %v4668 = vsel %vm1676, %v4667, %v4588
        %v4670 = vunpack.c.l.s4 1983009808
        %v4671 = vunpack.c.0.s8 %v4670
        %v4672 = vperm.slane %v4668, %v4671
        %v4673 = vrot.slane %v4672, 4
        %v4674 = vsel %vm1676, %v4673, %v4666
        %v4676 = vunpack.c.l.s4 1934713408
        %v4677 = vunpack.c.0.s8 %v4676
        %v4678 = vperm.slane %v4674, %v4677
        %v4679 = vrot.slane %v4678, 4
        %v4680 = vsel %vm1676, 0, %v4679
        %v4681 = vsel %vm1676, %v4615, %v4608
        %v4683 = vunpack.c.l.s4 1983009808
        %v4684 = vunpack.c.0.s8 %v4683
        %v4685 = vperm.slane %v4681, %v4684
        %v4686 = vrot.slane %v4616, 4
        %v4687 = vsel %vm1676, %v4686, %v4614
        %v4689 = vunpack.c.l.s4 1983009808
        %v4690 = vunpack.c.0.s8 %v4689
        %v4691 = vperm.slane %v4687, %v4690
        %v4692 = vrot.slane %v4691, 4
        %v4693 = vsel %vm1676, %v4692, %v4685
        %v4695 = vunpack.c.l.s4 1934713408
        %v4696 = vunpack.c.0.s8 %v4695
        %v4697 = vperm.slane %v4693, %v4696
        %v4698 = vrot.slane %v4697, 4
        %v4699 = vsel %vm1676, 0, %v4698
        %v4700 = vsel %vm1676, %v4641, %v4634
        %v4702 = vunpack.c.l.s4 1983009808
        %v4703 = vunpack.c.0.s8 %v4702
        %v4704 = vperm.slane %v4700, %v4703
        %v4705 = vrot.slane %v4642, 4
        %v4706 = vsel %vm1676, %v4705, %v4640
        %v4708 = vunpack.c.l.s4 1983009808
        %v4709 = vunpack.c.0.s8 %v4708
        %v4710 = vperm.slane %v4706, %v4709
        %v4711 = vrot.slane %v4710, 4
        %v4712 = vsel %vm1676, %v4711, %v4704
        %v4714 = vunpack.c.l.s4 1934713408
        %v4715 = vunpack.c.0.s8 %v4714
        %v4716 = vperm.slane %v4712, %v4715
        %v4717 = vrot.slane %v4716, 4
        %v4718 = vsel %vm1676, 0, %v4717
        %v4721 = vpack.i.b16 %v4678, %v4659
        %v4722 = vshrl.u32 %v4659, 16
        %v4723 = vshrl.u32 %v4678, 16
        %v4724 = vpack.i.b16 %v4723, %v4722
        %v4727 = vpack.i.b16 %v4680, %v4661
        %v4728 = vshrl.u32 %v4661, 16
        %v4729 = vshrl.u32 %v4680, 16
        %v4730 = vpack.i.b16 %v4729, %v4728
        %v4733 = vpack.i.b16 %v4716, %v4697
        %v4734 = vshrl.u32 %v4697, 16
        %v4735 = vshrl.u32 %v4716, 16
        %v4736 = vpack.i.b16 %v4735, %v4734
        %v4739 = vpack.i.b16 %v4718, %v4699
        %v4740 = vshrl.u32 %v4699, 16
        %v4741 = vshrl.u32 %v4718, 16
        %v4742 = vpack.i.b16 %v4741, %v4740
        %v4743 = vpack.c.bf16 %v3415, %v3415
        %v4744 = vpack.c.bf16 %v3417, %v3417
        %4747 = vrot.lane.b32.xlu0 %v4743, 96
        %v4748 = vpop.permute.xlu0 %4747
        %4749 = vrot.lane.b32.xlu0 %v4744, 96
        %v4750 = vpop.permute.xlu0 %4749
        %4751 = vrot.lane.b32.xlu0 %v4743, 64
        %v4752 = vpop.permute.xlu0 %4751
        %4753 = vrot.lane.b32.xlu0 %v4744, 64
        %v4754 = vpop.permute.xlu0 %4753
        %4755 = vrot.lane.b32.xlu0 %v4743, 32
        %v4756 = vpop.permute.xlu0 %4755
        %4757 = vrot.lane.b32.xlu0 %v4744, 32
        %v4758 = vpop.permute.xlu0 %4757
        %v4761 = vpack.i.b16 %v4748, %v4743
        %v4762 = vshrl.u32 %v4743, 16
        %v4763 = vshrl.u32 %v4748, 16
        %v4764 = vpack.i.b16 %v4763, %v4762
        %v4767 = vpack.i.b16 %v4756, %v4752
        %v4768 = vshrl.u32 %v4752, 16
        %v4769 = vshrl.u32 %v4756, 16
        %v4770 = vpack.i.b16 %v4769, %v4768
        %v4773 = vpack.i.b16 %v4750, %v4744
        %v4774 = vshrl.u32 %v4744, 16
        %v4775 = vshrl.u32 %v4750, 16
        %v4776 = vpack.i.b16 %v4775, %v4774
        %v4779 = vpack.i.b16 %v4758, %v4754
        %v4780 = vshrl.u32 %v4754, 16
        %v4781 = vshrl.u32 %v4758, 16
        %v4782 = vpack.i.b16 %v4781, %v4780
        %v4785 = vunpack.c.l.s4 1983009808
        %v4786 = vunpack.c.0.s8 %v4785
        %v4787 = vperm.slane %v4761, %v4786
        %v4790 = vunpack.c.l.s4 1983009808
        %v4791 = vunpack.c.0.s8 %v4790
        %v4792 = vperm.slane %v4767, %v4791
        %v4793 = vrot.slane %v4792, 4
        %v4794 = vsel %vm1676, %v4793, %v4787
        %v4795 = vrot.slane %v4787, 4
        %v4796 = vsel %vm1676, %v4792, %v4795
        %v4798 = vunpack.c.l.s4 1934713408
        %v4799 = vunpack.c.0.s8 %v4798
        %v4800 = vperm.slane %v4794, %v4799
        %v4802 = vunpack.c.l.s4 1934713408
        %v4803 = vunpack.c.0.s8 %v4802
        %v4804 = vperm.slane %v4796, %v4803
        %v4805 = vrot.slane %v4800, 4
        %v4806 = vsel %vm1676, 0, %v4805
        %v4807 = vrot.slane %v4804, 4
        %v4808 = vsel %vm1676, 0, %v4807
        %v4811 = vunpack.c.l.s4 1983009808
        %v4812 = vunpack.c.0.s8 %v4811
        %v4813 = vperm.slane %v4764, %v4812
        %v4816 = vunpack.c.l.s4 1983009808
        %v4817 = vunpack.c.0.s8 %v4816
        %v4818 = vperm.slane %v4770, %v4817
        %v4819 = vrot.slane %v4818, 4
        %v4820 = vsel %vm1676, %v4819, %v4813
        %v4821 = vrot.slane %v4813, 4
        %v4822 = vsel %vm1676, %v4818, %v4821
        %v4824 = vunpack.c.l.s4 1934713408
        %v4825 = vunpack.c.0.s8 %v4824
        %v4826 = vperm.slane %v4820, %v4825
        %v4828 = vunpack.c.l.s4 1934713408
        %v4829 = vunpack.c.0.s8 %v4828
        %v4830 = vperm.slane %v4822, %v4829
        %v4831 = vrot.slane %v4826, 4
        %v4832 = vsel %vm1676, 0, %v4831
        %v4833 = vrot.slane %v4830, 4
        %v4834 = vsel %vm1676, 0, %v4833
        %v4837 = vunpack.c.l.s4 1983009808
        %v4838 = vunpack.c.0.s8 %v4837
        %v4839 = vperm.slane %v4773, %v4838
        %v4842 = vunpack.c.l.s4 1983009808
        %v4843 = vunpack.c.0.s8 %v4842
        %v4844 = vperm.slane %v4779, %v4843
        %v4845 = vrot.slane %v4844, 4
        %v4846 = vsel %vm1676, %v4845, %v4839
        %v4847 = vrot.slane %v4839, 4
        %v4848 = vsel %vm1676, %v4844, %v4847
        %v4850 = vunpack.c.l.s4 1934713408
        %v4851 = vunpack.c.0.s8 %v4850
        %v4852 = vperm.slane %v4846, %v4851
        %v4854 = vunpack.c.l.s4 1934713408
        %v4855 = vunpack.c.0.s8 %v4854
        %v4856 = vperm.slane %v4848, %v4855
        %v4857 = vrot.slane %v4852, 4
        %v4858 = vsel %vm1676, 0, %v4857
        %v4859 = vrot.slane %v4856, 4
        %v4860 = vsel %vm1676, 0, %v4859
        %v4863 = vunpack.c.l.s4 1983009808
        %v4864 = vunpack.c.0.s8 %v4863
        %v4865 = vperm.slane %v4776, %v4864
        %v4868 = vunpack.c.l.s4 1983009808
        %v4869 = vunpack.c.0.s8 %v4868
        %v4870 = vperm.slane %v4782, %v4869
        %v4871 = vrot.slane %v4870, 4
        %v4872 = vsel %vm1676, %v4871, %v4865
        %v4873 = vrot.slane %v4865, 4
        %v4874 = vsel %vm1676, %v4870, %v4873
        %v4876 = vunpack.c.l.s4 1934713408
        %v4877 = vunpack.c.0.s8 %v4876
        %v4878 = vperm.slane %v4872, %v4877
        %v4880 = vunpack.c.l.s4 1934713408
        %v4881 = vunpack.c.0.s8 %v4880
        %v4882 = vperm.slane %v4874, %v4881
        %v4883 = vrot.slane %v4878, 4
        %v4884 = vsel %vm1676, 0, %v4883
        %v4885 = vrot.slane %v4882, 4
        %v4886 = vsel %vm1676, 0, %v4885
        %v4887 = vsel %vm1676, %v4807, %v4800
        %v4889 = vunpack.c.l.s4 1983009808
        %v4890 = vunpack.c.0.s8 %v4889
        %v4891 = vperm.slane %v4887, %v4890
        %v4892 = vrot.slane %v4808, 4
        %v4893 = vsel %vm1676, %v4892, %v4806
        %v4895 = vunpack.c.l.s4 1983009808
        %v4896 = vunpack.c.0.s8 %v4895
        %v4897 = vperm.slane %v4893, %v4896
        %v4898 = vrot.slane %v4897, 4
        %v4899 = vsel %vm1676, %v4898, %v4891
        %v4901 = vunpack.c.l.s4 1934713408
        %v4902 = vunpack.c.0.s8 %v4901
        %v4903 = vperm.slane %v4899, %v4902
        %v4904 = vrot.slane %v4903, 4
        %v4905 = vsel %vm1676, 0, %v4904
        %v4906 = vsel %vm1676, %v4833, %v4826
        %v4908 = vunpack.c.l.s4 1983009808
        %v4909 = vunpack.c.0.s8 %v4908
        %v4910 = vperm.slane %v4906, %v4909
        %v4911 = vrot.slane %v4834, 4
        %v4912 = vsel %vm1676, %v4911, %v4832
        %v4914 = vunpack.c.l.s4 1983009808
        %v4915 = vunpack.c.0.s8 %v4914
        %v4916 = vperm.slane %v4912, %v4915
        %v4917 = vrot.slane %v4916, 4
        %v4918 = vsel %vm1676, %v4917, %v4910
        %v4920 = vunpack.c.l.s4 1934713408
        %v4921 = vunpack.c.0.s8 %v4920
        %v4922 = vperm.slane %v4918, %v4921
        %v4923 = vrot.slane %v4922, 4
        %v4924 = vsel %vm1676, 0, %v4923
        %v4925 = vsel %vm1676, %v4859, %v4852
        %v4927 = vunpack.c.l.s4 1983009808
        %v4928 = vunpack.c.0.s8 %v4927
        %v4929 = vperm.slane %v4925, %v4928
        %v4930 = vrot.slane %v4860, 4
        %v4931 = vsel %vm1676, %v4930, %v4858
        %v4933 = vunpack.c.l.s4 1983009808
        %v4934 = vunpack.c.0.s8 %v4933
        %v4935 = vperm.slane %v4931, %v4934
        %v4936 = vrot.slane %v4935, 4
        %v4937 = vsel %vm1676, %v4936, %v4929
        %v4939 = vunpack.c.l.s4 1934713408
        %v4940 = vunpack.c.0.s8 %v4939
        %v4941 = vperm.slane %v4937, %v4940
        %v4942 = vrot.slane %v4941, 4
        %v4943 = vsel %vm1676, 0, %v4942
        %v4944 = vsel %vm1676, %v4885, %v4878
        %v4946 = vunpack.c.l.s4 1983009808
        %v4947 = vunpack.c.0.s8 %v4946
        %v4948 = vperm.slane %v4944, %v4947
        %v4949 = vrot.slane %v4886, 4
        %v4950 = vsel %vm1676, %v4949, %v4884
        %v4952 = vunpack.c.l.s4 1983009808
        %v4953 = vunpack.c.0.s8 %v4952
        %v4954 = vperm.slane %v4950, %v4953
        %v4955 = vrot.slane %v4954, 4
        %v4956 = vsel %vm1676, %v4955, %v4948
        %v4958 = vunpack.c.l.s4 1934713408
        %v4959 = vunpack.c.0.s8 %v4958
        %v4960 = vperm.slane %v4956, %v4959
        %v4961 = vrot.slane %v4960, 4
        %v4962 = vsel %vm1676, 0, %v4961
        %v4965 = vpack.i.b16 %v4922, %v4903
        %v4966 = vshrl.u32 %v4903, 16
        %v4967 = vshrl.u32 %v4922, 16
        %v4968 = vpack.i.b16 %v4967, %v4966
        %v4971 = vpack.i.b16 %v4924, %v4905
        %v4972 = vshrl.u32 %v4905, 16
        %v4973 = vshrl.u32 %v4924, 16
        %v4974 = vpack.i.b16 %v4973, %v4972
        %v4977 = vpack.i.b16 %v4960, %v4941
        %v4978 = vshrl.u32 %v4941, 16
        %v4979 = vshrl.u32 %v4960, 16
        %v4980 = vpack.i.b16 %v4979, %v4978
        %v4983 = vpack.i.b16 %v4962, %v4943
        %v4984 = vshrl.u32 %v4943, 16
        %v4985 = vshrl.u32 %v4962, 16
        %v4986 = vpack.i.b16 %v4985, %v4984
        %v4988 = vperm.slane %v4376, 0
        %v4990 = vunpack.c.l.b16 %v4721
        %v4991 = vunpack.c.l.b16 %v4733
        %v4992 = vpack.c.b16 %v4991, %v4990
        %v4994 = vsel %vm2012, %v4489, 0
        %v4997 = vsel %vm2012, %v4992, 0
        %4999 = vmatpush.bf16.xpose.msra.mxu0 0
        %5000 = vmatpush.bf16.xpose.msra.mxu0 0
        %5001 = vmatpush.bf16.xpose.msra.mxu0 0
        %5002 = vmatpush.bf16.xpose.msra.mxu0 0
        %5003 = vmatpush.bf16.xpose.msra.mxu0 0
        %5004 = vmatpush.bf16.xpose.msra.mxu0 0
        %5005 = vmatpush.bf16.xpose.msra.mxu0 0
        %5006 = vmatpush.bf16.xpose.msra.mxu0 %v4997
        %5007 = vmatmul.bf16.gmra.mxu0 %v4994
        %v5008 = vpop.f32.mrf.mxu0
        %v5009 = vadd.f32 %v4988, %v5008
        %v5010 = vpop.f32.mrf.mxu0
        %5011 = vdwg.mxu0
        %v5012 = vunpack.c.l.b16 %v4724
        %v5013 = vunpack.c.l.b16 %v4736
        %v5014 = vpack.c.b16 %v5013, %v5012
        %v5016 = vsel %vm2012, %v4492, 0
        %v5019 = vsel %vm2012, %v5014, 0
        %5021 = vmatpush.bf16.xpose.msra.mxu0 0
        %5022 = vmatpush.bf16.xpose.msra.mxu0 0
        %5023 = vmatpush.bf16.xpose.msra.mxu0 0
        %5024 = vmatpush.bf16.xpose.msra.mxu0 0
        %5025 = vmatpush.bf16.xpose.msra.mxu0 0
        %5026 = vmatpush.bf16.xpose.msra.mxu0 0
        %5027 = vmatpush.bf16.xpose.msra.mxu0 0
        %5028 = vmatpush.bf16.xpose.msra.mxu0 %v5019
        %5029 = vmatmul.bf16.gmra.mxu0 %v5016
        %v5030 = vpop.f32.mrf.mxu0
        %v5031 = vadd.f32 %v4988, %v5030
        %v5032 = vpop.f32.mrf.mxu0
        %5033 = vdwg.mxu0
        %v5034 = vunpack.c.l.b16 %v4727
        %v5035 = vunpack.c.l.b16 %v4739
        %v5036 = vpack.c.b16 %v5035, %v5034
        %v5038 = vsel %vm2012, %v4495, 0
        %v5041 = vsel %vm2012, %v5036, 0
        %5043 = vmatpush.bf16.xpose.msra.mxu0 0
        %5044 = vmatpush.bf16.xpose.msra.mxu0 0
        %5045 = vmatpush.bf16.xpose.msra.mxu0 0
        %5046 = vmatpush.bf16.xpose.msra.mxu0 0
        %5047 = vmatpush.bf16.xpose.msra.mxu0 0
        %5048 = vmatpush.bf16.xpose.msra.mxu0 0
        %5049 = vmatpush.bf16.xpose.msra.mxu0 0
        %5050 = vmatpush.bf16.xpose.msra.mxu0 %v5041
        %5051 = vmatmul.bf16.gmra.mxu0 %v5038
        %v5052 = vpop.f32.mrf.mxu0
        %v5053 = vadd.f32 %v4988, %v5052
        %v5054 = vpop.f32.mrf.mxu0
        %5055 = vdwg.mxu0
        %v5056 = vunpack.c.l.b16 %v4730
        %v5057 = vunpack.c.l.b16 %v4742
        %v5058 = vpack.c.b16 %v5057, %v5056
        %v5060 = vsel %vm2012, %v4498, 0
        %v5063 = vsel %vm2012, %v5058, 0
        %5065 = vmatpush.bf16.xpose.msra.mxu0 0
        %5066 = vmatpush.bf16.xpose.msra.mxu0 0
        %5067 = vmatpush.bf16.xpose.msra.mxu0 0
        %5068 = vmatpush.bf16.xpose.msra.mxu0 0
        %5069 = vmatpush.bf16.xpose.msra.mxu0 0
        %5070 = vmatpush.bf16.xpose.msra.mxu0 0
        %5071 = vmatpush.bf16.xpose.msra.mxu0 0
        %5072 = vmatpush.bf16.xpose.msra.mxu0 %v5063
        %5073 = vmatmul.bf16.gmra.mxu0 %v5060
        %v5074 = vpop.f32.mrf.mxu0
        %v5075 = vadd.f32 %v4988, %v5074
        %v5076 = vpop.f32.mrf.mxu0
        %5077 = vdwg.mxu0
        %v5078 = vsel %vm4121, %v5009, -inf
        %5079 = vmax.xlane.f32.xlu0 %v5078
        %v5080 = vpop.xlane.xlu0 %5079
        %v5081 = vsel %vm4121, %v5031, -inf
        %5082 = vmax.xlane.f32.xlu0 %v5081
        %v5083 = vpop.xlane.xlu0 %5082
        %v5084 = vsel %vm4121, %v5053, -inf
        %5085 = vmax.xlane.f32.xlu0 %v5084
        %v5086 = vpop.xlane.xlu0 %5085
        %v5087 = vsel %vm4121, %v5075, -inf
        %5088 = vmax.xlane.f32.xlu0 %v5087
        %v5089 = vpop.xlane.xlu0 %5088
        %v5090 = vsub.f32 %v5009, %v5080
        %v5091 = vsub.f32 %v5031, %v5083
        %v5092 = vsub.f32 %v5053, %v5086
        %v5093 = vsub.f32 %v5075, %v5089
        %v5094 = vmul.f32 %v5090, 1.442695
        %v5095 = vpow.pop %v5094
        %v5096 = vmul.f32 %v5091, 1.442695
        %v5097 = vpow.pop %v5096
        %v5098 = vmul.f32 %v5092, 1.442695
        %v5099 = vpow.pop %v5098
        %v5100 = vmul.f32 %v5093, 1.442695
        %v5101 = vpow.pop %v5100
        %v5102 = vsel %vm4121, %v5095, 0.0
        %5103 = vadd.xlane.f32.xlu0 %v5102
        %v5104 = vpop.xlane.xlu0 %5103
        %v5105 = vsel %vm4121, %v5097, 0.0
        %5106 = vadd.xlane.f32.xlu0 %v5105
        %v5107 = vpop.xlane.xlu0 %5106
        %v5108 = vsel %vm4121, %v5099, 0.0
        %5109 = vadd.xlane.f32.xlu0 %v5108
        %v5110 = vpop.xlane.xlu0 %5109
        %v5111 = vsel %vm4121, %v5101, 0.0
        %5112 = vadd.xlane.f32.xlu0 %v5111
        %v5113 = vpop.xlane.xlu0 %5112
        %v5114 = vrcp.pop %v5104
        %v5115 = vrcp.pop %v5107
        %v5116 = vrcp.pop %v5110
        %v5117 = vrcp.pop %v5113
        %v5118 = vmul.f32 %v5095, %v5114
        %v5119 = vmul.f32 %v5097, %v5115
        %v5120 = vmul.f32 %v5099, %v5116
        %v5121 = vmul.f32 %v5101, %v5117
        %v5122 = vpack.c.bf16 %v5118, %v5118
        %v5123 = vpack.c.bf16 %v5119, %v5119
        %v5124 = vpack.c.bf16 %v5120, %v5120
        %v5125 = vpack.c.bf16 %v5121, %v5121
        %v5126 = vunpack.c.l.b16 %v4965
        %v5127 = vunpack.c.l.b16 %v4977
        %v5128 = vpack.c.b16 %v5127, %v5126
        %v5131 = vsel %vm4121, %v5122, 0
        %5133 = vmatpush.bf16.msra.mxu0 0
        %5134 = vmatpush.bf16.msra.mxu0 0
        %5135 = vmatpush.bf16.msra.mxu0 0
        %5136 = vmatpush.bf16.msra.mxu0 0
        %5137 = vmatpush.bf16.msra.mxu0 0
        %5138 = vmatpush.bf16.msra.mxu0 0
        %5139 = vmatpush.bf16.msra.mxu0 0
        %5140 = vmatpush.bf16.msra.mxu0 %v5128
        %5141 = vmatmul.bf16.gmra.mxu0 %v5131
        %v5142 = vpop.f32.mrf.mxu0
        %v5143 = vadd.f32 0.0, %v5142
        %v5144 = vpop.f32.mrf.mxu0
        %5145 = vdwg.mxu0
        %v5146 = vunpack.c.l.b16 %v4968
        %v5147 = vunpack.c.l.b16 %v4980
        %v5148 = vpack.c.b16 %v5147, %v5146
        %v5151 = vsel %vm4121, %v5123, 0
        %5153 = vmatpush.bf16.msra.mxu0 0
        %5154 = vmatpush.bf16.msra.mxu0 0
        %5155 = vmatpush.bf16.msra.mxu0 0
        %5156 = vmatpush.bf16.msra.mxu0 0
        %5157 = vmatpush.bf16.msra.mxu0 0
        %5158 = vmatpush.bf16.msra.mxu0 0
        %5159 = vmatpush.bf16.msra.mxu0 0
        %5160 = vmatpush.bf16.msra.mxu0 %v5148
        %5161 = vmatmul.bf16.gmra.mxu0 %v5151
        %v5162 = vpop.f32.mrf.mxu0
        %v5163 = vadd.f32 0.0, %v5162
        %v5164 = vpop.f32.mrf.mxu0
        %5165 = vdwg.mxu0
        %v5166 = vunpack.c.l.b16 %v4971
        %v5167 = vunpack.c.l.b16 %v4983
        %v5168 = vpack.c.b16 %v5167, %v5166
        %v5171 = vsel %vm4121, %v5124, 0
        %5173 = vmatpush.bf16.msra.mxu0 0
        %5174 = vmatpush.bf16.msra.mxu0 0
        %5175 = vmatpush.bf16.msra.mxu0 0
        %5176 = vmatpush.bf16.msra.mxu0 0
        %5177 = vmatpush.bf16.msra.mxu0 0
        %5178 = vmatpush.bf16.msra.mxu0 0
        %5179 = vmatpush.bf16.msra.mxu0 0
        %5180 = vmatpush.bf16.msra.mxu0 %v5168
        %5181 = vmatmul.bf16.gmra.mxu0 %v5171
        %v5182 = vpop.f32.mrf.mxu0
        %v5183 = vadd.f32 0.0, %v5182
        %v5184 = vpop.f32.mrf.mxu0
        %5185 = vdwg.mxu0
        %v5186 = vunpack.c.l.b16 %v4974
        %v5187 = vunpack.c.l.b16 %v4986
        %v5188 = vpack.c.b16 %v5187, %v5186
        %v5191 = vsel %vm4121, %v5125, 0
        %5193 = vmatpush.bf16.msra.mxu0 0
        %5194 = vmatpush.bf16.msra.mxu0 0
        %5195 = vmatpush.bf16.msra.mxu0 0
        %5196 = vmatpush.bf16.msra.mxu0 0
        %5197 = vmatpush.bf16.msra.mxu0 0
        %5198 = vmatpush.bf16.msra.mxu0 0
        %5199 = vmatpush.bf16.msra.mxu0 0
        %5200 = vmatpush.bf16.msra.mxu0 %v5188
        %5201 = vmatmul.bf16.gmra.mxu0 %v5191
        %v5202 = vpop.f32.mrf.mxu0
        %v5203 = vadd.f32 0.0, %v5202
        %v5204 = vpop.f32.mrf.mxu0
        %5205 = vdwg.mxu0
        %v5206 = vrot.slane %v5183, 4
        %v5207 = vsel %vm2216, %v5206, %v5143
        %v5208 = vrot.slane %v5143, 4
        %v5209 = vsel %vm2216, %v5183, %v5208
        %v5211 = vunpack.c.l.s4 1983009808
        %v5212 = vunpack.c.0.s8 %v5211
        %v5213 = vperm.slane %v5207, %v5212
        %v5215 = vunpack.c.l.s4 1983009808
        %v5216 = vunpack.c.0.s8 %v5215
        %v5217 = vperm.slane %v5209, %v5216
        %v5218 = vrot.slane %v5203, 4
        %v5219 = vsel %vm2216, %v5218, %v5163
        %v5220 = vrot.slane %v5163, 4
        %v5221 = vsel %vm2216, %v5203, %v5220
        %v5223 = vunpack.c.l.s4 1983009808
        %v5224 = vunpack.c.0.s8 %v5223
        %v5225 = vperm.slane %v5219, %v5224
        %v5227 = vunpack.c.l.s4 1983009808
        %v5228 = vunpack.c.0.s8 %v5227
        %v5229 = vperm.slane %v5221, %v5228
        %v5230 = vrot.slane %v5225, 4
        %v5231 = vsel %vm2216, %v5230, %v5213
        %v5232 = vrot.slane %v5213, 4
        %v5233 = vsel %vm2216, %v5225, %v5232
        %v5235 = vunpack.c.l.s4 1934713408
        %v5236 = vunpack.c.0.s8 %v5235
        %v5237 = vperm.slane %v5231, %v5236
        %v5239 = vunpack.c.l.s4 1934713408
        %v5240 = vunpack.c.0.s8 %v5239
        %v5241 = vperm.slane %v5233, %v5240
        %v5242 = vrot.slane %v5229, 4
        %v5243 = vsel %vm2216, %v5242, %v5217
        %v5244 = vrot.slane %v5217, 4
        %v5245 = vsel %vm2216, %v5229, %v5244
        %v5247 = vunpack.c.l.s4 1934713408
        %v5248 = vunpack.c.0.s8 %v5247
        %v5249 = vperm.slane %v5243, %v5248
        %v5251 = vunpack.c.l.s4 1934713408
        %v5252 = vunpack.c.0.s8 %v5251
        %v5253 = vperm.slane %v5245, %v5252
        %v5254 = vrot.slane %v5237, 4
        %v5255 = vsel %vm2216, 0.0, %v5254
        %v5256 = vrot.slane %v5241, 4
        %v5257 = vsel %vm2216, 0.0, %v5256
        %v5258 = vrot.slane %v5249, 4
        %v5259 = vsel %vm2216, 0.0, %v5258
        %v5260 = vrot.slane %v5253, 4
        %v5261 = vsel %vm2216, 0.0, %v5260
        %v5262 = vsel %vm2216, %v5256, %v5237
        %v5264 = vunpack.c.l.s4 1983009808
        %v5265 = vunpack.c.0.s8 %v5264
        %v5266 = vperm.slane %v5262, %v5265
        %v5267 = vrot.slane %v5257, 4
        %v5268 = vsel %vm2216, %v5267, %v5255
        %v5270 = vunpack.c.l.s4 1983009808
        %v5271 = vunpack.c.0.s8 %v5270
        %v5272 = vperm.slane %v5268, %v5271
        %v5273 = vsel %vm2216, %v5260, %v5249
        %v5275 = vunpack.c.l.s4 1983009808
        %v5276 = vunpack.c.0.s8 %v5275
        %v5277 = vperm.slane %v5273, %v5276
        %v5278 = vrot.slane %v5261, 4
        %v5279 = vsel %vm2216, %v5278, %v5259
        %v5281 = vunpack.c.l.s4 1983009808
        %v5282 = vunpack.c.0.s8 %v5281
        %v5283 = vperm.slane %v5279, %v5282
        %v5284 = vrot.slane %v5272, 4
        %v5285 = vsel %vm2216, %v5284, %v5266
        %v5286 = vrot.slane %v5266, 4
        %v5287 = vsel %vm2216, %v5272, %v5286
        %v5289 = vunpack.c.l.s4 1934713408
        %v5290 = vunpack.c.0.s8 %v5289
        %v5291 = vperm.slane %v5285, %v5290
        %v5293 = vunpack.c.l.s4 1934713408
        %v5294 = vunpack.c.0.s8 %v5293
        %v5295 = vperm.slane %v5287, %v5294
        %v5296 = vrot.slane %v5283, 4
        %v5297 = vsel %vm2216, %v5296, %v5277
        %v5298 = vrot.slane %v5277, 4
        %v5299 = vsel %vm2216, %v5283, %v5298
        %v5301 = vunpack.c.l.s4 1934713408
        %v5302 = vunpack.c.0.s8 %v5301
        %v5303 = vperm.slane %v5297, %v5302
        %v5305 = vunpack.c.l.s4 1934713408
        %v5306 = vunpack.c.0.s8 %v5305
        %v5307 = vperm.slane %v5299, %v5306
        %v5308 = vrot.slane %v5303, 4
        %v5309 = vsel %vm2216, %v5308, %v5291
        %v5310 = vrot.slane %v5291, 4
        %v5311 = vsel %vm2216, %v5303, %v5310
        %v5312 = vrot.slane %v5307, 4
        %v5313 = vsel %vm2216, %v5312, %v5295
        %v5314 = vrot.slane %v5295, 4
        %v5315 = vsel %vm2216, %v5307, %v5314
        %5317 = vrot.lane.b32.xlu0 %v5311, 32
        %v5318 = vpop.permute.xlu0 %5317
        %5321 = vrot.lane.b32.xlu0 %v5313, 64
        %v5322 = vpop.permute.xlu0 %5321
        %5325 = vrot.lane.b32.xlu0 %v5315, 96
        %v5326 = vpop.permute.xlu0 %5325
        %v5328 = vsel %vm2012, %v5309, %v5318
        %v5329 = vsel %vm2339, %v5328, %v5322
        %v5330 = vsel %vm2341, %v5329, %v5326
        %v5331 = vpack.c.bf16 %v5330, %v4374
        %v5332 = vld [vmem:[%s1220] sm:$0xf]
        %v5333 = vld [vmem:[%s1220 + $0x4] sm:$0xf]
        %v5334 = vld [vmem:[%s1220 + $0x8] sm:$0xf]
        %v5335 = vld [vmem:[%s1220 + $0xc] sm:$0xf]
        %v5336 = vld [vmem:[%s1220 + $0x10] sm:$0xf]
        %v5337 = vld [vmem:[%s1220 + $0x14] sm:$0xf]
        %v5338 = vld [vmem:[%s1220 + $0x18] sm:$0xf]
        %v5339 = vld [vmem:[%s1220 + $0x1c] sm:$0xf]
        %v5340 = vld [vmem:[%s1220 + $0x20] sm:$0xf]
        %v5341 = vld [vmem:[%s1220 + $0x24] sm:$0xf]
        %v5342 = vld [vmem:[%s1220 + $0x28] sm:$0xf]
        %v5343 = vld [vmem:[%s1220 + $0x2c] sm:$0xf]
        %v5344 = vld [vmem:[%s1220 + $0x30] sm:$0xf]
        %v5345 = vld [vmem:[%s1220 + $0x34] sm:$0xf]
        %v5346 = vld [vmem:[%s1220 + $0x38] sm:$0xf]
        %v5347 = vld [vmem:[%s1220 + $0x3c] sm:$0xf]
        %v5348 = vld [vmem:[%s1394] sm:$0x1]
        %v5350 = vperm.slane %v5348, 0
        %v5368 = vunpack.c.l.b16 %v5332
        %v5369 = vunpack.c.l.b16 %v5333
        %v5370 = vunpack.c.l.b16 %v5334
        %v5371 = vunpack.c.l.b16 %v5335
        %v5372 = vunpack.c.l.b16 %v5336
        %v5373 = vunpack.c.l.b16 %v5337
        %v5374 = vunpack.c.l.b16 %v5338
        %v5375 = vunpack.c.l.b16 %v5339
        %v5376 = vunpack.c.l.b16 %v5340
        %v5377 = vunpack.c.l.b16 %v5341
        %v5378 = vunpack.c.l.b16 %v5342
        %v5379 = vunpack.c.l.b16 %v5343
        %v5380 = vunpack.c.l.b16 %v5344
        %v5381 = vunpack.c.l.b16 %v5345
        %v5382 = vunpack.c.l.b16 %v5346
        %v5383 = vunpack.c.l.b16 %v5347
        %v5384 = vpack.c.b16 %v5369, %v5368
        %v5385 = vpack.c.b16 %v5371, %v5370
        %v5386 = vpack.c.b16 %v5373, %v5372
        %v5387 = vpack.c.b16 %v5375, %v5374
        %v5388 = vpack.c.b16 %v5377, %v5376
        %v5389 = vpack.c.b16 %v5379, %v5378
        %v5390 = vpack.c.b16 %v5381, %v5380
        %v5391 = vpack.c.b16 %v5383, %v5382
        %5400 = vmatpush.bf16.msra.mxu0 %v5391
        %5401 = vmatpush.bf16.msra.mxu0 %v5390
        %5402 = vmatpush.bf16.msra.mxu0 %v5389
        %5403 = vmatpush.bf16.msra.mxu0 %v5388
        %5404 = vmatpush.bf16.msra.mxu0 %v5387
        %5405 = vmatpush.bf16.msra.mxu0 %v5386
        %5406 = vmatpush.bf16.msra.mxu0 %v5385
        %5407 = vmatpush.bf16.msra.mxu0 %v5384
        %5408 = vmatmul.bf16.gmra.mxu0 %v5331
        %v5409 = vpop.f32.mrf.mxu0
        %v5410 = vadd.f32 %v5350, %v5409
        %v5411 = vpop.f32.mrf.mxu0
        %v5412 = vadd.f32 %v5350, %v5411
        %5413 = vdwg.mxu0
        %v5414 = vadd.f32 %v3178, %v5410
        %v5415 = vadd.f32 %v3179, %v5412
        %v5416 = vld [vmem:[%s1397] sm:$0x1]
        %v5417 = vld [vmem:[%s1400] sm:$0x1]
        %5418 = vadd.xlane.f32.xlu0 %v5414
        %v5419 = vpop.xlane.xlu0 %5418
        %5420 = vadd.xlane.f32.xlu0 %v5415
        %v5421 = vpop.xlane.xlu0 %5420
        %v5422 = vmul.f32 %v5419, %v3133
        %v5423 = vmul.f32 %v5421, %v3133
        %v5424 = vsub.f32 %v5414, %v5422
        %v5425 = vsub.f32 %v5415, %v5423
        %v5426 = vmul.f32 %v5424, %v5424
        %v5427 = vmul.f32 %v5425, %v5425
        %5428 = vadd.xlane.f32.xlu0 %v5426
        %v5429 = vpop.xlane.xlu0 %5428
        %5430 = vadd.xlane.f32.xlu0 %v5427
        %v5431 = vpop.xlane.xlu0 %5430
        %v5432 = vmul.f32 %v5429, %v3133
        %v5433 = vmul.f32 %v5431, %v3133
        %v5434 = vadd.f32 %v5432, 1e-05
        %v5435 = vadd.f32 %v5433, 1e-05
        %v5436 = vrsqrt.pop %v5434
        %v5437 = vmul.f32 %v5436, %v5434
        %v5438 = vmul.f32 %v5437, %v5436
        %v5439 = vmul.f32 0.5, %v5438
        %v5440 = vsub.f32 1.5, %v5439
        %v5441 = vmul.f32 %v5436, %v5440
        %vm5442 = vweird.f32 %v5434
        %vm5443 = vweird.f32 %v5436
        %vm5444 = vmor %vm5442, %vm5443
        %v5445 = vsel %vm5444, %v5436, %v5441
        %v5446 = vrsqrt.pop %v5435
        %v5447 = vmul.f32 %v5446, %v5435
        %v5448 = vmul.f32 %v5447, %v5446
        %v5449 = vmul.f32 0.5, %v5448
        %v5450 = vsub.f32 1.5, %v5449
        %v5451 = vmul.f32 %v5446, %v5450
        %vm5452 = vweird.f32 %v5435
        %vm5453 = vweird.f32 %v5446
        %vm5454 = vmor %vm5452, %vm5453
        %v5455 = vsel %vm5454, %v5446, %v5451
        %v5456 = vmul.f32 %v5424, %v5445
        %v5457 = vmul.f32 %v5425, %v5455
        %v5459 = vperm.slane %v5416, 0
        %v5461 = vmul.f32 %v5456, %v5459
        %v5462 = vmul.f32 %v5457, %v5459
        %v5464 = vperm.slane %v5417, 0
        %v5466 = vadd.f32 %v5461, %v5464
        %v5467 = vadd.f32 %v5462, %v5464
        %v5468 = vpack.c.bf16 %v5467, %v5466
        %v5469 = vld [vmem:[%s1230] sm:$0xff]
        %v5470 = vld [vmem:[%s1230 + $0x8] sm:$0xff]
        %v5471 = vld [vmem:[%s1230 + $0x10] sm:$0xff]
        %v5472 = vld [vmem:[%s1230 + $0x18] sm:$0xff]
        %v5473 = vld [vmem:[%s1230 + $0x20] sm:$0xff]
        %v5474 = vld [vmem:[%s1230 + $0x28] sm:$0xff]
        %v5475 = vld [vmem:[%s1230 + $0x30] sm:$0xff]
        %v5476 = vld [vmem:[%s1230 + $0x38] sm:$0xff]
        %v5477 = vld [vmem:[%s1230 + $0x40] sm:$0xff]
        %v5478 = vld [vmem:[%s1230 + $0x48] sm:$0xff]
        %v5479 = vld [vmem:[%s1230 + $0x50] sm:$0xff]
        %v5480 = vld [vmem:[%s1230 + $0x58] sm:$0xff]
        %v5481 = vld [vmem:[%s1230 + $0x60] sm:$0xff]
        %v5482 = vld [vmem:[%s1230 + $0x68] sm:$0xff]
        %v5483 = vld [vmem:[%s1230 + $0x70] sm:$0xff]
        %v5484 = vld [vmem:[%s1230 + $0x78] sm:$0xff]
        %v5485 = vld [vmem:[%s1404] sm:$0x3]
        %v5487 = vperm.slane %v5485, 0
        %v5488 = vperm.slane %v5485, 1
        %v5507 = vunpack.c.l.b16 %v5469
        %v5508 = vunpack.c.h.b16 %v5469
        %v5509 = vunpack.c.l.b16 %v5470
        %v5510 = vunpack.c.h.b16 %v5470
        %v5511 = vunpack.c.l.b16 %v5471
        %v5512 = vunpack.c.h.b16 %v5471
        %v5513 = vunpack.c.l.b16 %v5472
        %v5514 = vunpack.c.h.b16 %v5472
        %v5515 = vunpack.c.l.b16 %v5473
        %v5516 = vunpack.c.h.b16 %v5473
        %v5517 = vunpack.c.l.b16 %v5474
        %v5518 = vunpack.c.h.b16 %v5474
        %v5519 = vunpack.c.l.b16 %v5475
        %v5520 = vunpack.c.h.b16 %v5475
        %v5521 = vunpack.c.l.b16 %v5476
        %v5522 = vunpack.c.h.b16 %v5476
        %v5523 = vunpack.c.l.b16 %v5477
        %v5524 = vunpack.c.h.b16 %v5477
        %v5525 = vunpack.c.l.b16 %v5478
        %v5526 = vunpack.c.h.b16 %v5478
        %v5527 = vunpack.c.l.b16 %v5479
        %v5528 = vunpack.c.h.b16 %v5479
        %v5529 = vunpack.c.l.b16 %v5480
        %v5530 = vunpack.c.h.b16 %v5480
        %v5531 = vunpack.c.l.b16 %v5481
        %v5532 = vunpack.c.h.b16 %v5481
        %v5533 = vunpack.c.l.b16 %v5482
        %v5534 = vunpack.c.h.b16 %v5482
        %v5535 = vunpack.c.l.b16 %v5483
        %v5536 = vunpack.c.h.b16 %v5483
        %v5537 = vunpack.c.l.b16 %v5484
        %v5538 = vunpack.c.h.b16 %v5484
        %v5539 = vpack.c.b16 %v5509, %v5507
        %v5540 = vpack.c.b16 %v5510, %v5508
        %v5541 = vpack.c.b16 %v5513, %v5511
        %v5542 = vpack.c.b16 %v5514, %v5512
        %v5543 = vpack.c.b16 %v5517, %v5515
        %v5544 = vpack.c.b16 %v5518, %v5516
        %v5545 = vpack.c.b16 %v5521, %v5519
        %v5546 = vpack.c.b16 %v5522, %v5520
        %v5547 = vpack.c.b16 %v5525, %v5523
        %v5548 = vpack.c.b16 %v5526, %v5524
        %v5549 = vpack.c.b16 %v5529, %v5527
        %v5550 = vpack.c.b16 %v5530, %v5528
        %v5551 = vpack.c.b16 %v5533, %v5531
        %v5552 = vpack.c.b16 %v5534, %v5532
        %v5553 = vpack.c.b16 %v5537, %v5535
        %v5554 = vpack.c.b16 %v5538, %v5536
        %5571 = vmatpush.bf16.msra.mxu0 %v5553
        %5572 = vmatpush.bf16.msra.mxu0 %v5551
        %5573 = vmatpush.bf16.msra.mxu0 %v5549
        %5574 = vmatpush.bf16.msra.mxu0 %v5547
        %5575 = vmatpush.bf16.msra.mxu0 %v5545
        %5576 = vmatpush.bf16.msra.mxu0 %v5543
        %5577 = vmatpush.bf16.msra.mxu0 %v5541
        %5578 = vmatpush.bf16.msra.mxu0 %v5539
        %5579 = vmatmul.bf16.gmra.mxu0 %v5468
        %v5580 = vpop.f32.mrf.mxu0
        %v5581 = vadd.f32 %v5487, %v5580
        %v5582 = vpop.f32.mrf.mxu0
        %v5583 = vadd.f32 %v5487, %v5582
        %5584 = vdwg.mxu0
        %5585 = vmatpush.bf16.msra.mxu0 %v5554
        %5586 = vmatpush.bf16.msra.mxu0 %v5552
        %5587 = vmatpush.bf16.msra.mxu0 %v5550
        %5588 = vmatpush.bf16.msra.mxu0 %v5548
        %5589 = vmatpush.bf16.msra.mxu0 %v5546
        %5590 = vmatpush.bf16.msra.mxu0 %v5544
        %5591 = vmatpush.bf16.msra.mxu0 %v5542
        %5592 = vmatpush.bf16.msra.mxu0 %v5540
        %5593 = vmatmul.bf16.gmra.mxu0 %v5468
        %v5594 = vpop.f32.mrf.mxu0
        %v5595 = vadd.f32 %v5488, %v5594
        %v5596 = vpop.f32.mrf.mxu0
        %v5597 = vadd.f32 %v5488, %v5596
        %5598 = vdwg.mxu0
        %v5599 = vmul.f32 %v5581, 0.5
        %v5600 = vmul.f32 %v5595, 0.5
        %v5601 = vmul.f32 %v5583, 0.5
        %v5602 = vmul.f32 %v5597, 0.5
        %v5603 = vmul.f32 %v5581, 0.70710677
        %v5604 = vmul.f32 %v5595, 0.70710677
        %v5605 = vmul.f32 %v5583, 0.70710677
        %v5606 = vmul.f32 %v5597, 0.70710677
        %v5607 = vmul.f32 %v5603, %v5603
        %v5608 = vmin.f32 16.0, %v5607
        %v5609 = vmul.f32 %v5608, 2.1237322e-06
        %v5610 = vadd.f32 %v5609, 0.00028619796
        %v5611 = vmul.f32 %v5608, %v5610
        %v5612 = vadd.f32 %v5611, 0.0036580483
        %v5613 = vmul.f32 %v5608, %v5612
        %v5614 = vadd.f32 %v5613, 0.05243302
        %v5615 = vmul.f32 %v5608, %v5614
        %v5616 = vadd.f32 %v5615, 0.18741608
        %v5617 = vmul.f32 %v5608, %v5616
        %v5618 = vadd.f32 %v5617, 1.1283791
        %v5619 = vmul.f32 %v5603, %v5618
        %v5620 = vmul.f32 %v5608, 3.8918573e-05
        %v5621 = vadd.f32 %v5620, 0.001143296
        %v5622 = vmul.f32 %v5608, %v5621
        %v5623 = vadd.f32 %v5622, 0.014752088
        %v5624 = vmul.f32 %v5608, %v5623
        %v5625 = vadd.f32 %v5624, 0.112945676
        %v5626 = vmul.f32 %v5608, %v5625
        %v5627 = vadd.f32 %v5626, 0.4994258
        %v5628 = vmul.f32 %v5608, %v5627
        %v5629 = vadd.f32 %v5628, 1.0
        %v5630 = vrcp.pop %v5629
        %v5631 = vmul.f32 %v5629, %v5630
        %v5632 = vsub.f32 1.0, %v5631
        %v5633 = vmul.f32 %v5630, %v5632
        %v5634 = vadd.f32 %v5630, %v5633
        %vm5635 = vweird.f32 %v5629
        %vm5636 = vweird.f32 %v5630
        %vm5637 = vmor %vm5635, %vm5636
        %v5638 = vsel %vm5637, %v5630, %v5634
        %v5639 = vand.u32 2147483647, %v5629
        %vm5640 = vcmp.eq.f32.partialorder %v5639, 8.507059e+37
        %v5641 = vand.u32 %v5629, 2147483648
        %v5642 = vor.u32 1.1754944e-38, %v5641
        %v5643 = vsel %vm5640, %v5642, %v5638
        %v5644 = vmul.f32 %v5619, %v5643
        %v5645 = vmin.f32 %v5644, 1.0
        %v5646 = vmax.f32 %v5645, -1.0
        %v5647 = vmul.f32 %v5604, %v5604
        %v5648 = vmin.f32 16.0, %v5647
        %v5649 = vmul.f32 %v5648, 2.1237322e-06
        %v5650 = vadd.f32 %v5649, 0.00028619796
        %v5651 = vmul.f32 %v5648, %v5650
        %v5652 = vadd.f32 %v5651, 0.0036580483
        %v5653 = vmul.f32 %v5648, %v5652
        %v5654 = vadd.f32 %v5653, 0.05243302
        %v5655 = vmul.f32 %v5648, %v5654
        %v5656 = vadd.f32 %v5655, 0.18741608
        %v5657 = vmul.f32 %v5648, %v5656
        %v5658 = vadd.f32 %v5657, 1.1283791
        %v5659 = vmul.f32 %v5604, %v5658
        %v5660 = vmul.f32 %v5648, 3.8918573e-05
        %v5661 = vadd.f32 %v5660, 0.001143296
        %v5662 = vmul.f32 %v5648, %v5661
        %v5663 = vadd.f32 %v5662, 0.014752088
        %v5664 = vmul.f32 %v5648, %v5663
        %v5665 = vadd.f32 %v5664, 0.112945676
        %v5666 = vmul.f32 %v5648, %v5665
        %v5667 = vadd.f32 %v5666, 0.4994258
        %v5668 = vmul.f32 %v5648, %v5667
        %v5669 = vadd.f32 %v5668, 1.0
        %v5670 = vrcp.pop %v5669
        %v5671 = vmul.f32 %v5669, %v5670
        %v5672 = vsub.f32 1.0, %v5671
        %v5673 = vmul.f32 %v5670, %v5672
        %v5674 = vadd.f32 %v5670, %v5673
        %vm5675 = vweird.f32 %v5669
        %vm5676 = vweird.f32 %v5670
        %vm5677 = vmor %vm5675, %vm5676
        %v5678 = vsel %vm5677, %v5670, %v5674
        %v5679 = vand.u32 2147483647, %v5669
        %vm5680 = vcmp.eq.f32.partialorder %v5679, 8.507059e+37
        %v5681 = vand.u32 %v5669, 2147483648
        %v5682 = vor.u32 1.1754944e-38, %v5681
        %v5683 = vsel %vm5680, %v5682, %v5678
        %v5684 = vmul.f32 %v5659, %v5683
        %v5685 = vmin.f32 %v5684, 1.0
        %v5686 = vmax.f32 %v5685, -1.0
        %v5687 = vmul.f32 %v5605, %v5605
        %v5688 = vmin.f32 16.0, %v5687
        %v5689 = vmul.f32 %v5688, 2.1237322e-06
        %v5690 = vadd.f32 %v5689, 0.00028619796
        %v5691 = vmul.f32 %v5688, %v5690
        %v5692 = vadd.f32 %v5691, 0.0036580483
        %v5693 = vmul.f32 %v5688, %v5692
        %v5694 = vadd.f32 %v5693, 0.05243302
        %v5695 = vmul.f32 %v5688, %v5694
        %v5696 = vadd.f32 %v5695, 0.18741608
        %v5697 = vmul.f32 %v5688, %v5696
        %v5698 = vadd.f32 %v5697, 1.1283791
        %v5699 = vmul.f32 %v5605, %v5698
        %v5700 = vmul.f32 %v5688, 3.8918573e-05
        %v5701 = vadd.f32 %v5700, 0.001143296
        %v5702 = vmul.f32 %v5688, %v5701
        %v5703 = vadd.f32 %v5702, 0.014752088
        %v5704 = vmul.f32 %v5688, %v5703
        %v5705 = vadd.f32 %v5704, 0.112945676
        %v5706 = vmul.f32 %v5688, %v5705
        %v5707 = vadd.f32 %v5706, 0.4994258
        %v5708 = vmul.f32 %v5688, %v5707
        %v5709 = vadd.f32 %v5708, 1.0
        %v5710 = vrcp.pop %v5709
        %v5711 = vmul.f32 %v5709, %v5710
        %v5712 = vsub.f32 1.0, %v5711
        %v5713 = vmul.f32 %v5710, %v5712
        %v5714 = vadd.f32 %v5710, %v5713
        %vm5715 = vweird.f32 %v5709
        %vm5716 = vweird.f32 %v5710
        %vm5717 = vmor %vm5715, %vm5716
        %v5718 = vsel %vm5717, %v5710, %v5714
        %v5719 = vand.u32 2147483647, %v5709
        %vm5720 = vcmp.eq.f32.partialorder %v5719, 8.507059e+37
        %v5721 = vand.u32 %v5709, 2147483648
        %v5722 = vor.u32 1.1754944e-38, %v5721
        %v5723 = vsel %vm5720, %v5722, %v5718
        %v5724 = vmul.f32 %v5699, %v5723
        %v5725 = vmin.f32 %v5724, 1.0
        %v5726 = vmax.f32 %v5725, -1.0
        %v5727 = vmul.f32 %v5606, %v5606
        %v5728 = vmin.f32 16.0, %v5727
        %v5729 = vmul.f32 %v5728, 2.1237322e-06
        %v5730 = vadd.f32 %v5729, 0.00028619796
        %v5731 = vmul.f32 %v5728, %v5730
        %v5732 = vadd.f32 %v5731, 0.0036580483
        %v5733 = vmul.f32 %v5728, %v5732
        %v5734 = vadd.f32 %v5733, 0.05243302
        %v5735 = vmul.f32 %v5728, %v5734
        %v5736 = vadd.f32 %v5735, 0.18741608
        %v5737 = vmul.f32 %v5728, %v5736
        %v5738 = vadd.f32 %v5737, 1.1283791
        %v5739 = vmul.f32 %v5606, %v5738
        %v5740 = vmul.f32 %v5728, 3.8918573e-05
        %v5741 = vadd.f32 %v5740, 0.001143296
        %v5742 = vmul.f32 %v5728, %v5741
        %v5743 = vadd.f32 %v5742, 0.014752088
        %v5744 = vmul.f32 %v5728, %v5743
        %v5745 = vadd.f32 %v5744, 0.112945676
        %v5746 = vmul.f32 %v5728, %v5745
        %v5747 = vadd.f32 %v5746, 0.4994258
        %v5748 = vmul.f32 %v5728, %v5747
        %v5749 = vadd.f32 %v5748, 1.0
        %v5750 = vrcp.pop %v5749
        %v5751 = vmul.f32 %v5749, %v5750
        %v5752 = vsub.f32 1.0, %v5751
        %v5753 = vmul.f32 %v5750, %v5752
        %v5754 = vadd.f32 %v5750, %v5753
        %vm5755 = vweird.f32 %v5749
        %vm5756 = vweird.f32 %v5750
        %vm5757 = vmor %vm5755, %vm5756
        %v5758 = vsel %vm5757, %v5750, %v5754
        %v5759 = vand.u32 2147483647, %v5749
        %vm5760 = vcmp.eq.f32.partialorder %v5759, 8.507059e+37
        %v5761 = vand.u32 %v5749, 2147483648
        %v5762 = vor.u32 1.1754944e-38, %v5761
        %v5763 = vsel %vm5760, %v5762, %v5758
        %v5764 = vmul.f32 %v5739, %v5763
        %v5765 = vmin.f32 %v5764, 1.0
        %v5766 = vmax.f32 %v5765, -1.0
        %v5767 = vadd.f32 %v5646, 1.0
        %v5768 = vadd.f32 %v5686, 1.0
        %v5769 = vadd.f32 %v5726, 1.0
        %v5770 = vadd.f32 %v5766, 1.0
        %v5771 = vmul.f32 %v5599, %v5767
        %v5772 = vmul.f32 %v5600, %v5768
        %v5773 = vmul.f32 %v5601, %v5769
        %v5774 = vmul.f32 %v5602, %v5770
        %v5775 = vpack.c.bf16 %v5773, %v5771
        %v5776 = vpack.c.bf16 %v5774, %v5772
        %v5777 = vld [vmem:[%s1240] sm:$0xf]
        %v5778 = vld [vmem:[%s1240 + $0x4] sm:$0xf]
        %v5779 = vld [vmem:[%s1240 + $0x8] sm:$0xf]
        %v5780 = vld [vmem:[%s1240 + $0xc] sm:$0xf]
        %v5781 = vld [vmem:[%s1240 + $0x10] sm:$0xf]
        %v5782 = vld [vmem:[%s1240 + $0x14] sm:$0xf]
        %v5783 = vld [vmem:[%s1240 + $0x18] sm:$0xf]
        %v5784 = vld [vmem:[%s1240 + $0x1c] sm:$0xf]
        %v5785 = vld [vmem:[%s1240 + $0x20] sm:$0xf]
        %v5786 = vld [vmem:[%s1240 + $0x24] sm:$0xf]
        %v5787 = vld [vmem:[%s1240 + $0x28] sm:$0xf]
        %v5788 = vld [vmem:[%s1240 + $0x2c] sm:$0xf]
        %v5789 = vld [vmem:[%s1240 + $0x30] sm:$0xf]
        %v5790 = vld [vmem:[%s1240 + $0x34] sm:$0xf]
        %v5791 = vld [vmem:[%s1240 + $0x38] sm:$0xf]
        %v5792 = vld [vmem:[%s1240 + $0x3c] sm:$0xf]
        %v5793 = vld [vmem:[%s1240 + $0x40] sm:$0xf]
        %v5794 = vld [vmem:[%s1240 + $0x44] sm:$0xf]
        %v5795 = vld [vmem:[%s1240 + $0x48] sm:$0xf]
        %v5796 = vld [vmem:[%s1240 + $0x4c] sm:$0xf]
        %v5797 = vld [vmem:[%s1240 + $0x50] sm:$0xf]
        %v5798 = vld [vmem:[%s1240 + $0x54] sm:$0xf]
        %v5799 = vld [vmem:[%s1240 + $0x58] sm:$0xf]
        %v5800 = vld [vmem:[%s1240 + $0x5c] sm:$0xf]
        %v5801 = vld [vmem:[%s1240 + $0x60] sm:$0xf]
        %v5802 = vld [vmem:[%s1240 + $0x64] sm:$0xf]
        %v5803 = vld [vmem:[%s1240 + $0x68] sm:$0xf]
        %v5804 = vld [vmem:[%s1240 + $0x6c] sm:$0xf]
        %v5805 = vld [vmem:[%s1240 + $0x70] sm:$0xf]
        %v5806 = vld [vmem:[%s1240 + $0x74] sm:$0xf]
        %v5807 = vld [vmem:[%s1240 + $0x78] sm:$0xf]
        %v5808 = vld [vmem:[%s1240 + $0x7c] sm:$0xf]
        %v5809 = vld [vmem:[%s1407] sm:$0x1]
        %v5811 = vperm.slane %v5809, 0
        %v5845 = vunpack.c.l.b16 %v5777
        %v5846 = vunpack.c.l.b16 %v5778
        %v5847 = vunpack.c.l.b16 %v5779
        %v5848 = vunpack.c.l.b16 %v5780
        %v5849 = vunpack.c.l.b16 %v5781
        %v5850 = vunpack.c.l.b16 %v5782
        %v5851 = vunpack.c.l.b16 %v5783
        %v5852 = vunpack.c.l.b16 %v5784
        %v5853 = vunpack.c.l.b16 %v5785
        %v5854 = vunpack.c.l.b16 %v5786
        %v5855 = vunpack.c.l.b16 %v5787
        %v5856 = vunpack.c.l.b16 %v5788
        %v5857 = vunpack.c.l.b16 %v5789
        %v5858 = vunpack.c.l.b16 %v5790
        %v5859 = vunpack.c.l.b16 %v5791
        %v5860 = vunpack.c.l.b16 %v5792
        %v5861 = vunpack.c.l.b16 %v5793
        %v5862 = vunpack.c.l.b16 %v5794
        %v5863 = vunpack.c.l.b16 %v5795
        %v5864 = vunpack.c.l.b16 %v5796
        %v5865 = vunpack.c.l.b16 %v5797
        %v5866 = vunpack.c.l.b16 %v5798
        %v5867 = vunpack.c.l.b16 %v5799
        %v5868 = vunpack.c.l.b16 %v5800
        %v5869 = vunpack.c.l.b16 %v5801
        %v5870 = vunpack.c.l.b16 %v5802
        %v5871 = vunpack.c.l.b16 %v5803
        %v5872 = vunpack.c.l.b16 %v5804
        %v5873 = vunpack.c.l.b16 %v5805
        %v5874 = vunpack.c.l.b16 %v5806
        %v5875 = vunpack.c.l.b16 %v5807
        %v5876 = vunpack.c.l.b16 %v5808
        %v5877 = vpack.c.b16 %v5846, %v5845
        %v5878 = vpack.c.b16 %v5848, %v5847
        %v5879 = vpack.c.b16 %v5850, %v5849
        %v5880 = vpack.c.b16 %v5852, %v5851
        %v5881 = vpack.c.b16 %v5854, %v5853
        %v5882 = vpack.c.b16 %v5856, %v5855
        %v5883 = vpack.c.b16 %v5858, %v5857
        %v5884 = vpack.c.b16 %v5860, %v5859
        %v5885 = vpack.c.b16 %v5862, %v5861
        %v5886 = vpack.c.b16 %v5864, %v5863
        %v5887 = vpack.c.b16 %v5866, %v5865
        %v5888 = vpack.c.b16 %v5868, %v5867
        %v5889 = vpack.c.b16 %v5870, %v5869
        %v5890 = vpack.c.b16 %v5872, %v5871
        %v5891 = vpack.c.b16 %v5874, %v5873
        %v5892 = vpack.c.b16 %v5876, %v5875
        %5909 = vmatpush.bf16.msra.mxu0 %v5884
        %5910 = vmatpush.bf16.msra.mxu0 %v5883
        %5911 = vmatpush.bf16.msra.mxu0 %v5882
        %5912 = vmatpush.bf16.msra.mxu0 %v5881
        %5913 = vmatpush.bf16.msra.mxu0 %v5880
        %5914 = vmatpush.bf16.msra.mxu0 %v5879
        %5915 = vmatpush.bf16.msra.mxu0 %v5878
        %5916 = vmatpush.bf16.msra.mxu0 %v5877
        %5917 = vmatmul.bf16.gmra.mxu0 %v5775
        %v5918 = vpop.f32.mrf.mxu0
        %v5919 = vadd.f32 %v5811, %v5918
        %v5920 = vpop.f32.mrf.mxu0
        %v5921 = vadd.f32 %v5811, %v5920
        %5922 = vdwg.mxu0
        %5923 = vmatpush.bf16.msra.mxu0 %v5892
        %5924 = vmatpush.bf16.msra.mxu0 %v5891
        %5925 = vmatpush.bf16.msra.mxu0 %v5890
        %5926 = vmatpush.bf16.msra.mxu0 %v5889
        %5927 = vmatpush.bf16.msra.mxu0 %v5888
        %5928 = vmatpush.bf16.msra.mxu0 %v5887
        %5929 = vmatpush.bf16.msra.mxu0 %v5886
        %5930 = vmatpush.bf16.msra.mxu0 %v5885
        %5931 = vmatmul.bf16.gmra.mxu0 %v5776
        %v5932 = vpop.f32.mrf.mxu0
        %v5933 = vadd.f32 %v5919, %v5932
        %v5934 = vpop.f32.mrf.mxu0
        %v5935 = vadd.f32 %v5921, %v5934
        %5936 = vdwg.mxu0
        %v5937 = vadd.f32 %v5466, %v5933
        %v5938 = vadd.f32 %v5467, %v5935
        %v5939 = vld [vmem:[%s1410] sm:$0x1]
        %v5940 = vld [vmem:[%s1413] sm:$0x1]
        %5941 = vadd.xlane.f32.xlu0 %v5937
        %v5942 = vpop.xlane.xlu0 %5941
        %5943 = vadd.xlane.f32.xlu0 %v5938
        %v5944 = vpop.xlane.xlu0 %5943
        %v5945 = vmul.f32 %v5942, %v3133
        %v5946 = vmul.f32 %v5944, %v3133
        %v5947 = vsub.f32 %v5937, %v5945
        %v5948 = vsub.f32 %v5938, %v5946
        %v5949 = vmul.f32 %v5947, %v5947
        %v5950 = vmul.f32 %v5948, %v5948
        %5951 = vadd.xlane.f32.xlu0 %v5949
        %v5952 = vpop.xlane.xlu0 %5951
        %5953 = vadd.xlane.f32.xlu0 %v5950
        %v5954 = vpop.xlane.xlu0 %5953
        %v5955 = vmul.f32 %v5952, %v3133
        %v5956 = vmul.f32 %v5954, %v3133
        %v5957 = vadd.f32 %v5955, 1e-05
        %v5958 = vadd.f32 %v5956, 1e-05
        %v5959 = vrsqrt.pop %v5957
        %v5960 = vmul.f32 %v5959, %v5957
        %v5961 = vmul.f32 %v5960, %v5959
        %v5962 = vmul.f32 0.5, %v5961
        %v5963 = vsub.f32 1.5, %v5962
        %v5964 = vmul.f32 %v5959, %v5963
        %vm5965 = vweird.f32 %v5957
        %vm5966 = vweird.f32 %v5959
        %vm5967 = vmor %vm5965, %vm5966
        %v5968 = vsel %vm5967, %v5959, %v5964
        %v5969 = vrsqrt.pop %v5958
        %v5970 = vmul.f32 %v5969, %v5958
        %v5971 = vmul.f32 %v5970, %v5969
        %v5972 = vmul.f32 0.5, %v5971
        %v5973 = vsub.f32 1.5, %v5972
        %v5974 = vmul.f32 %v5969, %v5973
        %vm5975 = vweird.f32 %v5958
        %vm5976 = vweird.f32 %v5969
        %vm5977 = vmor %vm5975, %vm5976
        %v5978 = vsel %vm5977, %v5969, %v5974
        %v5979 = vmul.f32 %v5947, %v5968
        %v5980 = vmul.f32 %v5948, %v5978
        %v5982 = vperm.slane %v5939, 0
        %v5984 = vmul.f32 %v5979, %v5982
        %v5985 = vmul.f32 %v5980, %v5982
        %v5987 = vperm.slane %v5940, 0
        %v5989 = vadd.f32 %v5984, %v5987
        %v5990 = vadd.f32 %v5985, %v5987
        %p5991 = scmp.eq.s32.totalorder %s46, 1
        // Predicated region
        $region189: #{tpu_custom_call.1} parent=123 // pred_check
          %p5992 = pneg %p5991
        $region190: #{tpu_custom_call.1} parent=123 // pred_check_branch
          %5994 = sbr.rel (%p5992) target = $region192
        $region191: #{tpu_custom_call.1} parent=123 // pred_region
          %v5995 = vld [vmem:[%s24] sm:$0x1]
          %v5996 = vld [vmem:[%s25] sm:$0x1]
          %5997 = vadd.xlane.f32.xlu0 %v5989
          %v5998 = vpop.xlane.xlu0 %5997
          %5999 = vadd.xlane.f32.xlu0 %v5990
          %v6000 = vpop.xlane.xlu0 %5999
          %v6001 = vmul.f32 %v5998, %v3133
          %v6002 = vmul.f32 %v6000, %v3133
          %v6003 = vsub.f32 %v5989, %v6001
          %v6004 = vsub.f32 %v5990, %v6002
          %v6005 = vmul.f32 %v6003, %v6003
          %v6006 = vmul.f32 %v6004, %v6004
          %6007 = vadd.xlane.f32.xlu0 %v6005
          %v6008 = vpop.xlane.xlu0 %6007
          %6009 = vadd.xlane.f32.xlu0 %v6006
          %v6010 = vpop.xlane.xlu0 %6009
          %v6011 = vmul.f32 %v6008, %v3133
          %v6012 = vmul.f32 %v6010, %v3133
          %v6013 = vadd.f32 %v6011, 1e-05
          %v6014 = vadd.f32 %v6012, 1e-05
          %v6015 = vrsqrt.pop %v6013
          %v6016 = vmul.f32 %v6015, %v6013
          %v6017 = vmul.f32 %v6016, %v6015
          %v6018 = vmul.f32 0.5, %v6017
          %v6019 = vsub.f32 1.5, %v6018
          %v6020 = vmul.f32 %v6015, %v6019
          %vm6021 = vweird.f32 %v6013
          %vm6022 = vweird.f32 %v6015
          %vm6023 = vmor %vm6021, %vm6022
          %v6024 = vsel %vm6023, %v6015, %v6020
          %v6025 = vrsqrt.pop %v6014
          %v6026 = vmul.f32 %v6025, %v6014
          %v6027 = vmul.f32 %v6026, %v6025
          %v6028 = vmul.f32 0.5, %v6027
          %v6029 = vsub.f32 1.5, %v6028
          %v6030 = vmul.f32 %v6025, %v6029
          %vm6031 = vweird.f32 %v6014
          %vm6032 = vweird.f32 %v6025
          %vm6033 = vmor %vm6031, %vm6032
          %v6034 = vsel %vm6033, %v6025, %v6030
          %v6035 = vmul.f32 %v6003, %v6024
          %v6036 = vmul.f32 %v6004, %v6034
          %v6038 = vperm.slane %v5995, 0
          %v6040 = vmul.f32 %v6035, %v6038
          %v6041 = vmul.f32 %v6036, %v6038
          %v6043 = vperm.slane %v5996, 0
          %v6045 = vadd.f32 %v6040, %v6043
          %v6046 = vadd.f32 %v6041, %v6043
          %v6047 = vpack.c.bf16 %v6045, %v6045
          %v6048 = vpack.c.bf16 %v6046, %v6046
          %6049 = vst [vmem:[#allocation21] sm:$0xf] %v6047
          %6050 = vst [vmem:[#allocation21 + $0x4] sm:$0xf] %v6048
        $region192: #{tpu_custom_call.1} parent=123 // pred_fallthru
          _
        %p6051 = scmp.ne.s32.totalorder %s46, 1
        // Predicated region
        $region193: #{tpu_custom_call.1} parent=123 // pred_check
          %p6052 = pneg %p6051
        $region194: #{tpu_custom_call.1} parent=123 // pred_check_branch
          %6054 = sbr.rel (%p6052) target = $region196
        $region195: #{tpu_custom_call.1} parent=123 // pred_region
          %v6055 = vpack.c.bf16 %v5989, %v5989
          %v6056 = vpack.c.bf16 %v5990, %v5990
          %6057 = vst [vmem:[#allocation21] sm:$0xf] %v6055
          %6058 = vst [vmem:[#allocation21 + $0x4] sm:$0xf] %v6056
        $region196: #{tpu_custom_call.1} parent=123 // pred_fallthru
          _
        // Predicated region
        $region197: #{tpu_custom_call.1} parent=123 // pred_check
          %p6059 = pneg %p737
        $region198: #{tpu_custom_call.1} parent=123 // pred_check_branch
          %6061 = sbr.rel (%p6059) target = $region200
        $region199: #{tpu_custom_call.1} parent=123 // pred_region
          %s6062 = smul.u32 2, %s45
          %6064 = vsyncadd [#allocation4], 0
          %s6065 = smul.addr %s6062, 4
          %s6066 = scalar_lea.hbm %s26, %s6065
          %s6067 = sshll.u32 [#allocation21], 4
          %s6068 = int_to_ptr.vmem [resolvable:$true] %s6067
          %s6069 = sshll.u32 %s6066, 4
          %s6070 = int_to_ptr.hbm [resolvable:$true] %s6069
          %6075 = dma.vmem_to_hbm [thread:$0]  %s6068, 128, %s6070, [#allocation4], 64, 64, 4
        $region200: #{tpu_custom_call.1} parent=123 // pred_fallthru
          _
        // Predicated region
        $region201: #{tpu_custom_call.1} parent=123 // pred_check
          %p6076 = pneg %p737
        $region202: #{tpu_custom_call.1} parent=123 // pred_check_branch
          %6078 = sbr.rel (%p6076) target = $region204
        $region203: #{tpu_custom_call.1} parent=123 // pred_region
          %6080 = dma.done [#allocation4], 128
        $region204: #{tpu_custom_call.1} parent=123 // pred_fallthru
          _
      $region124: #{tpu_custom_call.1} parent=5 // pred_fallthru
        _
      %p6081 = scmp.le.s32.totalorder 2, %s36
      // Predicated region
      $region205: #{tpu_custom_call.1} parent=5 // pred_check
        %p6082 = pneg %p6081
      $region206: #{tpu_custom_call.1} parent=5 // pred_check_branch
        %6084 = sbr.rel (%p6082) target = $region208
      $region207: #{tpu_custom_call.1} parent=5 // pred_region
        %s6085 = ssub.s32 %s36, 2
      $region208: #{tpu_custom_call.1} parent=5 // pred_fallthru
        _
    $region6: #{tpu_custom_call.1} parent=1 // loop_footer
      %s40 = sadd.s32 1, %s36
    $region7: #{tpu_custom_call.1} parent=1 // loop_footer_branch
      %35 = sbr.rel target = $region3
    $region8: #{tpu_custom_call.1} parent=1 // loop_exit
      _
    %6086 = vsyncpa [#allocation3], 1
    %s6087 = scalar_lea.sflag [#allocation3], 1
    %6088 = vsyncpa %s6087, 1
    %6089 = vsyncpa [#allocation6], 1
    %6090 = vsyncpa [#allocation9], 1
    %6091 = vsyncpa [#allocation4], 1
    %s6092 = scalar_lea.sflag [#allocation4], 1
    %6093 = vsyncpa %s6092, 1

</llo_original>
